<compile_context>
chip_gen: v5e
topology: v5e:2x2
jax: 0.10.0
libtpu: 0.0.40
codegen_flags: <defaults>
</compile_context>

<pallas_src>
import functools

import jax
import jax.numpy as jnp
from jax.experimental import pallas as pl
from jax.experimental.pallas import tpu as pltpu

LEAKY_SLOPE = 0.01
BN_EPS = 1e-5
MM_TILE_M = 1024          # lane tile for the matmul (full M is used when M < tile)
VMEM_LIMIT = 32 * 1024 * 1024


# --------------------------- Pallas kernels --------------------------------

def _mm_kernel(a_ref, w_ref, b_ref, o_ref, *, leaky):
    # out[N, TM] = W[N, K] @ A[K, TM] + bias[N, 1]  (+ LeakyReLU)
    acc = jnp.dot(w_ref[...], a_ref[...], preferred_element_type=jnp.float32)
    y = acc + b_ref[...]
    if leaky:
        y = jnp.where(y >= 0.0, y, LEAKY_SLOPE * y)
    o_ref[...] = y.astype(o_ref.dtype)


def _mm2_kernel(a1_ref, a2_ref, w1_ref, w2_ref, b_ref, o_ref, *, leaky):
    # out[N, TM] = W1 @ A1 + W2 @ A2 + bias  (+ LeakyReLU)   -- concat-free 1x1x1 conv
    acc = jnp.dot(w1_ref[...], a1_ref[...], preferred_element_type=jnp.float32)
    acc = acc + jnp.dot(w2_ref[...], a2_ref[...], preferred_element_type=jnp.float32)
    y = acc + b_ref[...]
    if leaky:
        y = jnp.where(y >= 0.0, y, LEAKY_SLOPE * y)
    o_ref[...] = y.astype(o_ref.dtype)


def _gate_kernel(att_ref, cv_ref, o_ref):
    gate = 1.0 / (1.0 + jnp.exp(-att_ref[...]))     # broadcast over D
    o_ref[...] = gate * cv_ref[...]


def fused_matmul_nm(w, a, bias, leaky, tm=MM_TILE_M):
    """out[N, M] = leaky?(W[N, K] @ A[K, M] + bias[N]).  W/A bf16, out f32."""
    N, K = w.shape
    M = a.shape[1]
    tm_ = M if M <= tm else tm
    grid = (pl.cdiv(M, tm_),)
    return pl.pallas_call(
        functools.partial(_mm_kernel, leaky=leaky),
        out_shape=jax.ShapeDtypeStruct((N, M), jnp.float32),
        grid=grid,
        in_specs=[
            pl.BlockSpec((K, tm_), lambda i: (0, i)),
            pl.BlockSpec((N, K), lambda i: (0, 0)),
            pl.BlockSpec((N, 1), lambda i: (0, 0)),
        ],
        out_specs=pl.BlockSpec((N, tm_), lambda i: (0, i)),
        compiler_params=pltpu.CompilerParams(
            dimension_semantics=("parallel",),
            vmem_limit_bytes=VMEM_LIMIT),
    )(a, w, bias.reshape(N, 1))


def fused_matmul2_nm(w1, a1, w2, a2, bias, leaky, tm=MM_TILE_M):
    """out[N, M] = leaky?(W1 @ A1 + W2 @ A2 + bias) — avoids materializing concat."""
    N, K1 = w1.shape
    K2 = w2.shape[1]
    M = a1.shape[1]
    tm_ = M if M <= tm else tm
    grid = (pl.cdiv(M, tm_),)
    return pl.pallas_call(
        functools.partial(_mm2_kernel, leaky=leaky),
        out_shape=jax.ShapeDtypeStruct((N, M), jnp.float32),
        grid=grid,
        in_specs=[
            pl.BlockSpec((K1, tm_), lambda i: (0, i)),
            pl.BlockSpec((K2, tm_), lambda i: (0, i)),
            pl.BlockSpec((N, K1), lambda i: (0, 0)),
            pl.BlockSpec((N, K2), lambda i: (0, 0)),
            pl.BlockSpec((N, 1), lambda i: (0, 0)),
        ],
        out_specs=pl.BlockSpec((N, tm_), lambda i: (0, i)),
        compiler_params=pltpu.CompilerParams(
            dimension_semantics=("parallel",),
            vmem_limit_bytes=VMEM_LIMIT),
    )(a1, a2, w1, w2, bias.reshape(N, 1))


def sigmoid_gate(att, cv):
    """att:[G, 1, HW], cv:[G, D, HW] -> sigmoid(att) * cv (broadcast over D)."""
    G, D, HW = cv.shape
    gt = G if G < 8 else 8
    grid = (pl.cdiv(G, gt),)
    return pl.pallas_call(
        _gate_kernel,
        out_shape=jax.ShapeDtypeStruct((G, D, HW), jnp.float32),
        grid=grid,
        in_specs=[
            pl.BlockSpec((gt, 1, HW), lambda i: (i, 0, 0)),
            pl.BlockSpec((gt, D, HW), lambda i: (i, 0, 0)),
        ],
        out_specs=pl.BlockSpec((gt, D, HW), lambda i: (i, 0, 0)),
        compiler_params=pltpu.CompilerParams(
            dimension_semantics=("parallel",),
            vmem_limit_bytes=VMEM_LIMIT),
    )(att, cv)


# ------------------------------ conv glue -----------------------------------

def im2col_3d_cm(x, ksize, stride, padding):
    """Channel-major im2col.  x:[C,B,D,H,W] -> col [C*kd*kh*kw, B*Do*Ho*Wo]."""
    C, B, D, H, W = x.shape
    kd, kh, kw = ksize
    sd, sh, sw = stride
    pd, ph, pw = padding
    xp = jnp.pad(x, ((0, 0), (0, 0), (pd, pd), (ph, ph), (pw, pw)))
    Do = (D + 2 * pd - kd) // sd + 1
    Ho = (H + 2 * ph - kh) // sh + 1
    Wo = (W + 2 * pw - kw) // sw + 1
    cols = []
    for dz in range(kd):
        for dy in range(kh):
            for dx in range(kw):
                cols.append(
                    xp[:, :,
                       dz:dz + Do * sd:sd,
                       dy:dy + Ho * sh:sh,
                       dx:dx + Wo * sw:sw])
    col = jnp.stack(cols, axis=1)                  # [C, T, B, Do, Ho, Wo]
    return col.reshape(C * kd * kh * kw, B * Do * Ho * Wo), (B, Do, Ho, Wo)


def conv3d_fused(x, wf, bias, ksize, stride, padding, leaky):
    """Conv3d(bias=False)+folded-BN(+LeakyReLU).  x:[C,B,D,H,W], wf:[Cout,Cin*T] bf16."""
    col, (B, Do, Ho, Wo) = im2col_3d_cm(x, ksize, stride, padding)
    out = fused_matmul_nm(wf, col.astype(jnp.bfloat16), bias, leaky)
    return out.reshape(-1, B, Do, Ho, Wo)


def deconv3d_fused(x, wf_phases, bias, leaky):
    """ConvTranspose3d(k=4, s=2, p=1) via sub-pixel phase split (no zero insertion).
    x:[Cin,B,D,H,W] -> out [Cout,B,2D,2H,2W]."""
    C, B, D, H, W = x.shape
    xp = jnp.pad(x, ((0, 0), (0, 0), (1, 1), (1, 1), (1, 1)))
    phases = []
    for rd in (0, 1):
        for rh in (0, 1):
            for rw in (0, 1):
                idx = (rd * 2 + rh) * 2 + rw
                xs = xp[:, :, rd:rd + D + 1, rh:rh + H + 1, rw:rw + W + 1]
                col, _ = im2col_3d_cm(xs, (2, 2, 2), (1, 1, 1), (0, 0, 0))
                ph = fused_matmul_nm(wf_phases[idx], col.astype(jnp.bfloat16),
                                     bias, leaky)
                phases.append(ph.reshape(-1, B, D, H, W))
    Cout = phases[0].shape[0]
    y = jnp.stack(phases, axis=0).reshape(2, 2, 2, Cout, B, D, H, W)
    # axes (rd, rh, rw, c, b, d, h, w) -> (c, b, d, rd, h, rh, w, rw) -> interleave
    y = y.transpose(3, 4, 5, 0, 6, 1, 7, 2).reshape(Cout, B, 2 * D, 2 * H, 2 * W)
    return y


# --------------------------- module building blocks -------------------------

def bconv3(x, pp, stride=(1, 1, 1), leaky=True):
    return conv3d_fused(x, pp['wf'], pp['bias'], (3, 3, 3), stride, (1, 1, 1), leaky)


def agg_first(x_up, x_skip, pp):
    """1x1x1 conv on the channel-concat of (x_up, x_skip) without the concat."""
    _, B, D, H, W = x_up.shape
    a1 = x_up.reshape(x_up.shape[0], -1).astype(jnp.bfloat16)
    a2 = x_skip.reshape(x_skip.shape[0], -1).astype(jnp.bfloat16)
    out = fused_matmul2_nm(pp['w1f'], a1, pp['w2f'], a2, pp['bias'], leaky=True)
    return out.reshape(-1, B, D, H, W)


def feature_att(cv, feat, p):
    """BasicConv2d(1x1, bn, leaky) -> Conv2d(1x1, bias) -> sigmoid * cv."""
    Ccv, B, D, H, W = cv.shape
    Cf = feat.shape[1]
    a = jnp.transpose(feat, (1, 0, 2, 3)).reshape(Cf, B * H * W).astype(jnp.bfloat16)
    h = fused_matmul_nm(p['w1f'], a, p['b1'], leaky=True)
    att = fused_matmul_nm(p['w2f'], h.astype(jnp.bfloat16), p['bias2'], leaky=False)
    att3 = att.reshape(Ccv * B, 1, H * W)
    cv3 = cv.reshape(Ccv * B, D, H * W)
    out = sigmoid_gate(att3, cv3)
    return out.reshape(Ccv, B, D, H, W)


def hourglass_forward(p, x, features):
    x = jnp.transpose(x, (1, 0, 2, 3, 4))          # NCDHW -> CBDHW (channel-major)

    conv1 = bconv3(x, p['conv1a'], stride=(2, 2, 2))
    conv1 = bconv3(conv1, p['conv1b'])
    conv1 = feature_att(conv1, features[1], p['fa8'])

    conv2 = bconv3(conv1, p['conv2a'], stride=(2, 2, 2))
    conv2 = bconv3(conv2, p['conv2b'])
    conv2 = feature_att(conv2, features[2], p['fa16'])

    conv3 = bconv3(conv2, p['conv3a'], stride=(2, 2, 2))
    conv3 = bconv3(conv3, p['conv3b'])
    conv3 = feature_att(conv3, features[3], p['fa32'])

    conv3_up = deconv3d_fused(conv3, p['conv3_up']['wf_phases'],
                              p['conv3_up']['bias'], leaky=True)
    conv2 = agg_first(conv3_up, conv2, p['agg0_a'])
    conv2 = bconv3(conv2, p['agg0_b'])
    conv2 = bconv3(conv2, p['agg0_c'])
    conv2 = feature_att(conv2, features[2], p['fa_up16'])

    conv2_up = deconv3d_fused(conv2, p['conv2_up']['wf_phases'],
                              p['conv2_up']['bias'], leaky=True)
    conv1 = agg_first(conv2_up, conv1, p['agg1_a'])
    conv1 = bconv3(conv1, p['agg1_b'])
    conv1 = bconv3(conv1, p['agg1_c'])
    conv1 = feature_att(conv1, features[1], p['fa_up8'])

    conv = deconv3d_fused(conv1, p['conv1_up']['wf_phases'],
                          p['conv1_up']['bias'], leaky=False)   # bn=False, relu=False
    return jnp.transpose(conv, (1, 0, 2, 3, 4))    # back to NCDHW


# ------------------------------ parameter init ------------------------------

class KeyGen:
    def __init__(self, seed):
        self._key = jax.random.PRNGKey(seed)

    def __call__(self):
        self._key, sub = jax.random.split(self._key)
        return sub


def _fold_bn(kg, c):
    gamma = jax.random.uniform(kg(), (c,), minval=0.5, maxval=1.5)
    beta = 0.1 * jax.random.normal(kg(), (c,))
    mean = 0.1 * jax.random.normal(kg(), (c,))
    var = jax.random.uniform(kg(), (c,), minval=0.5, maxval=1.5)
    scale = gamma / jnp.sqrt(var + BN_EPS)
    shift = beta - mean * scale
    return scale.astype(jnp.float32), shift.astype(jnp.float32)


def _identity_affine(c):
    return jnp.ones((c,), jnp.float32), jnp.zeros((c,), jnp.float32)


def make_conv3d(kg, cin, cout, k, bn=True):
    fan_in = cin * k * k * k
    w = jax.random.normal(kg(), (cout, cin, k, k, k), jnp.float32) / jnp.sqrt(fan_in)
    scale, shift = _fold_bn(kg, cout) if bn else _identity_affine(cout)
    wf = (w * scale[:, None, None, None, None]).reshape(cout, -1).astype(jnp.bfloat16)
    return {'wf': wf, 'bias': shift}


def make_conv3d_1x1_split(kg, cin1, cin2, cout, bn=True):
    cin = cin1 + cin2
    w = jax.random.normal(kg(), (cout, cin), jnp.float32) / jnp.sqrt(cin)
    scale, shift = _fold_bn(kg, cout) if bn else _identity_affine(cout)
    wf = w * scale[:, None]
    return {'w1f': wf[:, :cin1].astype(jnp.bfloat16),
            'w2f': wf[:, cin1:].astype(jnp.bfloat16),
            'bias': shift}


def make_deconv3d(kg, cin, cout, bn=True):
    k = 4
    fan_in = cin * k * k * k
    w = jax.random.normal(kg(), (cin, cout, k, k, k), jnp.float32) / jnp.sqrt(fan_in)
    scale, shift = _fold_bn(kg, cout) if bn else _identity_affine(cout)
    phases = []
    for rd in (0, 1):
        for rh in (0, 1):
            for rw in (0, 1):
                kd_idx = [3 - rd, 1 - rd]
                kh_idx = [3 - rh, 1 - rh]
                kw_idx = [3 - rw, 1 - rw]
                wp = w[:, :, kd_idx, :, :][:, :, :, kh_idx, :][:, :, :, :, kw_idx]
                wp = wp.transpose(1, 0, 2, 3, 4)            # [Cout, Cin, 2,2,2]
                wp = wp * scale[:, None, None, None, None]
                phases.append(wp.reshape(cout, -1).astype(jnp.bfloat16))
    return {'wf_phases': phases, 'bias': shift}


def make_feature_att(kg, cv_chan, feat_chan):
    mid = feat_chan // 2
    w1 = jax.random.normal(kg(), (mid, feat_chan), jnp.float32) / jnp.sqrt(feat_chan)
    s1, b1 = _fold_bn(kg, mid)
    w1f = (w1 * s1[:, None]).astype(jnp.bfloat16)
    w2 = jax.random.normal(kg(), (cv_chan, mid), jnp.float32) / jnp.sqrt(mid)
    bias2 = (0.1 * jax.random.normal(kg(), (cv_chan,))).astype(jnp.float32)
    return {'w1f': w1f, 'b1': b1, 'w2f': w2.astype(jnp.bfloat16), 'bias2': bias2}


def init_hourglass_params(seed, in_channels):
    kg = KeyGen(seed)
    C = in_channels
    p = {}
    p['conv1a'] = make_conv3d(kg, C, 2 * C, 3)
    p['conv1b'] = make_conv3d(kg, 2 * C, 2 * C, 3)
    p['conv2a'] = make_conv3d(kg, 2 * C, 4 * C, 3)
    p['conv2b'] = make_conv3d(kg, 4 * C, 4 * C, 3)
    p['conv3a'] = make_conv3d(kg, 4 * C, 6 * C, 3)
    p['conv3b'] = make_conv3d(kg, 6 * C, 6 * C, 3)
    p['conv3_up'] = make_deconv3d(kg, 6 * C, 4 * C, bn=True)
    p['conv2_up'] = make_deconv3d(kg, 4 * C, 2 * C, bn=True)
    p['conv1_up'] = make_deconv3d(kg, 2 * C, 8, bn=False)
    p['agg0_a'] = make_conv3d_1x1_split(kg, 4 * C, 4 * C, 4 * C)
    p['agg0_b'] = make_conv3d(kg, 4 * C, 4 * C, 3)
    p['agg0_c'] = make_conv3d(kg, 4 * C, 4 * C, 3)
    p['agg1_a'] = make_conv3d_1x1_split(kg, 2 * C, 2 * C, 2 * C)
    p['agg1_b'] = make_conv3d(kg, 2 * C, 2 * C, 3)
    p['agg1_c'] = make_conv3d(kg, 2 * C, 2 * C, 3)
    p['fa8'] = make_feature_att(kg, 2 * C, 64)
    p['fa16'] = make_feature_att(kg, 4 * C, 192)
    p['fa32'] = make_feature_att(kg, 6 * C, 160)
    p['fa_up16'] = make_feature_att(kg, 4 * C, 192)
    p['fa_up8'] = make_feature_att(kg, 2 * C, 64)
    return p


# ----------------------------------- main ------------------------------------

if __name__ == "__main__":
    in_channels = 4
    B, D, H, W = 1, 8, 16, 16

    key = jax.random.PRNGKey(0)
    kx, k0, k1, k2, k3 = jax.random.split(key, 5)
    x = jax.random.normal(kx, (B, in_channels, D, H, W), jnp.float32)
    features = (
        jax.random.normal(k0, (B, 48, H, W), jnp.float32),          # unused (index 0)
        jax.random.normal(k1, (B, 64, H // 2, W // 2), jnp.float32),
        jax.random.normal(k2, (B, 192, H // 4, W // 4), jnp.float32),
        jax.random.normal(k3, (B, 160, H // 8, W // 8), jnp.float32),
    )

    params = init_hourglass_params(seed=1, in_channels=in_channels)

    fwd = jax.jit(hourglass_forward)
    out = fwd(params, x, features)
    out = jax.block_until_ready(out)

    assert out.shape == (B, 8, D, H, W), out.shape
    assert out.dtype == jnp.float32
    print("KERNEL_OK")
</pallas_src>

<mosaic_0001>
module attributes {stable_mosaic.version = 11 : i64} {
  func.func @_mm_kernel(%arg0: i32, %arg1: memref<64x64xbf16, #tpu.memory_space<vmem>>, %arg2: memref<32x64xbf16, #tpu.memory_space<vmem>>, %arg3: memref<32x1xf32, #tpu.memory_space<vmem>>, %arg4: memref<32x64xf32, #tpu.memory_space<vmem>>) attributes {dimension_semantics = [#tpu.dimension_semantics<parallel>], iteration_bounds = array<i64: 1>, scalar_prefetch = 0 : i64, scratch_operands = 0 : i64, tpu.core_type = #tpu.core_type<tc>, window_params = [{transform_indices = @transform_0, window_bounds = array<i64: 64, 64>}, {pipeline_mode = #tpu.pipeline_mode<synchronous>, transform_indices = @transform_1, window_bounds = array<i64: 32, 64>}, {pipeline_mode = #tpu.pipeline_mode<synchronous>, transform_indices = @transform_2, window_bounds = array<i64: 32, 1>}, {transform_indices = @transform_3, window_bounds = array<i64: 32, 64>}]} {
    %c0 = arith.constant 0 : index
    %c0_0 = arith.constant 0 : index
    %0 = vector.load %arg2[%c0, %c0_0] : memref<32x64xbf16, #tpu.memory_space<vmem>>, vector<32x64xbf16>
    %c0_1 = arith.constant 0 : index
    %c0_2 = arith.constant 0 : index
    %1 = vector.load %arg1[%c0_1, %c0_2] : memref<64x64xbf16, #tpu.memory_space<vmem>>, vector<64x64xbf16>
    %cst = arith.constant dense<0.000000e+00> : vector<32x64xf32>
    %2 = tpu.matmul %0, %1, %cst {dimension_numbers = #tpu.dot_dimension_numbers<[1], [0], [0], [1], [0, 0, 1, 1], [], []>} : vector<32x64xbf16>, vector<64x64xbf16>, vector<32x64xf32> -> vector<32x64xf32>
    %c0_3 = arith.constant 0 : index
    %c0_4 = arith.constant 0 : index
    %3 = vector.load %arg3[%c0_3, %c0_4] : memref<32x1xf32, #tpu.memory_space<vmem>>, vector<32x1xf32>
    %4 = vector.broadcast %3 : vector<32x1xf32> to vector<32x64xf32>
    %5 = arith.addf %2, %4 : vector<32x64xf32>
    %cst_5 = arith.constant 0.000000e+00 : f32
    %6 = vector.broadcast %cst_5 : f32 to vector<32x64xf32>
    %7 = arith.cmpf oge, %5, %6 : vector<32x64xf32>
    %cst_6 = arith.constant 0.00999999977 : f32
    %8 = vector.broadcast %cst_6 : f32 to vector<32x64xf32>
    %9 = arith.mulf %8, %5 : vector<32x64xf32>
    %10 = arith.select %7, %5, %9 : vector<32x64xi1>, vector<32x64xf32>
    %c0_7 = arith.constant 0 : index
    %c0_8 = arith.constant 0 : index
    %11 = vector.load %arg4[%c0_7, %c0_8] : memref<32x64xf32, #tpu.memory_space<vmem>>, vector<32x64xf32>
    tpu.vector_store %arg4[%c0_7, %c0_8], %10 {strides = array<i32>} : memref<32x64xf32, #tpu.memory_space<vmem>>, vector<32x64xf32>,
    return
  }
  func.func @transform_0(%arg0: i32) -> (i32, i32) {
    %c0_i32 = arith.constant 0 : i32
    %c0_i32_0 = arith.constant 0 : i32
    return %c0_i32, %arg0 : i32, i32
  }
  func.func @transform_1(%arg0: i32) -> (i32, i32) {
    %c0_i32 = arith.constant 0 : i32
    %c0_i32_0 = arith.constant 0 : i32
    %c0_i32_1 = arith.constant 0 : i32
    return %c0_i32, %c0_i32_0 : i32, i32
  }
  func.func @transform_2(%arg0: i32) -> (i32, i32) {
    %c0_i32 = arith.constant 0 : i32
    %c0_i32_0 = arith.constant 0 : i32
    %c0_i32_1 = arith.constant 0 : i32
    return %c0_i32, %c0_i32_0 : i32, i32
  }
  func.func @transform_3(%arg0: i32) -> (i32, i32) {
    %c0_i32 = arith.constant 0 : i32
    %c0_i32_0 = arith.constant 0 : i32
    return %c0_i32, %arg0 : i32, i32
  }
}

module attributes {stable_mosaic.version = 11 : i64} {
  func.func @_mm_kernel(%arg0: i32, %arg1: memref<32x64xbf16, #tpu.memory_space<vmem>>, %arg2: memref<8x32xbf16, #tpu.memory_space<vmem>>, %arg3: memref<8x1xf32, #tpu.memory_space<vmem>>, %arg4: memref<8x64xf32, #tpu.memory_space<vmem>>) attributes {dimension_semantics = [#tpu.dimension_semantics<parallel>], iteration_bounds = array<i64: 1>, scalar_prefetch = 0 : i64, scratch_operands = 0 : i64, tpu.core_type = #tpu.core_type<tc>, window_params = [{transform_indices = @transform_0, window_bounds = array<i64: 32, 64>}, {pipeline_mode = #tpu.pipeline_mode<synchronous>, transform_indices = @transform_1, window_bounds = array<i64: 8, 32>}, {pipeline_mode = #tpu.pipeline_mode<synchronous>, transform_indices = @transform_2, window_bounds = array<i64: 8, 1>}, {transform_indices = @transform_3, window_bounds = array<i64: 8, 64>}]} {
    %c0 = arith.constant 0 : index
    %c0_0 = arith.constant 0 : index
    %0 = vector.load %arg2[%c0, %c0_0] : memref<8x32xbf16, #tpu.memory_space<vmem>>, vector<8x32xbf16>
    %c0_1 = arith.constant 0 : index
    %c0_2 = arith.constant 0 : index
    %1 = vector.load %arg1[%c0_1, %c0_2] : memref<32x64xbf16, #tpu.memory_space<vmem>>, vector<32x64xbf16>
    %cst = arith.constant dense<0.000000e+00> : vector<8x64xf32>
    %2 = tpu.matmul %0, %1, %cst {dimension_numbers = #tpu.dot_dimension_numbers<[1], [0], [0], [1], [0, 0, 1, 1], [], []>} : vector<8x32xbf16>, vector<32x64xbf16>, vector<8x64xf32> -> vector<8x64xf32>
    %c0_3 = arith.constant 0 : index
    %c0_4 = arith.constant 0 : index
    %3 = vector.load %arg3[%c0_3, %c0_4] : memref<8x1xf32, #tpu.memory_space<vmem>>, vector<8x1xf32>
    %4 = vector.broadcast %3 : vector<8x1xf32> to vector<8x64xf32>
    %5 = arith.addf %2, %4 : vector<8x64xf32>
    %c0_5 = arith.constant 0 : index
    %c0_6 = arith.constant 0 : index
    %6 = vector.load %arg4[%c0_5, %c0_6] : memref<8x64xf32, #tpu.memory_space<vmem>>, vector<8x64xf32>
    tpu.vector_store %arg4[%c0_5, %c0_6], %5 {strides = array<i32>} : memref<8x64xf32, #tpu.memory_space<vmem>>, vector<8x64xf32>,
    return
  }
  func.func @transform_0(%arg0: i32) -> (i32, i32) {
    %c0_i32 = arith.constant 0 : i32
    %c0_i32_0 = arith.constant 0 : i32
    return %c0_i32, %arg0 : i32, i32
  }
  func.func @transform_1(%arg0: i32) -> (i32, i32) {
    %c0_i32 = arith.constant 0 : i32
    %c0_i32_0 = arith.constant 0 : i32
    %c0_i32_1 = arith.constant 0 : i32
    return %c0_i32, %c0_i32_0 : i32, i32
  }
  func.func @transform_2(%arg0: i32) -> (i32, i32) {
    %c0_i32 = arith.constant 0 : i32
    %c0_i32_0 = arith.constant 0 : i32
    %c0_i32_1 = arith.constant 0 : i32
    return %c0_i32, %c0_i32_0 : i32, i32
  }
  func.func @transform_3(%arg0: i32) -> (i32, i32) {
    %c0_i32 = arith.constant 0 : i32
    %c0_i32_0 = arith.constant 0 : i32
    return %c0_i32, %arg0 : i32, i32
  }
}

module attributes {stable_mosaic.version = 11 : i64} {
  func.func @_mm_kernel(%arg0: i32, %arg1: memref<192x16xbf16, #tpu.memory_space<vmem>>, %arg2: memref<96x192xbf16, #tpu.memory_space<vmem>>, %arg3: memref<96x1xf32, #tpu.memory_space<vmem>>, %arg4: memref<96x16xf32, #tpu.memory_space<vmem>>) attributes {dimension_semantics = [#tpu.dimension_semantics<parallel>], iteration_bounds = array<i64: 1>, scalar_prefetch = 0 : i64, scratch_operands = 0 : i64, tpu.core_type = #tpu.core_type<tc>, window_params = [{transform_indices = @transform_0, window_bounds = array<i64: 192, 16>}, {pipeline_mode = #tpu.pipeline_mode<synchronous>, transform_indices = @transform_1, window_bounds = array<i64: 96, 192>}, {pipeline_mode = #tpu.pipeline_mode<synchronous>, transform_indices = @transform_2, window_bounds = array<i64: 96, 1>}, {transform_indices = @transform_3, window_bounds = array<i64: 96, 16>}]} {
    %c0 = arith.constant 0 : index
    %c0_0 = arith.constant 0 : index
    %0 = vector.load %arg2[%c0, %c0_0] : memref<96x192xbf16, #tpu.memory_space<vmem>>, vector<96x192xbf16>
    %c0_1 = arith.constant 0 : index
    %c0_2 = arith.constant 0 : index
    %1 = vector.load %arg1[%c0_1, %c0_2] : memref<192x16xbf16, #tpu.memory_space<vmem>>, vector<192x16xbf16>
    %cst = arith.constant dense<0.000000e+00> : vector<96x16xf32>
    %2 = tpu.matmul %0, %1, %cst {dimension_numbers = #tpu.dot_dimension_numbers<[1], [0], [0], [1], [0, 0, 1, 1], [], []>} : vector<96x192xbf16>, vector<192x16xbf16>, vector<96x16xf32> -> vector<96x16xf32>
    %c0_3 = arith.constant 0 : index
    %c0_4 = arith.constant 0 : index
    %3 = vector.load %arg3[%c0_3, %c0_4] : memref<96x1xf32, #tpu.memory_space<vmem>>, vector<96x1xf32>
    %4 = vector.broadcast %3 : vector<96x1xf32> to vector<96x16xf32>
    %5 = arith.addf %2, %4 : vector<96x16xf32>
    %cst_5 = arith.constant 0.000000e+00 : f32
    %6 = vector.broadcast %cst_5 : f32 to vector<96x16xf32>
    %7 = arith.cmpf oge, %5, %6 : vector<96x16xf32>
    %cst_6 = arith.constant 0.00999999977 : f32
    %8 = vector.broadcast %cst_6 : f32 to vector<96x16xf32>
    %9 = arith.mulf %8, %5 : vector<96x16xf32>
    %10 = arith.select %7, %5, %9 : vector<96x16xi1>, vector<96x16xf32>
    %c0_7 = arith.constant 0 : index
    %c0_8 = arith.constant 0 : index
    %11 = vector.load %arg4[%c0_7, %c0_8] : memref<96x16xf32, #tpu.memory_space<vmem>>, vector<96x16xf32>
    tpu.vector_store %arg4[%c0_7, %c0_8], %10 {strides = array<i32>} : memref<96x16xf32, #tpu.memory_space<vmem>>, vector<96x16xf32>,
    return
  }
  func.func @transform_0(%arg0: i32) -> (i32, i32) {
    %c0_i32 = arith.constant 0 : i32
    %c0_i32_0 = arith.constant 0 : i32
    return %c0_i32, %arg0 : i32, i32
  }
  func.func @transform_1(%arg0: i32) -> (i32, i32) {
    %c0_i32 = arith.constant 0 : i32
    %c0_i32_0 = arith.constant 0 : i32
    %c0_i32_1 = arith.constant 0 : i32
    return %c0_i32, %c0_i32_0 : i32, i32
  }
  func.func @transform_2(%arg0: i32) -> (i32, i32) {
    %c0_i32 = arith.constant 0 : i32
    %c0_i32_0 = arith.constant 0 : i32
    %c0_i32_1 = arith.constant 0 : i32
    return %c0_i32, %c0_i32_0 : i32, i32
  }
  func.func @transform_3(%arg0: i32) -> (i32, i32) {
    %c0_i32 = arith.constant 0 : i32
    %c0_i32_0 = arith.constant 0 : i32
    return %c0_i32, %arg0 : i32, i32
  }
}

module attributes {stable_mosaic.version = 11 : i64} {
  func.func @_mm_kernel(%arg0: i32, %arg1: memref<160x4xbf16, #tpu.memory_space<vmem>>, %arg2: memref<80x160xbf16, #tpu.memory_space<vmem>>, %arg3: memref<80x1xf32, #tpu.memory_space<vmem>>, %arg4: memref<80x4xf32, #tpu.memory_space<vmem>>) attributes {dimension_semantics = [#tpu.dimension_semantics<parallel>], iteration_bounds = array<i64: 1>, scalar_prefetch = 0 : i64, scratch_operands = 0 : i64, tpu.core_type = #tpu.core_type<tc>, window_params = [{transform_indices = @transform_0, window_bounds = array<i64: 160, 4>}, {pipeline_mode = #tpu.pipeline_mode<synchronous>, transform_indices = @transform_1, window_bounds = array<i64: 80, 160>}, {pipeline_mode = #tpu.pipeline_mode<synchronous>, transform_indices = @transform_2, window_bounds = array<i64: 80, 1>}, {transform_indices = @transform_3, window_bounds = array<i64: 80, 4>}]} {
    %c0 = arith.constant 0 : index
    %c0_0 = arith.constant 0 : index
    %0 = vector.load %arg2[%c0, %c0_0] : memref<80x160xbf16, #tpu.memory_space<vmem>>, vector<80x160xbf16>
    %c0_1 = arith.constant 0 : index
    %c0_2 = arith.constant 0 : index
    %1 = vector.load %arg1[%c0_1, %c0_2] : memref<160x4xbf16, #tpu.memory_space<vmem>>, vector<160x4xbf16>
    %cst = arith.constant dense<0.000000e+00> : vector<80x4xf32>
    %2 = tpu.matmul %0, %1, %cst {dimension_numbers = #tpu.dot_dimension_numbers<[1], [0], [0], [1], [0, 0, 1, 1], [], []>} : vector<80x160xbf16>, vector<160x4xbf16>, vector<80x4xf32> -> vector<80x4xf32>
    %c0_3 = arith.constant 0 : index
    %c0_4 = arith.constant 0 : index
    %3 = vector.load %arg3[%c0_3, %c0_4] : memref<80x1xf32, #tpu.memory_space<vmem>>, vector<80x1xf32>
    %4 = vector.broadcast %3 : vector<80x1xf32> to vector<80x4xf32>
    %5 = arith.addf %2, %4 : vector<80x4xf32>
    %cst_5 = arith.constant 0.000000e+00 : f32
    %6 = vector.broadcast %cst_5 : f32 to vector<80x4xf32>
    %7 = arith.cmpf oge, %5, %6 : vector<80x4xf32>
    %cst_6 = arith.constant 0.00999999977 : f32
    %8 = vector.broadcast %cst_6 : f32 to vector<80x4xf32>
    %9 = arith.mulf %8, %5 : vector<80x4xf32>
    %10 = arith.select %7, %5, %9 : vector<80x4xi1>, vector<80x4xf32>
    %c0_7 = arith.constant 0 : index
    %c0_8 = arith.constant 0 : index
    %11 = vector.load %arg4[%c0_7, %c0_8] : memref<80x4xf32, #tpu.memory_space<vmem>>, vector<80x4xf32>
    tpu.vector_store %arg4[%c0_7, %c0_8], %10 {strides = array<i32>} : memref<80x4xf32, #tpu.memory_space<vmem>>, vector<80x4xf32>,
    return
  }
  func.func @transform_0(%arg0: i32) -> (i32, i32) {
    %c0_i32 = arith.constant 0 : i32
    %c0_i32_0 = arith.constant 0 : i32
    return %c0_i32, %arg0 : i32, i32
  }
  func.func @transform_1(%arg0: i32) -> (i32, i32) {
    %c0_i32 = arith.constant 0 : i32
    %c0_i32_0 = arith.constant 0 : i32
    %c0_i32_1 = arith.constant 0 : i32
    return %c0_i32, %c0_i32_0 : i32, i32
  }
  func.func @transform_2(%arg0: i32) -> (i32, i32) {
    %c0_i32 = arith.constant 0 : i32
    %c0_i32_0 = arith.constant 0 : i32
    %c0_i32_1 = arith.constant 0 : i32
    return %c0_i32, %c0_i32_0 : i32, i32
  }
  func.func @transform_3(%arg0: i32) -> (i32, i32) {
    %c0_i32 = arith.constant 0 : i32
    %c0_i32_0 = arith.constant 0 : i32
    return %c0_i32, %arg0 : i32, i32
  }
}

module attributes {stable_mosaic.version = 11 : i64} {
  func.func @_mm_kernel(%arg0: i32, %arg1: memref<96x16xbf16, #tpu.memory_space<vmem>>, %arg2: memref<16x96xbf16, #tpu.memory_space<vmem>>, %arg3: memref<16x1xf32, #tpu.memory_space<vmem>>, %arg4: memref<16x16xf32, #tpu.memory_space<vmem>>) attributes {dimension_semantics = [#tpu.dimension_semantics<parallel>], iteration_bounds = array<i64: 1>, scalar_prefetch = 0 : i64, scratch_operands = 0 : i64, tpu.core_type = #tpu.core_type<tc>, window_params = [{transform_indices = @transform_0, window_bounds = array<i64: 96, 16>}, {pipeline_mode = #tpu.pipeline_mode<synchronous>, transform_indices = @transform_1, window_bounds = array<i64: 16, 96>}, {pipeline_mode = #tpu.pipeline_mode<synchronous>, transform_indices = @transform_2, window_bounds = array<i64: 16, 1>}, {transform_indices = @transform_3, window_bounds = array<i64: 16, 16>}]} {
    %c0 = arith.constant 0 : index
    %c0_0 = arith.constant 0 : index
    %0 = vector.load %arg2[%c0, %c0_0] : memref<16x96xbf16, #tpu.memory_space<vmem>>, vector<16x96xbf16>
    %c0_1 = arith.constant 0 : index
    %c0_2 = arith.constant 0 : index
    %1 = vector.load %arg1[%c0_1, %c0_2] : memref<96x16xbf16, #tpu.memory_space<vmem>>, vector<96x16xbf16>
    %cst = arith.constant dense<0.000000e+00> : vector<16x16xf32>
    %2 = tpu.matmul %0, %1, %cst {dimension_numbers = #tpu.dot_dimension_numbers<[1], [0], [0], [1], [0, 0, 1, 1], [], []>} : vector<16x96xbf16>, vector<96x16xbf16>, vector<16x16xf32> -> vector<16x16xf32>
    %c0_3 = arith.constant 0 : index
    %c0_4 = arith.constant 0 : index
    %3 = vector.load %arg3[%c0_3, %c0_4] : memref<16x1xf32, #tpu.memory_space<vmem>>, vector<16x1xf32>
    %4 = vector.broadcast %3 : vector<16x1xf32> to vector<16x16xf32>
    %5 = arith.addf %2, %4 : vector<16x16xf32>
    %c0_5 = arith.constant 0 : index
    %c0_6 = arith.constant 0 : index
    %6 = vector.load %arg4[%c0_5, %c0_6] : memref<16x16xf32, #tpu.memory_space<vmem>>, vector<16x16xf32>
    tpu.vector_store %arg4[%c0_5, %c0_6], %5 {strides = array<i32>} : memref<16x16xf32, #tpu.memory_space<vmem>>, vector<16x16xf32>,
    return
  }
  func.func @transform_0(%arg0: i32) -> (i32, i32) {
    %c0_i32 = arith.constant 0 : i32
    %c0_i32_0 = arith.constant 0 : i32
    return %c0_i32, %arg0 : i32, i32
  }
  func.func @transform_1(%arg0: i32) -> (i32, i32) {
    %c0_i32 = arith.constant 0 : i32
    %c0_i32_0 = arith.constant 0 : i32
    %c0_i32_1 = arith.constant 0 : i32
    return %c0_i32, %c0_i32_0 : i32, i32
  }
  func.func @transform_2(%arg0: i32) -> (i32, i32) {
    %c0_i32 = arith.constant 0 : i32
    %c0_i32_0 = arith.constant 0 : i32
    %c0_i32_1 = arith.constant 0 : i32
    return %c0_i32, %c0_i32_0 : i32, i32
  }
  func.func @transform_3(%arg0: i32) -> (i32, i32) {
    %c0_i32 = arith.constant 0 : i32
    %c0_i32_0 = arith.constant 0 : i32
    return %c0_i32, %arg0 : i32, i32
  }
}

module attributes {stable_mosaic.version = 11 : i64} {
  func.func @_mm_kernel(%arg0: i32, %arg1: memref<80x4xbf16, #tpu.memory_space<vmem>>, %arg2: memref<24x80xbf16, #tpu.memory_space<vmem>>, %arg3: memref<24x1xf32, #tpu.memory_space<vmem>>, %arg4: memref<24x4xf32, #tpu.memory_space<vmem>>) attributes {dimension_semantics = [#tpu.dimension_semantics<parallel>], iteration_bounds = array<i64: 1>, scalar_prefetch = 0 : i64, scratch_operands = 0 : i64, tpu.core_type = #tpu.core_type<tc>, window_params = [{transform_indices = @transform_0, window_bounds = array<i64: 80, 4>}, {pipeline_mode = #tpu.pipeline_mode<synchronous>, transform_indices = @transform_1, window_bounds = array<i64: 24, 80>}, {pipeline_mode = #tpu.pipeline_mode<synchronous>, transform_indices = @transform_2, window_bounds = array<i64: 24, 1>}, {transform_indices = @transform_3, window_bounds = array<i64: 24, 4>}]} {
    %c0 = arith.constant 0 : index
    %c0_0 = arith.constant 0 : index
    %0 = vector.load %arg2[%c0, %c0_0] : memref<24x80xbf16, #tpu.memory_space<vmem>>, vector<24x80xbf16>
    %c0_1 = arith.constant 0 : index
    %c0_2 = arith.constant 0 : index
    %1 = vector.load %arg1[%c0_1, %c0_2] : memref<80x4xbf16, #tpu.memory_space<vmem>>, vector<80x4xbf16>
    %cst = arith.constant dense<0.000000e+00> : vector<24x4xf32>
    %2 = tpu.matmul %0, %1, %cst {dimension_numbers = #tpu.dot_dimension_numbers<[1], [0], [0], [1], [0, 0, 1, 1], [], []>} : vector<24x80xbf16>, vector<80x4xbf16>, vector<24x4xf32> -> vector<24x4xf32>
    %c0_3 = arith.constant 0 : index
    %c0_4 = arith.constant 0 : index
    %3 = vector.load %arg3[%c0_3, %c0_4] : memref<24x1xf32, #tpu.memory_space<vmem>>, vector<24x1xf32>
    %4 = vector.broadcast %3 : vector<24x1xf32> to vector<24x4xf32>
    %5 = arith.addf %2, %4 : vector<24x4xf32>
    %c0_5 = arith.constant 0 : index
    %c0_6 = arith.constant 0 : index
    %6 = vector.load %arg4[%c0_5, %c0_6] : memref<24x4xf32, #tpu.memory_space<vmem>>, vector<24x4xf32>
    tpu.vector_store %arg4[%c0_5, %c0_6], %5 {strides = array<i32>} : memref<24x4xf32, #tpu.memory_space<vmem>>, vector<24x4xf32>,
    return
  }
  func.func @transform_0(%arg0: i32) -> (i32, i32) {
    %c0_i32 = arith.constant 0 : i32
    %c0_i32_0 = arith.constant 0 : i32
    return %c0_i32, %arg0 : i32, i32
  }
  func.func @transform_1(%arg0: i32) -> (i32, i32) {
    %c0_i32 = arith.constant 0 : i32
    %c0_i32_0 = arith.constant 0 : i32
    %c0_i32_1 = arith.constant 0 : i32
    return %c0_i32, %c0_i32_0 : i32, i32
  }
  func.func @transform_2(%arg0: i32) -> (i32, i32) {
    %c0_i32 = arith.constant 0 : i32
    %c0_i32_0 = arith.constant 0 : i32
    %c0_i32_1 = arith.constant 0 : i32
    return %c0_i32, %c0_i32_0 : i32, i32
  }
  func.func @transform_3(%arg0: i32) -> (i32, i32) {
    %c0_i32 = arith.constant 0 : i32
    %c0_i32_0 = arith.constant 0 : i32
    return %c0_i32, %arg0 : i32, i32
  }
}

module attributes {stable_mosaic.version = 11 : i64} {
  func.func @_mm_kernel(%arg0: i32, %arg1: memref<108x256xbf16, #tpu.memory_space<vmem>>, %arg2: memref<8x108xbf16, #tpu.memory_space<vmem>>, %arg3: memref<8x1xf32, #tpu.memory_space<vmem>>, %arg4: memref<8x256xf32, #tpu.memory_space<vmem>>) attributes {dimension_semantics = [#tpu.dimension_semantics<parallel>], iteration_bounds = array<i64: 1>, scalar_prefetch = 0 : i64, scratch_operands = 0 : i64, tpu.core_type = #tpu.core_type<tc>, window_params = [{transform_indices = @transform_0, window_bounds = array<i64: 108, 256>}, {pipeline_mode = #tpu.pipeline_mode<synchronous>, transform_indices = @transform_1, window_bounds = array<i64: 8, 108>}, {pipeline_mode = #tpu.pipeline_mode<synchronous>, transform_indices = @transform_2, window_bounds = array<i64: 8, 1>}, {transform_indices = @transform_3, window_bounds = array<i64: 8, 256>}]} {
    %c0 = arith.constant 0 : index
    %c0_0 = arith.constant 0 : index
    %0 = vector.load %arg2[%c0, %c0_0] : memref<8x108xbf16, #tpu.memory_space<vmem>>, vector<8x108xbf16>
    %c0_1 = arith.constant 0 : index
    %c0_2 = arith.constant 0 : index
    %1 = vector.load %arg1[%c0_1, %c0_2] : memref<108x256xbf16, #tpu.memory_space<vmem>>, vector<108x256xbf16>
    %cst = arith.constant dense<0.000000e+00> : vector<8x256xf32>
    %2 = tpu.matmul %0, %1, %cst {dimension_numbers = #tpu.dot_dimension_numbers<[1], [0], [0], [1], [0, 0, 1, 1], [], []>} : vector<8x108xbf16>, vector<108x256xbf16>, vector<8x256xf32> -> vector<8x256xf32>
    %c0_3 = arith.constant 0 : index
    %c0_4 = arith.constant 0 : index
    %3 = vector.load %arg3[%c0_3, %c0_4] : memref<8x1xf32, #tpu.memory_space<vmem>>, vector<8x1xf32>
    %4 = vector.broadcast %3 : vector<8x1xf32> to vector<8x256xf32>
    %5 = arith.addf %2, %4 : vector<8x256xf32>
    %cst_5 = arith.constant 0.000000e+00 : f32
    %6 = vector.broadcast %cst_5 : f32 to vector<8x256xf32>
    %7 = arith.cmpf oge, %5, %6 : vector<8x256xf32>
    %cst_6 = arith.constant 0.00999999977 : f32
    %8 = vector.broadcast %cst_6 : f32 to vector<8x256xf32>
    %9 = arith.mulf %8, %5 : vector<8x256xf32>
    %10 = arith.select %7, %5, %9 : vector<8x256xi1>, vector<8x256xf32>
    %c0_7 = arith.constant 0 : index
    %c0_8 = arith.constant 0 : index
    %11 = vector.load %arg4[%c0_7, %c0_8] : memref<8x256xf32, #tpu.memory_space<vmem>>, vector<8x256xf32>
    tpu.vector_store %arg4[%c0_7, %c0_8], %10 {strides = array<i32>} : memref<8x256xf32, #tpu.memory_space<vmem>>, vector<8x256xf32>,
    return
  }
  func.func @transform_0(%arg0: i32) -> (i32, i32) {
    %c0_i32 = arith.constant 0 : i32
    %c0_i32_0 = arith.constant 0 : i32
    return %c0_i32, %arg0 : i32, i32
  }
  func.func @transform_1(%arg0: i32) -> (i32, i32) {
    %c0_i32 = arith.constant 0 : i32
    %c0_i32_0 = arith.constant 0 : i32
    %c0_i32_1 = arith.constant 0 : i32
    return %c0_i32, %c0_i32_0 : i32, i32
  }
  func.func @transform_2(%arg0: i32) -> (i32, i32) {
    %c0_i32 = arith.constant 0 : i32
    %c0_i32_0 = arith.constant 0 : i32
    %c0_i32_1 = arith.constant 0 : i32
    return %c0_i32, %c0_i32_0 : i32, i32
  }
  func.func @transform_3(%arg0: i32) -> (i32, i32) {
    %c0_i32 = arith.constant 0 : i32
    %c0_i32_0 = arith.constant 0 : i32
    return %c0_i32, %arg0 : i32, i32
  }
}

module attributes {stable_mosaic.version = 11 : i64} {
  func.func @_mm_kernel(%arg0: i32, %arg1: memref<216x256xbf16, #tpu.memory_space<vmem>>, %arg2: memref<8x216xbf16, #tpu.memory_space<vmem>>, %arg3: memref<8x1xf32, #tpu.memory_space<vmem>>, %arg4: memref<8x256xf32, #tpu.memory_space<vmem>>) attributes {dimension_semantics = [#tpu.dimension_semantics<parallel>], iteration_bounds = array<i64: 1>, scalar_prefetch = 0 : i64, scratch_operands = 0 : i64, tpu.core_type = #tpu.core_type<tc>, window_params = [{transform_indices = @transform_0, window_bounds = array<i64: 216, 256>}, {pipeline_mode = #tpu.pipeline_mode<synchronous>, transform_indices = @transform_1, window_bounds = array<i64: 8, 216>}, {pipeline_mode = #tpu.pipeline_mode<synchronous>, transform_indices = @transform_2, window_bounds = array<i64: 8, 1>}, {transform_indices = @transform_3, window_bounds = array<i64: 8, 256>}]} {
    %c0 = arith.constant 0 : index
    %c0_0 = arith.constant 0 : index
    %0 = vector.load %arg2[%c0, %c0_0] : memref<8x216xbf16, #tpu.memory_space<vmem>>, vector<8x216xbf16>
    %c0_1 = arith.constant 0 : index
    %c0_2 = arith.constant 0 : index
    %1 = vector.load %arg1[%c0_1, %c0_2] : memref<216x256xbf16, #tpu.memory_space<vmem>>, vector<216x256xbf16>
    %cst = arith.constant dense<0.000000e+00> : vector<8x256xf32>
    %2 = tpu.matmul %0, %1, %cst {dimension_numbers = #tpu.dot_dimension_numbers<[1], [0], [0], [1], [0, 0, 1, 1], [], []>} : vector<8x216xbf16>, vector<216x256xbf16>, vector<8x256xf32> -> vector<8x256xf32>
    %c0_3 = arith.constant 0 : index
    %c0_4 = arith.constant 0 : index
    %3 = vector.load %arg3[%c0_3, %c0_4] : memref<8x1xf32, #tpu.memory_space<vmem>>, vector<8x1xf32>
    %4 = vector.broadcast %3 : vector<8x1xf32> to vector<8x256xf32>
    %5 = arith.addf %2, %4 : vector<8x256xf32>
    %cst_5 = arith.constant 0.000000e+00 : f32
    %6 = vector.broadcast %cst_5 : f32 to vector<8x256xf32>
    %7 = arith.cmpf oge, %5, %6 : vector<8x256xf32>
    %cst_6 = arith.constant 0.00999999977 : f32
    %8 = vector.broadcast %cst_6 : f32 to vector<8x256xf32>
    %9 = arith.mulf %8, %5 : vector<8x256xf32>
    %10 = arith.select %7, %5, %9 : vector<8x256xi1>, vector<8x256xf32>
    %c0_7 = arith.constant 0 : index
    %c0_8 = arith.constant 0 : index
    %11 = vector.load %arg4[%c0_7, %c0_8] : memref<8x256xf32, #tpu.memory_space<vmem>>, vector<8x256xf32>
    tpu.vector_store %arg4[%c0_7, %c0_8], %10 {strides = array<i32>} : memref<8x256xf32, #tpu.memory_space<vmem>>, vector<8x256xf32>,
    return
  }
  func.func @transform_0(%arg0: i32) -> (i32, i32) {
    %c0_i32 = arith.constant 0 : i32
    %c0_i32_0 = arith.constant 0 : i32
    return %c0_i32, %arg0 : i32, i32
  }
  func.func @transform_1(%arg0: i32) -> (i32, i32) {
    %c0_i32 = arith.constant 0 : i32
    %c0_i32_0 = arith.constant 0 : i32
    %c0_i32_1 = arith.constant 0 : i32
    return %c0_i32, %c0_i32_0 : i32, i32
  }
  func.func @transform_2(%arg0: i32) -> (i32, i32) {
    %c0_i32 = arith.constant 0 : i32
    %c0_i32_0 = arith.constant 0 : i32
    %c0_i32_1 = arith.constant 0 : i32
    return %c0_i32, %c0_i32_0 : i32, i32
  }
  func.func @transform_3(%arg0: i32) -> (i32, i32) {
    %c0_i32 = arith.constant 0 : i32
    %c0_i32_0 = arith.constant 0 : i32
    return %c0_i32, %arg0 : i32, i32
  }
}

module attributes {stable_mosaic.version = 11 : i64} {
  func.func @_gate_kernel(%arg0: i32, %arg1: memref<8x1x64xf32, #tpu.memory_space<vmem>>, %arg2: memref<8x4x64xf32, #tpu.memory_space<vmem>>, %arg3: memref<8x4x64xf32, #tpu.memory_space<vmem>>) attributes {dimension_semantics = [#tpu.dimension_semantics<parallel>], iteration_bounds = array<i64: 1>, scalar_prefetch = 0 : i64, scratch_operands = 0 : i64, tpu.core_type = #tpu.core_type<tc>, window_params = [{transform_indices = @transform_0, window_bounds = array<i64: 8, 1, 64>}, {transform_indices = @transform_1, window_bounds = array<i64: 8, 4, 64>}, {transform_indices = @transform_2, window_bounds = array<i64: 8, 4, 64>}]} {
    %c0 = arith.constant 0 : index
    %c0_0 = arith.constant 0 : index
    %c0_1 = arith.constant 0 : index
    %0 = vector.load %arg1[%c0, %c0_0, %c0_1] : memref<8x1x64xf32, #tpu.memory_space<vmem>>, vector<8x1x64xf32>
    %cst = arith.constant 0.000000e+00 : f32
    %1 = vector.broadcast %cst : f32 to vector<8x1x64xf32>
    %2 = arith.subf %1, %0 : vector<8x1x64xf32>
    %3 = math.exp %2 : vector<8x1x64xf32>
    %cst_2 = arith.constant 1.000000e+00 : f32
    %4 = vector.broadcast %cst_2 : f32 to vector<8x1x64xf32>
    %5 = arith.addf %4, %3 : vector<8x1x64xf32>
    %cst_3 = arith.constant 1.000000e+00 : f32
    %6 = vector.broadcast %cst_3 : f32 to vector<8x1x64xf32>
    %7 = arith.divf %6, %5 : vector<8x1x64xf32>
    %c0_4 = arith.constant 0 : index
    %c0_5 = arith.constant 0 : index
    %c0_6 = arith.constant 0 : index
    %8 = vector.load %arg2[%c0_4, %c0_5, %c0_6] : memref<8x4x64xf32, #tpu.memory_space<vmem>>, vector<8x4x64xf32>
    %9 = vector.broadcast %7 : vector<8x1x64xf32> to vector<8x4x64xf32>
    %10 = arith.mulf %9, %8 : vector<8x4x64xf32>
    %c0_7 = arith.constant 0 : index
    %c0_8 = arith.constant 0 : index
    %c0_9 = arith.constant 0 : index
    %11 = vector.load %arg3[%c0_7, %c0_8, %c0_9] : memref<8x4x64xf32, #tpu.memory_space<vmem>>, vector<8x4x64xf32>
    tpu.vector_store %arg3[%c0_7, %c0_8, %c0_9], %10 {strides = array<i32>} : memref<8x4x64xf32, #tpu.memory_space<vmem>>, vector<8x4x64xf32>,
    return
  }
  func.func @transform_0(%arg0: i32) -> (i32, i32, i32) {
    %c0_i32 = arith.constant 0 : i32
    %c0_i32_0 = arith.constant 0 : i32
    %c0_i32_1 = arith.constant 0 : i32
    return %arg0, %c0_i32, %c0_i32_0 : i32, i32, i32
  }
  func.func @transform_1(%arg0: i32) -> (i32, i32, i32) {
    %c0_i32 = arith.constant 0 : i32
    %c0_i32_0 = arith.constant 0 : i32
    %c0_i32_1 = arith.constant 0 : i32
    return %arg0, %c0_i32, %c0_i32_0 : i32, i32, i32
  }
  func.func @transform_2(%arg0: i32) -> (i32, i32, i32) {
    %c0_i32 = arith.constant 0 : i32
    %c0_i32_0 = arith.constant 0 : i32
    %c0_i32_1 = arith.constant 0 : i32
    return %arg0, %c0_i32, %c0_i32_0 : i32, i32, i32
  }
}

module attributes {stable_mosaic.version = 11 : i64} {
  func.func @_mm_kernel(%arg0: i32, %arg1: memref<216x32xbf16, #tpu.memory_space<vmem>>, %arg2: memref<16x216xbf16, #tpu.memory_space<vmem>>, %arg3: memref<16x1xf32, #tpu.memory_space<vmem>>, %arg4: memref<16x32xf32, #tpu.memory_space<vmem>>) attributes {dimension_semantics = [#tpu.dimension_semantics<parallel>], iteration_bounds = array<i64: 1>, scalar_prefetch = 0 : i64, scratch_operands = 0 : i64, tpu.core_type = #tpu.core_type<tc>, window_params = [{transform_indices = @transform_0, window_bounds = array<i64: 216, 32>}, {pipeline_mode = #tpu.pipeline_mode<synchronous>, transform_indices = @transform_1, window_bounds = array<i64: 16, 216>}, {pipeline_mode = #tpu.pipeline_mode<synchronous>, transform_indices = @transform_2, window_bounds = array<i64: 16, 1>}, {transform_indices = @transform_3, window_bounds = array<i64: 16, 32>}]} {
    %c0 = arith.constant 0 : index
    %c0_0 = arith.constant 0 : index
    %0 = vector.load %arg2[%c0, %c0_0] : memref<16x216xbf16, #tpu.memory_space<vmem>>, vector<16x216xbf16>
    %c0_1 = arith.constant 0 : index
    %c0_2 = arith.constant 0 : index
    %1 = vector.load %arg1[%c0_1, %c0_2] : memref<216x32xbf16, #tpu.memory_space<vmem>>, vector<216x32xbf16>
    %cst = arith.constant dense<0.000000e+00> : vector<16x32xf32>
    %2 = tpu.matmul %0, %1, %cst {dimension_numbers = #tpu.dot_dimension_numbers<[1], [0], [0], [1], [0, 0, 1, 1], [], []>} : vector<16x216xbf16>, vector<216x32xbf16>, vector<16x32xf32> -> vector<16x32xf32>
    %c0_3 = arith.constant 0 : index
    %c0_4 = arith.constant 0 : index
    %3 = vector.load %arg3[%c0_3, %c0_4] : memref<16x1xf32, #tpu.memory_space<vmem>>, vector<16x1xf32>
    %4 = vector.broadcast %3 : vector<16x1xf32> to vector<16x32xf32>
    %5 = arith.addf %2, %4 : vector<16x32xf32>
    %cst_5 = arith.constant 0.000000e+00 : f32
    %6 = vector.broadcast %cst_5 : f32 to vector<16x32xf32>
    %7 = arith.cmpf oge, %5, %6 : vector<16x32xf32>
    %cst_6 = arith.constant 0.00999999977 : f32
    %8 = vector.broadcast %cst_6 : f32 to vector<16x32xf32>
    %9 = arith.mulf %8, %5 : vector<16x32xf32>
    %10 = arith.select %7, %5, %9 : vector<16x32xi1>, vector<16x32xf32>
    %c0_7 = arith.constant 0 : index
    %c0_8 = arith.constant 0 : index
    %11 = vector.load %arg4[%c0_7, %c0_8] : memref<16x32xf32, #tpu.memory_space<vmem>>, vector<16x32xf32>
    tpu.vector_store %arg4[%c0_7, %c0_8], %10 {strides = array<i32>} : memref<16x32xf32, #tpu.memory_space<vmem>>, vector<16x32xf32>,
    return
  }
  func.func @transform_0(%arg0: i32) -> (i32, i32) {
    %c0_i32 = arith.constant 0 : i32
    %c0_i32_0 = arith.constant 0 : i32
    return %c0_i32, %arg0 : i32, i32
  }
  func.func @transform_1(%arg0: i32) -> (i32, i32) {
    %c0_i32 = arith.constant 0 : i32
    %c0_i32_0 = arith.constant 0 : i32
    %c0_i32_1 = arith.constant 0 : i32
    return %c0_i32, %c0_i32_0 : i32, i32
  }
  func.func @transform_2(%arg0: i32) -> (i32, i32) {
    %c0_i32 = arith.constant 0 : i32
    %c0_i32_0 = arith.constant 0 : i32
    %c0_i32_1 = arith.constant 0 : i32
    return %c0_i32, %c0_i32_0 : i32, i32
  }
  func.func @transform_3(%arg0: i32) -> (i32, i32) {
    %c0_i32 = arith.constant 0 : i32
    %c0_i32_0 = arith.constant 0 : i32
    return %c0_i32, %arg0 : i32, i32
  }
}

module attributes {stable_mosaic.version = 11 : i64} {
  func.func @_mm_kernel(%arg0: i32, %arg1: memref<432x32xbf16, #tpu.memory_space<vmem>>, %arg2: memref<16x432xbf16, #tpu.memory_space<vmem>>, %arg3: memref<16x1xf32, #tpu.memory_space<vmem>>, %arg4: memref<16x32xf32, #tpu.memory_space<vmem>>) attributes {dimension_semantics = [#tpu.dimension_semantics<parallel>], iteration_bounds = array<i64: 1>, scalar_prefetch = 0 : i64, scratch_operands = 0 : i64, tpu.core_type = #tpu.core_type<tc>, window_params = [{transform_indices = @transform_0, window_bounds = array<i64: 432, 32>}, {pipeline_mode = #tpu.pipeline_mode<synchronous>, transform_indices = @transform_1, window_bounds = array<i64: 16, 432>}, {pipeline_mode = #tpu.pipeline_mode<synchronous>, transform_indices = @transform_2, window_bounds = array<i64: 16, 1>}, {transform_indices = @transform_3, window_bounds = array<i64: 16, 32>}]} {
    %c0 = arith.constant 0 : index
    %c0_0 = arith.constant 0 : index
    %0 = vector.load %arg2[%c0, %c0_0] : memref<16x432xbf16, #tpu.memory_space<vmem>>, vector<16x432xbf16>
    %c0_1 = arith.constant 0 : index
    %c0_2 = arith.constant 0 : index
    %1 = vector.load %arg1[%c0_1, %c0_2] : memref<432x32xbf16, #tpu.memory_space<vmem>>, vector<432x32xbf16>
    %cst = arith.constant dense<0.000000e+00> : vector<16x32xf32>
    %2 = tpu.matmul %0, %1, %cst {dimension_numbers = #tpu.dot_dimension_numbers<[1], [0], [0], [1], [0, 0, 1, 1], [], []>} : vector<16x432xbf16>, vector<432x32xbf16>, vector<16x32xf32> -> vector<16x32xf32>
    %c0_3 = arith.constant 0 : index
    %c0_4 = arith.constant 0 : index
    %3 = vector.load %arg3[%c0_3, %c0_4] : memref<16x1xf32, #tpu.memory_space<vmem>>, vector<16x1xf32>
    %4 = vector.broadcast %3 : vector<16x1xf32> to vector<16x32xf32>
    %5 = arith.addf %2, %4 : vector<16x32xf32>
    %cst_5 = arith.constant 0.000000e+00 : f32
    %6 = vector.broadcast %cst_5 : f32 to vector<16x32xf32>
    %7 = arith.cmpf oge, %5, %6 : vector<16x32xf32>
    %cst_6 = arith.constant 0.00999999977 : f32
    %8 = vector.broadcast %cst_6 : f32 to vector<16x32xf32>
    %9 = arith.mulf %8, %5 : vector<16x32xf32>
    %10 = arith.select %7, %5, %9 : vector<16x32xi1>, vector<16x32xf32>
    %c0_7 = arith.constant 0 : index
    %c0_8 = arith.constant 0 : index
    %11 = vector.load %arg4[%c0_7, %c0_8] : memref<16x32xf32, #tpu.memory_space<vmem>>, vector<16x32xf32>
    tpu.vector_store %arg4[%c0_7, %c0_8], %10 {strides = array<i32>} : memref<16x32xf32, #tpu.memory_space<vmem>>, vector<16x32xf32>,
    return
  }
  func.func @transform_0(%arg0: i32) -> (i32, i32) {
    %c0_i32 = arith.constant 0 : i32
    %c0_i32_0 = arith.constant 0 : i32
    return %c0_i32, %arg0 : i32, i32
  }
  func.func @transform_1(%arg0: i32) -> (i32, i32) {
    %c0_i32 = arith.constant 0 : i32
    %c0_i32_0 = arith.constant 0 : i32
    %c0_i32_1 = arith.constant 0 : i32
    return %c0_i32, %c0_i32_0 : i32, i32
  }
  func.func @transform_2(%arg0: i32) -> (i32, i32) {
    %c0_i32 = arith.constant 0 : i32
    %c0_i32_0 = arith.constant 0 : i32
    %c0_i32_1 = arith.constant 0 : i32
    return %c0_i32, %c0_i32_0 : i32, i32
  }
  func.func @transform_3(%arg0: i32) -> (i32, i32) {
    %c0_i32 = arith.constant 0 : i32
    %c0_i32_0 = arith.constant 0 : i32
    return %c0_i32, %arg0 : i32, i32
  }
}

module attributes {stable_mosaic.version = 11 : i64} {
  func.func @_gate_kernel(%arg0: i32, %arg1: memref<8x1x16xf32, #tpu.memory_space<vmem>>, %arg2: memref<8x2x16xf32, #tpu.memory_space<vmem>>, %arg3: memref<8x2x16xf32, #tpu.memory_space<vmem>>) attributes {dimension_semantics = [#tpu.dimension_semantics<parallel>], iteration_bounds = array<i64: 2>, scalar_prefetch = 0 : i64, scratch_operands = 0 : i64, tpu.core_type = #tpu.core_type<tc>, window_params = [{transform_indices = @transform_0, window_bounds = array<i64: 8, 1, 16>}, {transform_indices = @transform_1, window_bounds = array<i64: 8, 2, 16>}, {transform_indices = @transform_2, window_bounds = array<i64: 8, 2, 16>}]} {
    %c0 = arith.constant 0 : index
    %c0_0 = arith.constant 0 : index
    %c0_1 = arith.constant 0 : index
    %0 = vector.load %arg1[%c0, %c0_0, %c0_1] : memref<8x1x16xf32, #tpu.memory_space<vmem>>, vector<8x1x16xf32>
    %cst = arith.constant 0.000000e+00 : f32
    %1 = vector.broadcast %cst : f32 to vector<8x1x16xf32>
    %2 = arith.subf %1, %0 : vector<8x1x16xf32>
    %3 = math.exp %2 : vector<8x1x16xf32>
    %cst_2 = arith.constant 1.000000e+00 : f32
    %4 = vector.broadcast %cst_2 : f32 to vector<8x1x16xf32>
    %5 = arith.addf %4, %3 : vector<8x1x16xf32>
    %cst_3 = arith.constant 1.000000e+00 : f32
    %6 = vector.broadcast %cst_3 : f32 to vector<8x1x16xf32>
    %7 = arith.divf %6, %5 : vector<8x1x16xf32>
    %c0_4 = arith.constant 0 : index
    %c0_5 = arith.constant 0 : index
    %c0_6 = arith.constant 0 : index
    %8 = vector.load %arg2[%c0_4, %c0_5, %c0_6] : memref<8x2x16xf32, #tpu.memory_space<vmem>>, vector<8x2x16xf32>
    %9 = vector.broadcast %7 : vector<8x1x16xf32> to vector<8x2x16xf32>
    %10 = arith.mulf %9, %8 : vector<8x2x16xf32>
    %c0_7 = arith.constant 0 : index
    %c0_8 = arith.constant 0 : index
    %c0_9 = arith.constant 0 : index
    %11 = vector.load %arg3[%c0_7, %c0_8, %c0_9] : memref<8x2x16xf32, #tpu.memory_space<vmem>>, vector<8x2x16xf32>
    tpu.vector_store %arg3[%c0_7, %c0_8, %c0_9], %10 {strides = array<i32>} : memref<8x2x16xf32, #tpu.memory_space<vmem>>, vector<8x2x16xf32>,
    return
  }
  func.func @transform_0(%arg0: i32) -> (i32, i32, i32) {
    %c0_i32 = arith.constant 0 : i32
    %c0_i32_0 = arith.constant 0 : i32
    %c0_i32_1 = arith.constant 0 : i32
    return %arg0, %c0_i32, %c0_i32_0 : i32, i32, i32
  }
  func.func @transform_1(%arg0: i32) -> (i32, i32, i32) {
    %c0_i32 = arith.constant 0 : i32
    %c0_i32_0 = arith.constant 0 : i32
    %c0_i32_1 = arith.constant 0 : i32
    return %arg0, %c0_i32, %c0_i32_0 : i32, i32, i32
  }
  func.func @transform_2(%arg0: i32) -> (i32, i32, i32) {
    %c0_i32 = arith.constant 0 : i32
    %c0_i32_0 = arith.constant 0 : i32
    %c0_i32_1 = arith.constant 0 : i32
    return %arg0, %c0_i32, %c0_i32_0 : i32, i32, i32
  }
}

module attributes {stable_mosaic.version = 11 : i64} {
  func.func @_mm_kernel(%arg0: i32, %arg1: memref<432x4xbf16, #tpu.memory_space<vmem>>, %arg2: memref<24x432xbf16, #tpu.memory_space<vmem>>, %arg3: memref<24x1xf32, #tpu.memory_space<vmem>>, %arg4: memref<24x4xf32, #tpu.memory_space<vmem>>) attributes {dimension_semantics = [#tpu.dimension_semantics<parallel>], iteration_bounds = array<i64: 1>, scalar_prefetch = 0 : i64, scratch_operands = 0 : i64, tpu.core_type = #tpu.core_type<tc>, window_params = [{transform_indices = @transform_0, window_bounds = array<i64: 432, 4>}, {pipeline_mode = #tpu.pipeline_mode<synchronous>, transform_indices = @transform_1, window_bounds = array<i64: 24, 432>}, {pipeline_mode = #tpu.pipeline_mode<synchronous>, transform_indices = @transform_2, window_bounds = array<i64: 24, 1>}, {transform_indices = @transform_3, window_bounds = array<i64: 24, 4>}]} {
    %c0 = arith.constant 0 : index
    %c0_0 = arith.constant 0 : index
    %0 = vector.load %arg2[%c0, %c0_0] : memref<24x432xbf16, #tpu.memory_space<vmem>>, vector<24x432xbf16>
    %c0_1 = arith.constant 0 : index
    %c0_2 = arith.constant 0 : index
    %1 = vector.load %arg1[%c0_1, %c0_2] : memref<432x4xbf16, #tpu.memory_space<vmem>>, vector<432x4xbf16>
    %cst = arith.constant dense<0.000000e+00> : vector<24x4xf32>
    %2 = tpu.matmul %0, %1, %cst {dimension_numbers = #tpu.dot_dimension_numbers<[1], [0], [0], [1], [0, 0, 1, 1], [], []>} : vector<24x432xbf16>, vector<432x4xbf16>, vector<24x4xf32> -> vector<24x4xf32>
    %c0_3 = arith.constant 0 : index
    %c0_4 = arith.constant 0 : index
    %3 = vector.load %arg3[%c0_3, %c0_4] : memref<24x1xf32, #tpu.memory_space<vmem>>, vector<24x1xf32>
    %4 = vector.broadcast %3 : vector<24x1xf32> to vector<24x4xf32>
    %5 = arith.addf %2, %4 : vector<24x4xf32>
    %cst_5 = arith.constant 0.000000e+00 : f32
    %6 = vector.broadcast %cst_5 : f32 to vector<24x4xf32>
    %7 = arith.cmpf oge, %5, %6 : vector<24x4xf32>
    %cst_6 = arith.constant 0.00999999977 : f32
    %8 = vector.broadcast %cst_6 : f32 to vector<24x4xf32>
    %9 = arith.mulf %8, %5 : vector<24x4xf32>
    %10 = arith.select %7, %5, %9 : vector<24x4xi1>, vector<24x4xf32>
    %c0_7 = arith.constant 0 : index
    %c0_8 = arith.constant 0 : index
    %11 = vector.load %arg4[%c0_7, %c0_8] : memref<24x4xf32, #tpu.memory_space<vmem>>, vector<24x4xf32>
    tpu.vector_store %arg4[%c0_7, %c0_8], %10 {strides = array<i32>} : memref<24x4xf32, #tpu.memory_space<vmem>>, vector<24x4xf32>,
    return
  }
  func.func @transform_0(%arg0: i32) -> (i32, i32) {
    %c0_i32 = arith.constant 0 : i32
    %c0_i32_0 = arith.constant 0 : i32
    return %c0_i32, %arg0 : i32, i32
  }
  func.func @transform_1(%arg0: i32) -> (i32, i32) {
    %c0_i32 = arith.constant 0 : i32
    %c0_i32_0 = arith.constant 0 : i32
    %c0_i32_1 = arith.constant 0 : i32
    return %c0_i32, %c0_i32_0 : i32, i32
  }
  func.func @transform_2(%arg0: i32) -> (i32, i32) {
    %c0_i32 = arith.constant 0 : i32
    %c0_i32_0 = arith.constant 0 : i32
    %c0_i32_1 = arith.constant 0 : i32
    return %c0_i32, %c0_i32_0 : i32, i32
  }
  func.func @transform_3(%arg0: i32) -> (i32, i32) {
    %c0_i32 = arith.constant 0 : i32
    %c0_i32_0 = arith.constant 0 : i32
    return %c0_i32, %arg0 : i32, i32
  }
}

module attributes {stable_mosaic.version = 11 : i64} {
  func.func @_mm_kernel(%arg0: i32, %arg1: memref<648x4xbf16, #tpu.memory_space<vmem>>, %arg2: memref<24x648xbf16, #tpu.memory_space<vmem>>, %arg3: memref<24x1xf32, #tpu.memory_space<vmem>>, %arg4: memref<24x4xf32, #tpu.memory_space<vmem>>) attributes {dimension_semantics = [#tpu.dimension_semantics<parallel>], iteration_bounds = array<i64: 1>, scalar_prefetch = 0 : i64, scratch_operands = 0 : i64, tpu.core_type = #tpu.core_type<tc>, window_params = [{transform_indices = @transform_0, window_bounds = array<i64: 648, 4>}, {pipeline_mode = #tpu.pipeline_mode<synchronous>, transform_indices = @transform_1, window_bounds = array<i64: 24, 648>}, {pipeline_mode = #tpu.pipeline_mode<synchronous>, transform_indices = @transform_2, window_bounds = array<i64: 24, 1>}, {transform_indices = @transform_3, window_bounds = array<i64: 24, 4>}]} {
    %c0 = arith.constant 0 : index
    %c0_0 = arith.constant 0 : index
    %0 = vector.load %arg2[%c0, %c0_0] : memref<24x648xbf16, #tpu.memory_space<vmem>>, vector<24x648xbf16>
    %c0_1 = arith.constant 0 : index
    %c0_2 = arith.constant 0 : index
    %1 = vector.load %arg1[%c0_1, %c0_2] : memref<648x4xbf16, #tpu.memory_space<vmem>>, vector<648x4xbf16>
    %cst = arith.constant dense<0.000000e+00> : vector<24x4xf32>
    %2 = tpu.matmul %0, %1, %cst {dimension_numbers = #tpu.dot_dimension_numbers<[1], [0], [0], [1], [0, 0, 1, 1], [], []>} : vector<24x648xbf16>, vector<648x4xbf16>, vector<24x4xf32> -> vector<24x4xf32>
    %c0_3 = arith.constant 0 : index
    %c0_4 = arith.constant 0 : index
    %3 = vector.load %arg3[%c0_3, %c0_4] : memref<24x1xf32, #tpu.memory_space<vmem>>, vector<24x1xf32>
    %4 = vector.broadcast %3 : vector<24x1xf32> to vector<24x4xf32>
    %5 = arith.addf %2, %4 : vector<24x4xf32>
    %cst_5 = arith.constant 0.000000e+00 : f32
    %6 = vector.broadcast %cst_5 : f32 to vector<24x4xf32>
    %7 = arith.cmpf oge, %5, %6 : vector<24x4xf32>
    %cst_6 = arith.constant 0.00999999977 : f32
    %8 = vector.broadcast %cst_6 : f32 to vector<24x4xf32>
    %9 = arith.mulf %8, %5 : vector<24x4xf32>
    %10 = arith.select %7, %5, %9 : vector<24x4xi1>, vector<24x4xf32>
    %c0_7 = arith.constant 0 : index
    %c0_8 = arith.constant 0 : index
    %11 = vector.load %arg4[%c0_7, %c0_8] : memref<24x4xf32, #tpu.memory_space<vmem>>, vector<24x4xf32>
    tpu.vector_store %arg4[%c0_7, %c0_8], %10 {strides = array<i32>} : memref<24x4xf32, #tpu.memory_space<vmem>>, vector<24x4xf32>,
    return
  }
  func.func @transform_0(%arg0: i32) -> (i32, i32) {
    %c0_i32 = arith.constant 0 : i32
    %c0_i32_0 = arith.constant 0 : i32
    return %c0_i32, %arg0 : i32, i32
  }
  func.func @transform_1(%arg0: i32) -> (i32, i32) {
    %c0_i32 = arith.constant 0 : i32
    %c0_i32_0 = arith.constant 0 : i32
    %c0_i32_1 = arith.constant 0 : i32
    return %c0_i32, %c0_i32_0 : i32, i32
  }
  func.func @transform_2(%arg0: i32) -> (i32, i32) {
    %c0_i32 = arith.constant 0 : i32
    %c0_i32_0 = arith.constant 0 : i32
    %c0_i32_1 = arith.constant 0 : i32
    return %c0_i32, %c0_i32_0 : i32, i32
  }
  func.func @transform_3(%arg0: i32) -> (i32, i32) {
    %c0_i32 = arith.constant 0 : i32
    %c0_i32_0 = arith.constant 0 : i32
    return %c0_i32, %arg0 : i32, i32
  }
}

module attributes {stable_mosaic.version = 11 : i64} {
  func.func @_gate_kernel(%arg0: i32, %arg1: memref<8x1x4xf32, #tpu.memory_space<vmem>>, %arg2: memref<8x1x4xf32, #tpu.memory_space<vmem>>, %arg3: memref<8x1x4xf32, #tpu.memory_space<vmem>>) attributes {dimension_semantics = [#tpu.dimension_semantics<parallel>], iteration_bounds = array<i64: 3>, scalar_prefetch = 0 : i64, scratch_operands = 0 : i64, tpu.core_type = #tpu.core_type<tc>, window_params = [{transform_indices = @transform_0, window_bounds = array<i64: 8, 1, 4>}, {transform_indices = @transform_1, window_bounds = array<i64: 8, 1, 4>}, {transform_indices = @transform_2, window_bounds = array<i64: 8, 1, 4>}]} {
    %c0 = arith.constant 0 : index
    %c0_0 = arith.constant 0 : index
    %c0_1 = arith.constant 0 : index
    %0 = vector.load %arg1[%c0, %c0_0, %c0_1] : memref<8x1x4xf32, #tpu.memory_space<vmem>>, vector<8x1x4xf32>
    %cst = arith.constant 0.000000e+00 : f32
    %1 = vector.broadcast %cst : f32 to vector<8x1x4xf32>
    %2 = arith.subf %1, %0 : vector<8x1x4xf32>
    %3 = math.exp %2 : vector<8x1x4xf32>
    %cst_2 = arith.constant 1.000000e+00 : f32
    %4 = vector.broadcast %cst_2 : f32 to vector<8x1x4xf32>
    %5 = arith.addf %4, %3 : vector<8x1x4xf32>
    %cst_3 = arith.constant 1.000000e+00 : f32
    %6 = vector.broadcast %cst_3 : f32 to vector<8x1x4xf32>
    %7 = arith.divf %6, %5 : vector<8x1x4xf32>
    %c0_4 = arith.constant 0 : index
    %c0_5 = arith.constant 0 : index
    %c0_6 = arith.constant 0 : index
    %8 = vector.load %arg2[%c0_4, %c0_5, %c0_6] : memref<8x1x4xf32, #tpu.memory_space<vmem>>, vector<8x1x4xf32>
    %9 = arith.mulf %7, %8 : vector<8x1x4xf32>
    %c0_7 = arith.constant 0 : index
    %c0_8 = arith.constant 0 : index
    %c0_9 = arith.constant 0 : index
    %10 = vector.load %arg3[%c0_7, %c0_8, %c0_9] : memref<8x1x4xf32, #tpu.memory_space<vmem>>, vector<8x1x4xf32>
    tpu.vector_store %arg3[%c0_7, %c0_8, %c0_9], %9 {strides = array<i32>} : memref<8x1x4xf32, #tpu.memory_space<vmem>>, vector<8x1x4xf32>,
    return
  }
  func.func @transform_0(%arg0: i32) -> (i32, i32, i32) {
    %c0_i32 = arith.constant 0 : i32
    %c0_i32_0 = arith.constant 0 : i32
    %c0_i32_1 = arith.constant 0 : i32
    return %arg0, %c0_i32, %c0_i32_0 : i32, i32, i32
  }
  func.func @transform_1(%arg0: i32) -> (i32, i32, i32) {
    %c0_i32 = arith.constant 0 : i32
    %c0_i32_0 = arith.constant 0 : i32
    %c0_i32_1 = arith.constant 0 : i32
    return %arg0, %c0_i32, %c0_i32_0 : i32, i32, i32
  }
  func.func @transform_2(%arg0: i32) -> (i32, i32, i32) {
    %c0_i32 = arith.constant 0 : i32
    %c0_i32_0 = arith.constant 0 : i32
    %c0_i32_1 = arith.constant 0 : i32
    return %arg0, %c0_i32, %c0_i32_0 : i32, i32, i32
  }
}

module attributes {stable_mosaic.version = 11 : i64} {
  func.func @_mm_kernel(%arg0: i32, %arg1: memref<192x4xbf16, #tpu.memory_space<vmem>>, %arg2: memref<16x192xbf16, #tpu.memory_space<vmem>>, %arg3: memref<16x1xf32, #tpu.memory_space<vmem>>, %arg4: memref<16x4xf32, #tpu.memory_space<vmem>>) attributes {dimension_semantics = [#tpu.dimension_semantics<parallel>], iteration_bounds = array<i64: 1>, scalar_prefetch = 0 : i64, scratch_operands = 0 : i64, tpu.core_type = #tpu.core_type<tc>, window_params = [{transform_indices = @transform_0, window_bounds = array<i64: 192, 4>}, {pipeline_mode = #tpu.pipeline_mode<synchronous>, transform_indices = @transform_1, window_bounds = array<i64: 16, 192>}, {pipeline_mode = #tpu.pipeline_mode<synchronous>, transform_indices = @transform_2, window_bounds = array<i64: 16, 1>}, {transform_indices = @transform_3, window_bounds = array<i64: 16, 4>}]} {
    %c0 = arith.constant 0 : index
    %c0_0 = arith.constant 0 : index
    %0 = vector.load %arg2[%c0, %c0_0] : memref<16x192xbf16, #tpu.memory_space<vmem>>, vector<16x192xbf16>
    %c0_1 = arith.constant 0 : index
    %c0_2 = arith.constant 0 : index
    %1 = vector.load %arg1[%c0_1, %c0_2] : memref<192x4xbf16, #tpu.memory_space<vmem>>, vector<192x4xbf16>
    %cst = arith.constant dense<0.000000e+00> : vector<16x4xf32>
    %2 = tpu.matmul %0, %1, %cst {dimension_numbers = #tpu.dot_dimension_numbers<[1], [0], [0], [1], [0, 0, 1, 1], [], []>} : vector<16x192xbf16>, vector<192x4xbf16>, vector<16x4xf32> -> vector<16x4xf32>
    %c0_3 = arith.constant 0 : index
    %c0_4 = arith.constant 0 : index
    %3 = vector.load %arg3[%c0_3, %c0_4] : memref<16x1xf32, #tpu.memory_space<vmem>>, vector<16x1xf32>
    %4 = vector.broadcast %3 : vector<16x1xf32> to vector<16x4xf32>
    %5 = arith.addf %2, %4 : vector<16x4xf32>
    %cst_5 = arith.constant 0.000000e+00 : f32
    %6 = vector.broadcast %cst_5 : f32 to vector<16x4xf32>
    %7 = arith.cmpf oge, %5, %6 : vector<16x4xf32>
    %cst_6 = arith.constant 0.00999999977 : f32
    %8 = vector.broadcast %cst_6 : f32 to vector<16x4xf32>
    %9 = arith.mulf %8, %5 : vector<16x4xf32>
    %10 = arith.select %7, %5, %9 : vector<16x4xi1>, vector<16x4xf32>
    %c0_7 = arith.constant 0 : index
    %c0_8 = arith.constant 0 : index
    %11 = vector.load %arg4[%c0_7, %c0_8] : memref<16x4xf32, #tpu.memory_space<vmem>>, vector<16x4xf32>
    tpu.vector_store %arg4[%c0_7, %c0_8], %10 {strides = array<i32>} : memref<16x4xf32, #tpu.memory_space<vmem>>, vector<16x4xf32>,
    return
  }
  func.func @transform_0(%arg0: i32) -> (i32, i32) {
    %c0_i32 = arith.constant 0 : i32
    %c0_i32_0 = arith.constant 0 : i32
    return %c0_i32, %arg0 : i32, i32
  }
  func.func @transform_1(%arg0: i32) -> (i32, i32) {
    %c0_i32 = arith.constant 0 : i32
    %c0_i32_0 = arith.constant 0 : i32
    %c0_i32_1 = arith.constant 0 : i32
    return %c0_i32, %c0_i32_0 : i32, i32
  }
  func.func @transform_2(%arg0: i32) -> (i32, i32) {
    %c0_i32 = arith.constant 0 : i32
    %c0_i32_0 = arith.constant 0 : i32
    %c0_i32_1 = arith.constant 0 : i32
    return %c0_i32, %c0_i32_0 : i32, i32
  }
  func.func @transform_3(%arg0: i32) -> (i32, i32) {
    %c0_i32 = arith.constant 0 : i32
    %c0_i32_0 = arith.constant 0 : i32
    return %c0_i32, %arg0 : i32, i32
  }
}

module attributes {stable_mosaic.version = 11 : i64} {
  func.func @_mm2_kernel(%arg0: i32, %arg1: memref<16x32xbf16, #tpu.memory_space<vmem>>, %arg2: memref<16x32xbf16, #tpu.memory_space<vmem>>, %arg3: memref<16x16xbf16, #tpu.memory_space<vmem>>, %arg4: memref<16x16xbf16, #tpu.memory_space<vmem>>, %arg5: memref<16x1xf32, #tpu.memory_space<vmem>>, %arg6: memref<16x32xf32, #tpu.memory_space<vmem>>) attributes {dimension_semantics = [#tpu.dimension_semantics<parallel>], iteration_bounds = array<i64: 1>, scalar_prefetch = 0 : i64, scratch_operands = 0 : i64, tpu.core_type = #tpu.core_type<tc>, window_params = [{transform_indices = @transform_0, window_bounds = array<i64: 16, 32>}, {transform_indices = @transform_1, window_bounds = array<i64: 16, 32>}, {pipeline_mode = #tpu.pipeline_mode<synchronous>, transform_indices = @transform_2, window_bounds = array<i64: 16, 16>}, {pipeline_mode = #tpu.pipeline_mode<synchronous>, transform_indices = @transform_3, window_bounds = array<i64: 16, 16>}, {pipeline_mode = #tpu.pipeline_mode<synchronous>, transform_indices = @transform_4, window_bounds = array<i64: 16, 1>}, {transform_indices = @transform_5, window_bounds = array<i64: 16, 32>}]} {
    %c0 = arith.constant 0 : index
    %c0_0 = arith.constant 0 : index
    %0 = vector.load %arg3[%c0, %c0_0] : memref<16x16xbf16, #tpu.memory_space<vmem>>, vector<16x16xbf16>
    %c0_1 = arith.constant 0 : index
    %c0_2 = arith.constant 0 : index
    %1 = vector.load %arg1[%c0_1, %c0_2] : memref<16x32xbf16, #tpu.memory_space<vmem>>, vector<16x32xbf16>
    %cst = arith.constant dense<0.000000e+00> : vector<16x32xf32>
    %2 = tpu.matmul %0, %1, %cst {dimension_numbers = #tpu.dot_dimension_numbers<[1], [0], [0], [1], [0, 0, 1, 1], [], []>} : vector<16x16xbf16>, vector<16x32xbf16>, vector<16x32xf32> -> vector<16x32xf32>
    %c0_3 = arith.constant 0 : index
    %c0_4 = arith.constant 0 : index
    %3 = vector.load %arg4[%c0_3, %c0_4] : memref<16x16xbf16, #tpu.memory_space<vmem>>, vector<16x16xbf16>
    %c0_5 = arith.constant 0 : index
    %c0_6 = arith.constant 0 : index
    %4 = vector.load %arg2[%c0_5, %c0_6] : memref<16x32xbf16, #tpu.memory_space<vmem>>, vector<16x32xbf16>
    %cst_7 = arith.constant dense<0.000000e+00> : vector<16x32xf32>
    %5 = tpu.matmul %3, %4, %cst_7 {dimension_numbers = #tpu.dot_dimension_numbers<[1], [0], [0], [1], [0, 0, 1, 1], [], []>} : vector<16x16xbf16>, vector<16x32xbf16>, vector<16x32xf32> -> vector<16x32xf32>
    %6 = arith.addf %2, %5 : vector<16x32xf32>
    %c0_8 = arith.constant 0 : index
    %c0_9 = arith.constant 0 : index
    %7 = vector.load %arg5[%c0_8, %c0_9] : memref<16x1xf32, #tpu.memory_space<vmem>>, vector<16x1xf32>
    %8 = vector.broadcast %7 : vector<16x1xf32> to vector<16x32xf32>
    %9 = arith.addf %6, %8 : vector<16x32xf32>
    %cst_10 = arith.constant 0.000000e+00 : f32
    %10 = vector.broadcast %cst_10 : f32 to vector<16x32xf32>
    %11 = arith.cmpf oge, %9, %10 : vector<16x32xf32>
    %cst_11 = arith.constant 0.00999999977 : f32
    %12 = vector.broadcast %cst_11 : f32 to vector<16x32xf32>
    %13 = arith.mulf %12, %9 : vector<16x32xf32>
    %14 = arith.select %11, %9, %13 : vector<16x32xi1>, vector<16x32xf32>
    %c0_12 = arith.constant 0 : index
    %c0_13 = arith.constant 0 : index
    %15 = vector.load %arg6[%c0_12, %c0_13] : memref<16x32xf32, #tpu.memory_space<vmem>>, vector<16x32xf32>
    tpu.vector_store %arg6[%c0_12, %c0_13], %14 {strides = array<i32>} : memref<16x32xf32, #tpu.memory_space<vmem>>, vector<16x32xf32>,
    return
  }
  func.func @transform_0(%arg0: i32) -> (i32, i32) {
    %c0_i32 = arith.constant 0 : i32
    %c0_i32_0 = arith.constant 0 : i32
    return %c0_i32, %arg0 : i32, i32
  }
  func.func @transform_1(%arg0: i32) -> (i32, i32) {
    %c0_i32 = arith.constant 0 : i32
    %c0_i32_0 = arith.constant 0 : i32
    return %c0_i32, %arg0 : i32, i32
  }
  func.func @transform_2(%arg0: i32) -> (i32, i32) {
    %c0_i32 = arith.constant 0 : i32
    %c0_i32_0 = arith.constant 0 : i32
    %c0_i32_1 = arith.constant 0 : i32
    return %c0_i32, %c0_i32_0 : i32, i32
  }
  func.func @transform_3(%arg0: i32) -> (i32, i32) {
    %c0_i32 = arith.constant 0 : i32
    %c0_i32_0 = arith.constant 0 : i32
    %c0_i32_1 = arith.constant 0 : i32
    return %c0_i32, %c0_i32_0 : i32, i32
  }
  func.func @transform_4(%arg0: i32) -> (i32, i32) {
    %c0_i32 = arith.constant 0 : i32
    %c0_i32_0 = arith.constant 0 : i32
    %c0_i32_1 = arith.constant 0 : i32
    return %c0_i32, %c0_i32_0 : i32, i32
  }
  func.func @transform_5(%arg0: i32) -> (i32, i32) {
    %c0_i32 = arith.constant 0 : i32
    %c0_i32_0 = arith.constant 0 : i32
    return %c0_i32, %arg0 : i32, i32
  }
}

module attributes {stable_mosaic.version = 11 : i64} {
  func.func @_mm_kernel(%arg0: i32, %arg1: memref<128x32xbf16, #tpu.memory_space<vmem>>, %arg2: memref<8x128xbf16, #tpu.memory_space<vmem>>, %arg3: memref<8x1xf32, #tpu.memory_space<vmem>>, %arg4: memref<8x32xf32, #tpu.memory_space<vmem>>) attributes {dimension_semantics = [#tpu.dimension_semantics<parallel>], iteration_bounds = array<i64: 1>, scalar_prefetch = 0 : i64, scratch_operands = 0 : i64, tpu.core_type = #tpu.core_type<tc>, window_params = [{transform_indices = @transform_0, window_bounds = array<i64: 128, 32>}, {pipeline_mode = #tpu.pipeline_mode<synchronous>, transform_indices = @transform_1, window_bounds = array<i64: 8, 128>}, {pipeline_mode = #tpu.pipeline_mode<synchronous>, transform_indices = @transform_2, window_bounds = array<i64: 8, 1>}, {transform_indices = @transform_3, window_bounds = array<i64: 8, 32>}]} {
    %c0 = arith.constant 0 : index
    %c0_0 = arith.constant 0 : index
    %0 = vector.load %arg2[%c0, %c0_0] : memref<8x128xbf16, #tpu.memory_space<vmem>>, vector<8x128xbf16>
    %c0_1 = arith.constant 0 : index
    %c0_2 = arith.constant 0 : index
    %1 = vector.load %arg1[%c0_1, %c0_2] : memref<128x32xbf16, #tpu.memory_space<vmem>>, vector<128x32xbf16>
    %cst = arith.constant dense<0.000000e+00> : vector<8x32xf32>
    %2 = tpu.matmul %0, %1, %cst {dimension_numbers = #tpu.dot_dimension_numbers<[1], [0], [0], [1], [0, 0, 1, 1], [], []>} : vector<8x128xbf16>, vector<128x32xbf16>, vector<8x32xf32> -> vector<8x32xf32>
    %c0_3 = arith.constant 0 : index
    %c0_4 = arith.constant 0 : index
    %3 = vector.load %arg3[%c0_3, %c0_4] : memref<8x1xf32, #tpu.memory_space<vmem>>, vector<8x1xf32>
    %4 = vector.broadcast %3 : vector<8x1xf32> to vector<8x32xf32>
    %5 = arith.addf %2, %4 : vector<8x32xf32>
    %cst_5 = arith.constant 0.000000e+00 : f32
    %6 = vector.broadcast %cst_5 : f32 to vector<8x32xf32>
    %7 = arith.cmpf oge, %5, %6 : vector<8x32xf32>
    %cst_6 = arith.constant 0.00999999977 : f32
    %8 = vector.broadcast %cst_6 : f32 to vector<8x32xf32>
    %9 = arith.mulf %8, %5 : vector<8x32xf32>
    %10 = arith.select %7, %5, %9 : vector<8x32xi1>, vector<8x32xf32>
    %c0_7 = arith.constant 0 : index
    %c0_8 = arith.constant 0 : index
    %11 = vector.load %arg4[%c0_7, %c0_8] : memref<8x32xf32, #tpu.memory_space<vmem>>, vector<8x32xf32>
    tpu.vector_store %arg4[%c0_7, %c0_8], %10 {strides = array<i32>} : memref<8x32xf32, #tpu.memory_space<vmem>>, vector<8x32xf32>,
    return
  }
  func.func @transform_0(%arg0: i32) -> (i32, i32) {
    %c0_i32 = arith.constant 0 : i32
    %c0_i32_0 = arith.constant 0 : i32
    return %c0_i32, %arg0 : i32, i32
  }
  func.func @transform_1(%arg0: i32) -> (i32, i32) {
    %c0_i32 = arith.constant 0 : i32
    %c0_i32_0 = arith.constant 0 : i32
    %c0_i32_1 = arith.constant 0 : i32
    return %c0_i32, %c0_i32_0 : i32, i32
  }
  func.func @transform_2(%arg0: i32) -> (i32, i32) {
    %c0_i32 = arith.constant 0 : i32
    %c0_i32_0 = arith.constant 0 : i32
    %c0_i32_1 = arith.constant 0 : i32
    return %c0_i32, %c0_i32_0 : i32, i32
  }
  func.func @transform_3(%arg0: i32) -> (i32, i32) {
    %c0_i32 = arith.constant 0 : i32
    %c0_i32_0 = arith.constant 0 : i32
    return %c0_i32, %arg0 : i32, i32
  }
}

module attributes {stable_mosaic.version = 11 : i64} {
  func.func @_mm2_kernel(%arg0: i32, %arg1: memref<8x256xbf16, #tpu.memory_space<vmem>>, %arg2: memref<8x256xbf16, #tpu.memory_space<vmem>>, %arg3: memref<8x8xbf16, #tpu.memory_space<vmem>>, %arg4: memref<8x8xbf16, #tpu.memory_space<vmem>>, %arg5: memref<8x1xf32, #tpu.memory_space<vmem>>, %arg6: memref<8x256xf32, #tpu.memory_space<vmem>>) attributes {dimension_semantics = [#tpu.dimension_semantics<parallel>], iteration_bounds = array<i64: 1>, scalar_prefetch = 0 : i64, scratch_operands = 0 : i64, tpu.core_type = #tpu.core_type<tc>, window_params = [{transform_indices = @transform_0, window_bounds = array<i64: 8, 256>}, {transform_indices = @transform_1, window_bounds = array<i64: 8, 256>}, {pipeline_mode = #tpu.pipeline_mode<synchronous>, transform_indices = @transform_2, window_bounds = array<i64: 8, 8>}, {pipeline_mode = #tpu.pipeline_mode<synchronous>, transform_indices = @transform_3, window_bounds = array<i64: 8, 8>}, {pipeline_mode = #tpu.pipeline_mode<synchronous>, transform_indices = @transform_4, window_bounds = array<i64: 8, 1>}, {transform_indices = @transform_5, window_bounds = array<i64: 8, 256>}]} {
    %c0 = arith.constant 0 : index
    %c0_0 = arith.constant 0 : index
    %0 = vector.load %arg3[%c0, %c0_0] : memref<8x8xbf16, #tpu.memory_space<vmem>>, vector<8x8xbf16>
    %c0_1 = arith.constant 0 : index
    %c0_2 = arith.constant 0 : index
    %1 = vector.load %arg1[%c0_1, %c0_2] : memref<8x256xbf16, #tpu.memory_space<vmem>>, vector<8x256xbf16>
    %cst = arith.constant dense<0.000000e+00> : vector<8x256xf32>
    %2 = tpu.matmul %0, %1, %cst {dimension_numbers = #tpu.dot_dimension_numbers<[1], [0], [0], [1], [0, 0, 1, 1], [], []>} : vector<8x8xbf16>, vector<8x256xbf16>, vector<8x256xf32> -> vector<8x256xf32>
    %c0_3 = arith.constant 0 : index
    %c0_4 = arith.constant 0 : index
    %3 = vector.load %arg4[%c0_3, %c0_4] : memref<8x8xbf16, #tpu.memory_space<vmem>>, vector<8x8xbf16>
    %c0_5 = arith.constant 0 : index
    %c0_6 = arith.constant 0 : index
    %4 = vector.load %arg2[%c0_5, %c0_6] : memref<8x256xbf16, #tpu.memory_space<vmem>>, vector<8x256xbf16>
    %cst_7 = arith.constant dense<0.000000e+00> : vector<8x256xf32>
    %5 = tpu.matmul %3, %4, %cst_7 {dimension_numbers = #tpu.dot_dimension_numbers<[1], [0], [0], [1], [0, 0, 1, 1], [], []>} : vector<8x8xbf16>, vector<8x256xbf16>, vector<8x256xf32> -> vector<8x256xf32>
    %6 = arith.addf %2, %5 : vector<8x256xf32>
    %c0_8 = arith.constant 0 : index
    %c0_9 = arith.constant 0 : index
    %7 = vector.load %arg5[%c0_8, %c0_9] : memref<8x1xf32, #tpu.memory_space<vmem>>, vector<8x1xf32>
    %8 = vector.broadcast %7 : vector<8x1xf32> to vector<8x256xf32>
    %9 = arith.addf %6, %8 : vector<8x256xf32>
    %cst_10 = arith.constant 0.000000e+00 : f32
    %10 = vector.broadcast %cst_10 : f32 to vector<8x256xf32>
    %11 = arith.cmpf oge, %9, %10 : vector<8x256xf32>
    %cst_11 = arith.constant 0.00999999977 : f32
    %12 = vector.broadcast %cst_11 : f32 to vector<8x256xf32>
    %13 = arith.mulf %12, %9 : vector<8x256xf32>
    %14 = arith.select %11, %9, %13 : vector<8x256xi1>, vector<8x256xf32>
    %c0_12 = arith.constant 0 : index
    %c0_13 = arith.constant 0 : index
    %15 = vector.load %arg6[%c0_12, %c0_13] : memref<8x256xf32, #tpu.memory_space<vmem>>, vector<8x256xf32>
    tpu.vector_store %arg6[%c0_12, %c0_13], %14 {strides = array<i32>} : memref<8x256xf32, #tpu.memory_space<vmem>>, vector<8x256xf32>,
    return
  }
  func.func @transform_0(%arg0: i32) -> (i32, i32) {
    %c0_i32 = arith.constant 0 : i32
    %c0_i32_0 = arith.constant 0 : i32
    return %c0_i32, %arg0 : i32, i32
  }
  func.func @transform_1(%arg0: i32) -> (i32, i32) {
    %c0_i32 = arith.constant 0 : i32
    %c0_i32_0 = arith.constant 0 : i32
    return %c0_i32, %arg0 : i32, i32
  }
  func.func @transform_2(%arg0: i32) -> (i32, i32) {
    %c0_i32 = arith.constant 0 : i32
    %c0_i32_0 = arith.constant 0 : i32
    %c0_i32_1 = arith.constant 0 : i32
    return %c0_i32, %c0_i32_0 : i32, i32
  }
  func.func @transform_3(%arg0: i32) -> (i32, i32) {
    %c0_i32 = arith.constant 0 : i32
    %c0_i32_0 = arith.constant 0 : i32
    %c0_i32_1 = arith.constant 0 : i32
    return %c0_i32, %c0_i32_0 : i32, i32
  }
  func.func @transform_4(%arg0: i32) -> (i32, i32) {
    %c0_i32 = arith.constant 0 : i32
    %c0_i32_0 = arith.constant 0 : i32
    %c0_i32_1 = arith.constant 0 : i32
    return %c0_i32, %c0_i32_0 : i32, i32
  }
  func.func @transform_5(%arg0: i32) -> (i32, i32) {
    %c0_i32 = arith.constant 0 : i32
    %c0_i32_0 = arith.constant 0 : i32
    return %c0_i32, %arg0 : i32, i32
  }
}

module attributes {stable_mosaic.version = 11 : i64} {
  func.func @_mm_kernel(%arg0: i32, %arg1: memref<64x256xbf16, #tpu.memory_space<vmem>>, %arg2: memref<8x64xbf16, #tpu.memory_space<vmem>>, %arg3: memref<8x1xf32, #tpu.memory_space<vmem>>, %arg4: memref<8x256xf32, #tpu.memory_space<vmem>>) attributes {dimension_semantics = [#tpu.dimension_semantics<parallel>], iteration_bounds = array<i64: 1>, scalar_prefetch = 0 : i64, scratch_operands = 0 : i64, tpu.core_type = #tpu.core_type<tc>, window_params = [{transform_indices = @transform_0, window_bounds = array<i64: 64, 256>}, {pipeline_mode = #tpu.pipeline_mode<synchronous>, transform_indices = @transform_1, window_bounds = array<i64: 8, 64>}, {pipeline_mode = #tpu.pipeline_mode<synchronous>, transform_indices = @transform_2, window_bounds = array<i64: 8, 1>}, {transform_indices = @transform_3, window_bounds = array<i64: 8, 256>}]} {
    %c0 = arith.constant 0 : index
    %c0_0 = arith.constant 0 : index
    %0 = vector.load %arg2[%c0, %c0_0] : memref<8x64xbf16, #tpu.memory_space<vmem>>, vector<8x64xbf16>
    %c0_1 = arith.constant 0 : index
    %c0_2 = arith.constant 0 : index
    %1 = vector.load %arg1[%c0_1, %c0_2] : memref<64x256xbf16, #tpu.memory_space<vmem>>, vector<64x256xbf16>
    %cst = arith.constant dense<0.000000e+00> : vector<8x256xf32>
    %2 = tpu.matmul %0, %1, %cst {dimension_numbers = #tpu.dot_dimension_numbers<[1], [0], [0], [1], [0, 0, 1, 1], [], []>} : vector<8x64xbf16>, vector<64x256xbf16>, vector<8x256xf32> -> vector<8x256xf32>
    %c0_3 = arith.constant 0 : index
    %c0_4 = arith.constant 0 : index
    %3 = vector.load %arg3[%c0_3, %c0_4] : memref<8x1xf32, #tpu.memory_space<vmem>>, vector<8x1xf32>
    %4 = vector.broadcast %3 : vector<8x1xf32> to vector<8x256xf32>
    %5 = arith.addf %2, %4 : vector<8x256xf32>
    %c0_5 = arith.constant 0 : index
    %c0_6 = arith.constant 0 : index
    %6 = vector.load %arg4[%c0_5, %c0_6] : memref<8x256xf32, #tpu.memory_space<vmem>>, vector<8x256xf32>
    tpu.vector_store %arg4[%c0_5, %c0_6], %5 {strides = array<i32>} : memref<8x256xf32, #tpu.memory_space<vmem>>, vector<8x256xf32>,
    return
  }
  func.func @transform_0(%arg0: i32) -> (i32, i32) {
    %c0_i32 = arith.constant 0 : i32
    %c0_i32_0 = arith.constant 0 : i32
    return %c0_i32, %arg0 : i32, i32
  }
  func.func @transform_1(%arg0: i32) -> (i32, i32) {
    %c0_i32 = arith.constant 0 : i32
    %c0_i32_0 = arith.constant 0 : i32
    %c0_i32_1 = arith.constant 0 : i32
    return %c0_i32, %c0_i32_0 : i32, i32
  }
  func.func @transform_2(%arg0: i32) -> (i32, i32) {
    %c0_i32 = arith.constant 0 : i32
    %c0_i32_0 = arith.constant 0 : i32
    %c0_i32_1 = arith.constant 0 : i32
    return %c0_i32, %c0_i32_0 : i32, i32
  }
  func.func @transform_3(%arg0: i32) -> (i32, i32) {
    %c0_i32 = arith.constant 0 : i32
    %c0_i32_0 = arith.constant 0 : i32
    return %c0_i32, %arg0 : i32, i32
  }
}

</mosaic_0001>

<llo_original>
// kernel: hourglass_forward.92
$region0: #{hourglass_forward.92}
  #allocation0 [shape = 'u32[]', space=smem, size = 0x4, offset = 0x4, fixed_abs, tag = 'smem constant byte address 0x4 - core index']
  #allocation1 [shape = 'u32[72,128]{1,0:T(1,128)}', space=vmem, size = 0x9000, scoped, tag = 'internal scratch']
  %s0 = inlined_call_operand.vmem [shape: bf16[32,64], index: 0, kind: input, shape index: {}]
  %s1 = inlined_call_operand.hbm [shape: bf16[8,32], index: 1, kind: input, shape index: {}]
  %s2 = inlined_call_operand.vmem [shape: f32[8,1], index: 2, kind: input, shape index: {}]
  %s3 = inlined_call_operand.vmem [shape: f32[8,64], index: 3, kind: output, shape index: {}]
  %s4 = sld [smem:[#allocation0]]
  $region26: #{hourglass_forward.92} parent=0
    _
  %s6 = ssub.s32 1, %s4
  %s7 = scalar_select 0, %s6, %s4
  $region1: #{hourglass_forward.92} parent=0
    #allocation2 [shape = 'u8[2048]{0}', space=vmem, size = 0x800, scoped, tag = 'input window, operand 1, single buffered']
    #allocation3 [shape = 's32[1]{0}', space=sflag, size = 0x4, scoped, tag = 'scoped memory for hourglass_forward.92']
    %8 = vsyncpa [#allocation3], 0
    // Predicated region
    $region2: #{hourglass_forward.92} parent=1 // pred_check
      _
    $region3: #{hourglass_forward.92} parent=1 // pred_check_branch
      %10 = sbr.rel (0) target = $region5
    $region4: #{hourglass_forward.92} parent=1 // pred_region
      _
    $region5: #{hourglass_forward.92} parent=1 // pred_fallthru
      _
    // Predicated region
    $region6: #{hourglass_forward.92} parent=1 // pred_check
      _
    $region7: #{hourglass_forward.92} parent=1 // pred_check_branch
      %12 = sbr.rel (0) target = $region9
    $region8: #{hourglass_forward.92} parent=1 // pred_region
      %14 = vsyncadd [#allocation3], 0
      %s16 = sshll.u32 %s1, 4
      %s17 = int_to_ptr.hbm [resolvable:$true] %s16
      %s18 = sshll.u32 [#allocation2], 4
      %s19 = int_to_ptr.vmem [resolvable:$true] %s18
      %21 = dma.hbm_to_vmem [thread:$0]  %s17, 64, %s19, [#allocation3]
    $region9: #{hourglass_forward.92} parent=1 // pred_fallthru
      _
    // Predicated region
    $region10: #{hourglass_forward.92} parent=1 // pred_check
      _
    $region11: #{hourglass_forward.92} parent=1 // pred_check_branch
      %23 = sbr.rel (0) target = $region13
    $region12: #{hourglass_forward.92} parent=1 // pred_region
      _
    $region13: #{hourglass_forward.92} parent=1 // pred_fallthru
      _
    // Predicated region
    $region14: #{hourglass_forward.92} parent=1 // pred_check
      _
    $region15: #{hourglass_forward.92} parent=1 // pred_check_branch
      %25 = sbr.rel (0) target = $region17
    $region16: #{hourglass_forward.92} parent=1 // pred_region
      %27 = dma.done [#allocation3], 64
    $region17: #{hourglass_forward.92} parent=1 // pred_fallthru
      _
    %v29 = vld [vmem:[#allocation2] sm:$0xf]
    %v30 = vld [vmem:[%s0] sm:$0xf]
    %v31 = vld [vmem:[%s0 + $0x4] sm:$0xf]
    %v32 = vld [vmem:[%s0 + $0x8] sm:$0xf]
    %v33 = vld [vmem:[%s0 + $0xc] sm:$0xf]
    %v34 = vld [vmem:[%s2] sm:$0xff]
    %36 = vset.pattern.permute.xlu0 0
    %37 = vperm.xlu0 %36, %v34
    %v38 = vpop.permute.xlu0 %37
    %v44 = vunpack.c.l.b16 %v30
    %v45 = vunpack.c.l.b16 %v31
    %v46 = vunpack.c.l.b16 %v32
    %v47 = vunpack.c.l.b16 %v33
    %v48 = vpack.c.b16 %v45, %v44
    %v49 = vpack.c.b16 %v47, %v46
    %vm52 = vcmask 261120
    %v54 = vsel %vm52, %v29, 0
    %56 = vmatpush.bf16.msra.mxu0 0
    %57 = vmatpush.bf16.msra.mxu0 0
    %58 = vmatpush.bf16.msra.mxu0 0
    %59 = vmatpush.bf16.msra.mxu0 0
    %60 = vmatpush.bf16.msra.mxu0 0
    %61 = vmatpush.bf16.msra.mxu0 0
    %62 = vmatpush.bf16.msra.mxu0 %v49
    %63 = vmatpush.bf16.msra.mxu0 %v48
    %64 = vmatmul.bf16.gmra.mxu0 %v54
    %v65 = vpop.f32.mrf.mxu0
    %v66 = vadd.f32 %v38, %v65
    %v67 = vpop.f32.mrf.mxu0
    %68 = vdwg.mxu0
    %vm69 = vcmask 523264
    %70 = vst.msk [vmem:[%s3] sm:$0xff] %vm69, %v66
    // Predicated region
    $region18: #{hourglass_forward.92} parent=1 // pred_check
      _
    $region19: #{hourglass_forward.92} parent=1 // pred_check_branch
      %72 = sbr.rel (0) target = $region21
    $region20: #{hourglass_forward.92} parent=1 // pred_region
      _
    $region21: #{hourglass_forward.92} parent=1 // pred_fallthru
      _
    // Predicated region
    $region22: #{hourglass_forward.92} parent=1 // pred_check
      _
    $region23: #{hourglass_forward.92} parent=1 // pred_check_branch
      %74 = sbr.rel (0) target = $region25
    $region24: #{hourglass_forward.92} parent=1 // pred_region
      _
    $region25: #{hourglass_forward.92} parent=1 // pred_fallthru
      _
    %75 = vsyncpa [#allocation3], 1

// kernel: hourglass_forward.53
$region0: #{hourglass_forward.53}
  #allocation0 [shape = 'u32[]', space=smem, size = 0x4, offset = 0x4, fixed_abs, tag = 'smem constant byte address 0x4 - core index']
  #allocation1 [shape = 'u32[72,128]{1,0:T(1,128)}', space=vmem, size = 0x9000, scoped, tag = 'internal scratch']
  %s0 = inlined_call_operand.vmem [shape: bf16[64,64], index: 0, kind: input, shape index: {}]
  %s1 = inlined_call_operand.hbm [shape: bf16[32,64], index: 1, kind: input, shape index: {}]
  %s2 = inlined_call_operand.vmem [shape: f32[32,1], index: 2, kind: input, shape index: {}]
  %s3 = inlined_call_operand.vmem [shape: f32[32,64], index: 3, kind: output, shape index: {}]
  %s4 = sld [smem:[#allocation0]]
  $region26: #{hourglass_forward.53} parent=0
    _
  %s6 = ssub.s32 1, %s4
  %s7 = scalar_select 0, %s6, %s4
  $region1: #{hourglass_forward.53} parent=0
    #allocation2 [shape = 'u8[8192]{0}', space=vmem, size = 0x2000, scoped, tag = 'input window, operand 1, single buffered']
    #allocation3 [shape = 's32[1]{0}', space=sflag, size = 0x4, scoped, tag = 'scoped memory for hourglass_forward.53']
    %8 = vsyncpa [#allocation3], 0
    // Predicated region
    $region2: #{hourglass_forward.53} parent=1 // pred_check
      _
    $region3: #{hourglass_forward.53} parent=1 // pred_check_branch
      %10 = sbr.rel (0) target = $region5
    $region4: #{hourglass_forward.53} parent=1 // pred_region
      _
    $region5: #{hourglass_forward.53} parent=1 // pred_fallthru
      _
    // Predicated region
    $region6: #{hourglass_forward.53} parent=1 // pred_check
      _
    $region7: #{hourglass_forward.53} parent=1 // pred_check_branch
      %12 = sbr.rel (0) target = $region9
    $region8: #{hourglass_forward.53} parent=1 // pred_region
      %14 = vsyncadd [#allocation3], 0
      %s15 = sshll.u32 %s1, 4
      %s16 = int_to_ptr.hbm [resolvable:$true] %s15
      %s17 = sshll.u32 [#allocation2], 4
      %s18 = int_to_ptr.vmem [resolvable:$true] %s17
      %23 = dma.hbm_to_vmem [thread:$0]  %s16, 256, %s18, [#allocation3], 64, 64, 4
    $region9: #{hourglass_forward.53} parent=1 // pred_fallthru
      _
    // Predicated region
    $region10: #{hourglass_forward.53} parent=1 // pred_check
      _
    $region11: #{hourglass_forward.53} parent=1 // pred_check_branch
      %25 = sbr.rel (0) target = $region13
    $region12: #{hourglass_forward.53} parent=1 // pred_region
      _
    $region13: #{hourglass_forward.53} parent=1 // pred_fallthru
      _
    // Predicated region
    $region14: #{hourglass_forward.53} parent=1 // pred_check
      _
    $region15: #{hourglass_forward.53} parent=1 // pred_check_branch
      %27 = sbr.rel (0) target = $region17
    $region16: #{hourglass_forward.53} parent=1 // pred_region
      %29 = dma.done [#allocation3], 256
    $region17: #{hourglass_forward.53} parent=1 // pred_fallthru
      _
    %v31 = vld [vmem:[#allocation2] sm:$0xf]
    %v32 = vld [vmem:[#allocation2 + $0x4] sm:$0xf]
    %v33 = vld [vmem:[#allocation2 + $0x8] sm:$0xf]
    %v34 = vld [vmem:[#allocation2 + $0xc] sm:$0xf]
    %v35 = vld [vmem:[%s0] sm:$0xf]
    %v36 = vld [vmem:[%s0 + $0x4] sm:$0xf]
    %v37 = vld [vmem:[%s0 + $0x8] sm:$0xf]
    %v38 = vld [vmem:[%s0 + $0xc] sm:$0xf]
    %v39 = vld [vmem:[%s0 + $0x10] sm:$0xf]
    %v40 = vld [vmem:[%s0 + $0x14] sm:$0xf]
    %v41 = vld [vmem:[%s0 + $0x18] sm:$0xf]
    %v42 = vld [vmem:[%s0 + $0x1c] sm:$0xf]
    %v43 = vld [vmem:[%s2] sm:$0xff]
    %v44 = vld [vmem:[%s2 + $0x8] sm:$0xff]
    %v45 = vld [vmem:[%s2 + $0x10] sm:$0xff]
    %v46 = vld [vmem:[%s2 + $0x18] sm:$0xff]
    %48 = vset.pattern.permute.xlu0 0
    %49 = vperm.xlu0 %48, %v43
    %v50 = vpop.permute.xlu0 %49
    %53 = vset.pattern.permute.xlu0 0
    %54 = vperm.xlu0 %53, %v44
    %v55 = vpop.permute.xlu0 %54
    %58 = vset.pattern.permute.xlu0 0
    %59 = vperm.xlu0 %58, %v45
    %v60 = vpop.permute.xlu0 %59
    %63 = vset.pattern.permute.xlu0 0
    %64 = vperm.xlu0 %63, %v46
    %v65 = vpop.permute.xlu0 %64
    %v71 = vunpack.c.l.b16 %v31
    %v72 = vunpack.c.l.b16 %v32
    %v73 = vunpack.c.l.b16 %v33
    %v74 = vunpack.c.l.b16 %v34
    %v75 = vpack.c.b16 %v72, %v71
    %v76 = vpack.c.b16 %v74, %v73
    %v85 = vunpack.c.l.b16 %v35
    %v86 = vunpack.c.l.b16 %v36
    %v87 = vunpack.c.l.b16 %v37
    %v88 = vunpack.c.l.b16 %v38
    %v89 = vunpack.c.l.b16 %v39
    %v90 = vunpack.c.l.b16 %v40
    %v91 = vunpack.c.l.b16 %v41
    %v92 = vunpack.c.l.b16 %v42
    %v93 = vpack.c.b16 %v86, %v85
    %v94 = vpack.c.b16 %v88, %v87
    %v95 = vpack.c.b16 %v90, %v89
    %v96 = vpack.c.b16 %v92, %v91
    %vm101 = vcmask 523264
    %v103 = vsel %vm101, %v75, 0
    %v106 = vsel %vm101, %v76, 0
    %108 = vmatpush.bf16.msra.mxu0 0
    %109 = vmatpush.bf16.msra.mxu0 0
    %110 = vmatpush.bf16.msra.mxu0 0
    %111 = vmatpush.bf16.msra.mxu0 0
    %112 = vmatpush.bf16.msra.mxu0 %v96
    %113 = vmatpush.bf16.msra.mxu0 %v95
    %114 = vmatpush.bf16.msra.mxu0 %v94
    %115 = vmatpush.bf16.msra.mxu0 %v93
    %116 = vmatmul.bf16.gmra.mxu0 %v103
    %v117 = vpop.f32.mrf.mxu0
    %v118 = vadd.f32 %v50, %v117
    %v119 = vpop.f32.mrf.mxu0
    %v120 = vadd.f32 %v55, %v119
    %121 = vmatmul.bf16.gmra.mxu0 %v106
    %v122 = vpop.f32.mrf.mxu0
    %v123 = vadd.f32 %v60, %v122
    %v124 = vpop.f32.mrf.mxu0
    %v125 = vadd.f32 %v65, %v124
    %126 = vdwg.mxu0
    %vm127 = vcmp.ge.f32.partialorder %v118, 0.0
    %vm128 = vcmp.ge.f32.partialorder %v120, 0.0
    %vm129 = vcmp.ge.f32.partialorder %v123, 0.0
    %vm130 = vcmp.ge.f32.partialorder %v125, 0.0
    %v131 = vmul.f32 %v118, 0.01
    %v132 = vmul.f32 %v120, 0.01
    %v133 = vmul.f32 %v123, 0.01
    %v134 = vmul.f32 %v125, 0.01
    %v135 = vsel %vm127, %v118, %v131
    %v136 = vsel %vm128, %v120, %v132
    %v137 = vsel %vm129, %v123, %v133
    %v138 = vsel %vm130, %v125, %v134
    %139 = vst.msk [vmem:[%s3] sm:$0xff] %vm101, %v135
    %140 = vst.msk [vmem:[%s3 + $0x8] sm:$0xff] %vm101, %v136
    %141 = vst.msk [vmem:[%s3 + $0x10] sm:$0xff] %vm101, %v137
    %142 = vst.msk [vmem:[%s3 + $0x18] sm:$0xff] %vm101, %v138
    // Predicated region
    $region18: #{hourglass_forward.53} parent=1 // pred_check
      _
    $region19: #{hourglass_forward.53} parent=1 // pred_check_branch
      %144 = sbr.rel (0) target = $region21
    $region20: #{hourglass_forward.53} parent=1 // pred_region
      _
    $region21: #{hourglass_forward.53} parent=1 // pred_fallthru
      _
    // Predicated region
    $region22: #{hourglass_forward.53} parent=1 // pred_check
      _
    $region23: #{hourglass_forward.53} parent=1 // pred_check_branch
      %146 = sbr.rel (0) target = $region25
    $region24: #{hourglass_forward.53} parent=1 // pred_region
      _
    $region25: #{hourglass_forward.53} parent=1 // pred_fallthru
      _
    %147 = vsyncpa [#allocation3], 1

// kernel: hourglass_forward.59
$region0: #{hourglass_forward.59}
  #allocation0 [shape = 'u32[]', space=smem, size = 0x4, offset = 0x4, fixed_abs, tag = 'smem constant byte address 0x4 - core index']
  #allocation1 [shape = 'u32[72,128]{1,0:T(1,128)}', space=vmem, size = 0x9000, scoped, tag = 'internal scratch']
  %s0 = inlined_call_operand.vmem [shape: bf16[96,16], index: 0, kind: input, shape index: {}]
  %s1 = inlined_call_operand.hbm [shape: bf16[16,96], index: 1, kind: input, shape index: {}]
  %s2 = inlined_call_operand.vmem [shape: f32[16,1], index: 2, kind: input, shape index: {}]
  %s3 = inlined_call_operand.vmem [shape: f32[16,16], index: 3, kind: output, shape index: {}]
  %s4 = sld [smem:[#allocation0]]
  $region26: #{hourglass_forward.59} parent=0
    _
  %s6 = ssub.s32 1, %s4
  %s7 = scalar_select 0, %s6, %s4
  $region1: #{hourglass_forward.59} parent=0
    #allocation2 [shape = 'u8[4096]{0}', space=vmem, size = 0x1000, scoped, tag = 'input window, operand 1, single buffered']
    #allocation3 [shape = 's32[1]{0}', space=sflag, size = 0x4, scoped, tag = 'scoped memory for hourglass_forward.59']
    %8 = vsyncpa [#allocation3], 0
    // Predicated region
    $region2: #{hourglass_forward.59} parent=1 // pred_check
      _
    $region3: #{hourglass_forward.59} parent=1 // pred_check_branch
      %10 = sbr.rel (0) target = $region5
    $region4: #{hourglass_forward.59} parent=1 // pred_region
      _
    $region5: #{hourglass_forward.59} parent=1 // pred_fallthru
      _
    // Predicated region
    $region6: #{hourglass_forward.59} parent=1 // pred_check
      _
    $region7: #{hourglass_forward.59} parent=1 // pred_check_branch
      %12 = sbr.rel (0) target = $region9
    $region8: #{hourglass_forward.59} parent=1 // pred_region
      %14 = vsyncadd [#allocation3], 0
      %s15 = sshll.u32 %s1, 4
      %s16 = int_to_ptr.hbm [resolvable:$true] %s15
      %s17 = sshll.u32 [#allocation2], 4
      %s18 = int_to_ptr.vmem [resolvable:$true] %s17
      %23 = dma.hbm_to_vmem [thread:$0]  %s16, 128, %s18, [#allocation3], 64, 64, 4
    $region9: #{hourglass_forward.59} parent=1 // pred_fallthru
      _
    // Predicated region
    $region10: #{hourglass_forward.59} parent=1 // pred_check
      _
    $region11: #{hourglass_forward.59} parent=1 // pred_check_branch
      %25 = sbr.rel (0) target = $region13
    $region12: #{hourglass_forward.59} parent=1 // pred_region
      _
    $region13: #{hourglass_forward.59} parent=1 // pred_fallthru
      _
    // Predicated region
    $region14: #{hourglass_forward.59} parent=1 // pred_check
      _
    $region15: #{hourglass_forward.59} parent=1 // pred_check_branch
      %27 = sbr.rel (0) target = $region17
    $region16: #{hourglass_forward.59} parent=1 // pred_region
      %29 = dma.done [#allocation3], 128
    $region17: #{hourglass_forward.59} parent=1 // pred_fallthru
      _
    %v31 = vld [vmem:[#allocation2] sm:$0xf]
    %v32 = vld [vmem:[#allocation2 + $0x4] sm:$0xf]
    %v33 = vld [vmem:[%s0] sm:$0xf]
    %v34 = vld [vmem:[%s0 + $0x4] sm:$0xf]
    %v35 = vld [vmem:[%s0 + $0x8] sm:$0xf]
    %v36 = vld [vmem:[%s0 + $0xc] sm:$0xf]
    %v37 = vld [vmem:[%s0 + $0x10] sm:$0xf]
    %v38 = vld [vmem:[%s0 + $0x14] sm:$0xf]
    %v39 = vld [vmem:[%s0 + $0x18] sm:$0xf]
    %v40 = vld [vmem:[%s0 + $0x1c] sm:$0xf]
    %v41 = vld [vmem:[%s0 + $0x20] sm:$0xf]
    %v42 = vld [vmem:[%s0 + $0x24] sm:$0xf]
    %v43 = vld [vmem:[%s0 + $0x28] sm:$0xf]
    %v44 = vld [vmem:[%s0 + $0x2c] sm:$0xf]
    %v45 = vld [vmem:[%s2] sm:$0xff]
    %v46 = vld [vmem:[%s2 + $0x8] sm:$0xff]
    %48 = vset.pattern.permute.xlu0 0
    %49 = vperm.xlu0 %48, %v45
    %v50 = vpop.permute.xlu0 %49
    %53 = vset.pattern.permute.xlu0 0
    %54 = vperm.xlu0 %53, %v46
    %v55 = vpop.permute.xlu0 %54
    %v59 = vunpack.c.l.b16 %v31
    %v60 = vunpack.c.l.b16 %v32
    %v61 = vpack.c.b16 %v60, %v59
    %v74 = vunpack.c.l.b16 %v33
    %v75 = vunpack.c.l.b16 %v34
    %v76 = vunpack.c.l.b16 %v35
    %v77 = vunpack.c.l.b16 %v36
    %v78 = vunpack.c.l.b16 %v37
    %v79 = vunpack.c.l.b16 %v38
    %v80 = vunpack.c.l.b16 %v39
    %v81 = vunpack.c.l.b16 %v40
    %v82 = vunpack.c.l.b16 %v41
    %v83 = vunpack.c.l.b16 %v42
    %v84 = vunpack.c.l.b16 %v43
    %v85 = vunpack.c.l.b16 %v44
    %v86 = vpack.c.b16 %v75, %v74
    %v87 = vpack.c.b16 %v77, %v76
    %v88 = vpack.c.b16 %v79, %v78
    %v89 = vpack.c.b16 %v81, %v80
    %v90 = vpack.c.b16 %v83, %v82
    %v91 = vpack.c.b16 %v85, %v84
    %vm98 = vcmask 785408
    %v100 = vsel %vm98, %v61, 0
    %102 = vmatpush.bf16.msra.mxu0 0
    %103 = vmatpush.bf16.msra.mxu0 0
    %104 = vmatpush.bf16.msra.mxu0 %v91
    %105 = vmatpush.bf16.msra.mxu0 %v90
    %106 = vmatpush.bf16.msra.mxu0 %v89
    %107 = vmatpush.bf16.msra.mxu0 %v88
    %108 = vmatpush.bf16.msra.mxu0 %v87
    %109 = vmatpush.bf16.msra.mxu0 %v86
    %110 = vmatmul.bf16.gmra.mxu0 %v100
    %v111 = vpop.f32.mrf.mxu0
    %v112 = vadd.f32 %v50, %v111
    %v113 = vpop.f32.mrf.mxu0
    %v114 = vadd.f32 %v55, %v113
    %115 = vdwg.mxu0
    %vm116 = vcmask 130048
    %117 = vst.msk [vmem:[%s3] sm:$0xff] %vm116, %v112
    %118 = vst.msk [vmem:[%s3 + $0x8] sm:$0xff] %vm116, %v114
    // Predicated region
    $region18: #{hourglass_forward.59} parent=1 // pred_check
      _
    $region19: #{hourglass_forward.59} parent=1 // pred_check_branch
      %120 = sbr.rel (0) target = $region21
    $region20: #{hourglass_forward.59} parent=1 // pred_region
      _
    $region21: #{hourglass_forward.59} parent=1 // pred_fallthru
      _
    // Predicated region
    $region22: #{hourglass_forward.59} parent=1 // pred_check
      _
    $region23: #{hourglass_forward.59} parent=1 // pred_check_branch
      %122 = sbr.rel (0) target = $region25
    $region24: #{hourglass_forward.59} parent=1 // pred_region
      _
    $region25: #{hourglass_forward.59} parent=1 // pred_fallthru
      _
    %123 = vsyncpa [#allocation3], 1

// kernel: hourglass_forward.63
$region0: #{hourglass_forward.63}
  #allocation0 [shape = 'u32[]', space=smem, size = 0x4, offset = 0x4, fixed_abs, tag = 'smem constant byte address 0x4 - core index']
  #allocation1 [shape = 'u32[72,128]{1,0:T(1,128)}', space=vmem, size = 0x9000, scoped, tag = 'internal scratch']
  %s0 = inlined_call_operand.vmem [shape: bf16[160,4], index: 0, kind: input, shape index: {}]
  %s1 = inlined_call_operand.hbm [shape: bf16[80,160], index: 1, kind: input, shape index: {}]
  %s2 = inlined_call_operand.vmem [shape: f32[80,1], index: 2, kind: input, shape index: {}]
  %s3 = inlined_call_operand.vmem [shape: f32[80,4], index: 3, kind: output, shape index: {}]
  %s4 = sld [smem:[#allocation0]]
  $region26: #{hourglass_forward.63} parent=0
    _
  %s6 = ssub.s32 1, %s4
  %s7 = scalar_select 0, %s6, %s4
  $region1: #{hourglass_forward.63} parent=0
    #allocation2 [shape = 'u8[40960]{0}', space=vmem, size = 0xa000, scoped, tag = 'input window, operand 1, single buffered']
    #allocation3 [shape = 's32[1]{0}', space=sflag, size = 0x4, scoped, tag = 'scoped memory for hourglass_forward.63']
    %8 = vsyncpa [#allocation3], 0
    // Predicated region
    $region2: #{hourglass_forward.63} parent=1 // pred_check
      _
    $region3: #{hourglass_forward.63} parent=1 // pred_check_branch
      %10 = sbr.rel (0) target = $region5
    $region4: #{hourglass_forward.63} parent=1 // pred_region
      _
    $region5: #{hourglass_forward.63} parent=1 // pred_fallthru
      _
    // Predicated region
    $region6: #{hourglass_forward.63} parent=1 // pred_check
      _
    $region7: #{hourglass_forward.63} parent=1 // pred_check_branch
      %12 = sbr.rel (0) target = $region9
    $region8: #{hourglass_forward.63} parent=1 // pred_region
      %14 = vsyncadd [#allocation3], 0
      %s15 = sshll.u32 %s1, 4
      %s16 = int_to_ptr.hbm [resolvable:$true] %s15
      %s17 = sshll.u32 [#allocation2], 4
      %s18 = int_to_ptr.vmem [resolvable:$true] %s17
      %23 = dma.hbm_to_vmem [thread:$0]  %s16, 1280, %s18, [#allocation3], 128, 128, 8
    $region9: #{hourglass_forward.63} parent=1 // pred_fallthru
      _
    // Predicated region
    $region10: #{hourglass_forward.63} parent=1 // pred_check
      _
    $region11: #{hourglass_forward.63} parent=1 // pred_check_branch
      %25 = sbr.rel (0) target = $region13
    $region12: #{hourglass_forward.63} parent=1 // pred_region
      _
    $region13: #{hourglass_forward.63} parent=1 // pred_fallthru
      _
    // Predicated region
    $region14: #{hourglass_forward.63} parent=1 // pred_check
      _
    $region15: #{hourglass_forward.63} parent=1 // pred_check_branch
      %27 = sbr.rel (0) target = $region17
    $region16: #{hourglass_forward.63} parent=1 // pred_region
      %29 = dma.done [#allocation3], 1280
    $region17: #{hourglass_forward.63} parent=1 // pred_fallthru
      _
    %v31 = vld [vmem:[#allocation2] sm:$0xff]
    %v32 = vld [vmem:[#allocation2 + $0x8] sm:$0xff]
    %v33 = vld [vmem:[#allocation2 + $0x10] sm:$0xff]
    %v34 = vld [vmem:[#allocation2 + $0x18] sm:$0xff]
    %v35 = vld [vmem:[#allocation2 + $0x20] sm:$0xff]
    %v36 = vld [vmem:[#allocation2 + $0x28] sm:$0xff]
    %v37 = vld [vmem:[#allocation2 + $0x30] sm:$0xff]
    %v38 = vld [vmem:[#allocation2 + $0x38] sm:$0xff]
    %v39 = vld [vmem:[#allocation2 + $0x40] sm:$0xff]
    %v40 = vld [vmem:[#allocation2 + $0x48] sm:$0xff]
    %v41 = vld [vmem:[%s0] sm:$0xf]
    %v42 = vld [vmem:[%s0 + $0x4] sm:$0xf]
    %v43 = vld [vmem:[%s0 + $0x8] sm:$0xf]
    %v44 = vld [vmem:[%s0 + $0xc] sm:$0xf]
    %v45 = vld [vmem:[%s0 + $0x10] sm:$0xf]
    %v46 = vld [vmem:[%s0 + $0x14] sm:$0xf]
    %v47 = vld [vmem:[%s0 + $0x18] sm:$0xf]
    %v48 = vld [vmem:[%s0 + $0x1c] sm:$0xf]
    %v49 = vld [vmem:[%s0 + $0x20] sm:$0xf]
    %v50 = vld [vmem:[%s0 + $0x24] sm:$0xf]
    %v51 = vld [vmem:[%s0 + $0x28] sm:$0xf]
    %v52 = vld [vmem:[%s0 + $0x2c] sm:$0xf]
    %v53 = vld [vmem:[%s0 + $0x30] sm:$0xf]
    %v54 = vld [vmem:[%s0 + $0x34] sm:$0xf]
    %v55 = vld [vmem:[%s0 + $0x38] sm:$0xf]
    %v56 = vld [vmem:[%s0 + $0x3c] sm:$0xf]
    %v57 = vld [vmem:[%s0 + $0x40] sm:$0xf]
    %v58 = vld [vmem:[%s0 + $0x44] sm:$0xf]
    %v59 = vld [vmem:[%s0 + $0x48] sm:$0xf]
    %v60 = vld [vmem:[%s0 + $0x4c] sm:$0xf]
    %v61 = vld [vmem:[%s2] sm:$0xff]
    %v62 = vld [vmem:[%s2 + $0x8] sm:$0xff]
    %v63 = vld [vmem:[%s2 + $0x10] sm:$0xff]
    %v64 = vld [vmem:[%s2 + $0x18] sm:$0xff]
    %v65 = vld [vmem:[%s2 + $0x20] sm:$0xff]
    %v66 = vld [vmem:[%s2 + $0x28] sm:$0xff]
    %v67 = vld [vmem:[%s2 + $0x30] sm:$0xff]
    %v68 = vld [vmem:[%s2 + $0x38] sm:$0xff]
    %v69 = vld [vmem:[%s2 + $0x40] sm:$0xff]
    %v70 = vld [vmem:[%s2 + $0x48] sm:$0xff]
    %72 = vset.pattern.permute.xlu0 0
    %73 = vperm.xlu0 %72, %v61
    %v74 = vpop.permute.xlu0 %73
    %77 = vset.pattern.permute.xlu0 0
    %78 = vperm.xlu0 %77, %v62
    %v79 = vpop.permute.xlu0 %78
    %82 = vset.pattern.permute.xlu0 0
    %83 = vperm.xlu0 %82, %v63
    %v84 = vpop.permute.xlu0 %83
    %87 = vset.pattern.permute.xlu0 0
    %88 = vperm.xlu0 %87, %v64
    %v89 = vpop.permute.xlu0 %88
    %92 = vset.pattern.permute.xlu0 0
    %93 = vperm.xlu0 %92, %v65
    %v94 = vpop.permute.xlu0 %93
    %97 = vset.pattern.permute.xlu0 0
    %98 = vperm.xlu0 %97, %v66
    %v99 = vpop.permute.xlu0 %98
    %102 = vset.pattern.permute.xlu0 0
    %103 = vperm.xlu0 %102, %v67
    %v104 = vpop.permute.xlu0 %103
    %107 = vset.pattern.permute.xlu0 0
    %108 = vperm.xlu0 %107, %v68
    %v109 = vpop.permute.xlu0 %108
    %112 = vset.pattern.permute.xlu0 0
    %113 = vperm.xlu0 %112, %v69
    %v114 = vpop.permute.xlu0 %113
    %117 = vset.pattern.permute.xlu0 0
    %118 = vperm.xlu0 %117, %v70
    %v119 = vpop.permute.xlu0 %118
    %v131 = vunpack.c.l.b16 %v31
    %v132 = vunpack.c.h.b16 %v31
    %v133 = vunpack.c.l.b16 %v32
    %v134 = vunpack.c.h.b16 %v32
    %v135 = vunpack.c.l.b16 %v33
    %v136 = vunpack.c.h.b16 %v33
    %v137 = vunpack.c.l.b16 %v34
    %v138 = vunpack.c.h.b16 %v34
    %v139 = vunpack.c.l.b16 %v35
    %v140 = vunpack.c.h.b16 %v35
    %v141 = vunpack.c.l.b16 %v36
    %v142 = vunpack.c.h.b16 %v36
    %v143 = vunpack.c.l.b16 %v37
    %v144 = vunpack.c.h.b16 %v37
    %v145 = vunpack.c.l.b16 %v38
    %v146 = vunpack.c.h.b16 %v38
    %v147 = vunpack.c.l.b16 %v39
    %v148 = vunpack.c.h.b16 %v39
    %v149 = vunpack.c.l.b16 %v40
    %v150 = vunpack.c.h.b16 %v40
    %v151 = vpack.c.b16 %v133, %v131
    %v152 = vpack.c.b16 %v134, %v132
    %v153 = vpack.c.b16 %v137, %v135
    %v154 = vpack.c.b16 %v138, %v136
    %v155 = vpack.c.b16 %v141, %v139
    %v156 = vpack.c.b16 %v142, %v140
    %v157 = vpack.c.b16 %v145, %v143
    %v158 = vpack.c.b16 %v146, %v144
    %v159 = vpack.c.b16 %v149, %v147
    %v160 = vpack.c.b16 %v150, %v148
    %v186 = vunpack.c.l.b16 %v41
    %v187 = vunpack.c.l.b16 %v42
    %v188 = vunpack.c.l.b16 %v43
    %v189 = vunpack.c.l.b16 %v44
    %v190 = vunpack.c.l.b16 %v45
    %v191 = vunpack.c.l.b16 %v46
    %v192 = vunpack.c.l.b16 %v47
    %v193 = vunpack.c.l.b16 %v48
    %v194 = vunpack.c.l.b16 %v49
    %v195 = vunpack.c.l.b16 %v50
    %v196 = vunpack.c.l.b16 %v51
    %v197 = vunpack.c.l.b16 %v52
    %v198 = vunpack.c.l.b16 %v53
    %v199 = vunpack.c.l.b16 %v54
    %v200 = vunpack.c.l.b16 %v55
    %v201 = vunpack.c.l.b16 %v56
    %v202 = vunpack.c.l.b16 %v57
    %v203 = vunpack.c.l.b16 %v58
    %v204 = vunpack.c.l.b16 %v59
    %v205 = vunpack.c.l.b16 %v60
    %v206 = vpack.c.b16 %v187, %v186
    %v207 = vpack.c.b16 %v189, %v188
    %v208 = vpack.c.b16 %v191, %v190
    %v209 = vpack.c.b16 %v193, %v192
    %v210 = vpack.c.b16 %v195, %v194
    %v211 = vpack.c.b16 %v197, %v196
    %v212 = vpack.c.b16 %v199, %v198
    %v213 = vpack.c.b16 %v201, %v200
    %v214 = vpack.c.b16 %v203, %v202
    %v215 = vpack.c.b16 %v205, %v204
    %vm226 = vcmask 261120
    %v228 = vsel %vm226, %v152, 0
    %v231 = vsel %vm226, %v154, 0
    %v234 = vsel %vm226, %v156, 0
    %v237 = vsel %vm226, %v158, 0
    %v240 = vsel %vm226, %v160, 0
    %242 = vmatpush.bf16.msra.mxu0 %v213
    %243 = vmatpush.bf16.msra.mxu0 %v212
    %244 = vmatpush.bf16.msra.mxu0 %v211
    %245 = vmatpush.bf16.msra.mxu0 %v210
    %246 = vmatpush.bf16.msra.mxu0 %v209
    %247 = vmatpush.bf16.msra.mxu0 %v208
    %248 = vmatpush.bf16.msra.mxu0 %v207
    %249 = vmatpush.bf16.msra.mxu0 %v206
    %250 = vmatmul.bf16.gmra.mxu0 %v151
    %v251 = vpop.f32.mrf.mxu0
    %v252 = vadd.f32 %v74, %v251
    %v253 = vpop.f32.mrf.mxu0
    %v254 = vadd.f32 %v79, %v253
    %255 = vmatmul.bf16.gmra.mxu0 %v153
    %v256 = vpop.f32.mrf.mxu0
    %v257 = vadd.f32 %v84, %v256
    %v258 = vpop.f32.mrf.mxu0
    %v259 = vadd.f32 %v89, %v258
    %260 = vmatmul.bf16.gmra.mxu0 %v155
    %v261 = vpop.f32.mrf.mxu0
    %v262 = vadd.f32 %v94, %v261
    %v263 = vpop.f32.mrf.mxu0
    %v264 = vadd.f32 %v99, %v263
    %265 = vmatmul.bf16.gmra.mxu0 %v157
    %v266 = vpop.f32.mrf.mxu0
    %v267 = vadd.f32 %v104, %v266
    %v268 = vpop.f32.mrf.mxu0
    %v269 = vadd.f32 %v109, %v268
    %270 = vmatmul.bf16.gmra.mxu0 %v159
    %v271 = vpop.f32.mrf.mxu0
    %v272 = vadd.f32 %v114, %v271
    %v273 = vpop.f32.mrf.mxu0
    %v274 = vadd.f32 %v119, %v273
    %275 = vdwg.mxu0
    %276 = vmatpush.bf16.msra.mxu0 0
    %277 = vmatpush.bf16.msra.mxu0 0
    %278 = vmatpush.bf16.msra.mxu0 0
    %279 = vmatpush.bf16.msra.mxu0 0
    %280 = vmatpush.bf16.msra.mxu0 0
    %281 = vmatpush.bf16.msra.mxu0 0
    %282 = vmatpush.bf16.msra.mxu0 %v215
    %283 = vmatpush.bf16.msra.mxu0 %v214
    %284 = vmatmul.bf16.gmra.mxu0 %v228
    %v285 = vpop.f32.mrf.mxu0
    %v286 = vadd.f32 %v252, %v285
    %v287 = vpop.f32.mrf.mxu0
    %v288 = vadd.f32 %v254, %v287
    %289 = vmatmul.bf16.gmra.mxu0 %v231
    %v290 = vpop.f32.mrf.mxu0
    %v291 = vadd.f32 %v257, %v290
    %v292 = vpop.f32.mrf.mxu0
    %v293 = vadd.f32 %v259, %v292
    %294 = vmatmul.bf16.gmra.mxu0 %v234
    %v295 = vpop.f32.mrf.mxu0
    %v296 = vadd.f32 %v262, %v295
    %v297 = vpop.f32.mrf.mxu0
    %v298 = vadd.f32 %v264, %v297
    %299 = vmatmul.bf16.gmra.mxu0 %v237
    %v300 = vpop.f32.mrf.mxu0
    %v301 = vadd.f32 %v267, %v300
    %v302 = vpop.f32.mrf.mxu0
    %v303 = vadd.f32 %v269, %v302
    %304 = vmatmul.bf16.gmra.mxu0 %v240
    %v305 = vpop.f32.mrf.mxu0
    %v306 = vadd.f32 %v272, %v305
    %v307 = vpop.f32.mrf.mxu0
    %v308 = vadd.f32 %v274, %v307
    %309 = vdwg.mxu0
    %vm310 = vcmp.ge.f32.partialorder %v286, 0.0
    %vm311 = vcmp.ge.f32.partialorder %v288, 0.0
    %vm312 = vcmp.ge.f32.partialorder %v291, 0.0
    %vm313 = vcmp.ge.f32.partialorder %v293, 0.0
    %vm314 = vcmp.ge.f32.partialorder %v296, 0.0
    %vm315 = vcmp.ge.f32.partialorder %v298, 0.0
    %vm316 = vcmp.ge.f32.partialorder %v301, 0.0
    %vm317 = vcmp.ge.f32.partialorder %v303, 0.0
    %vm318 = vcmp.ge.f32.partialorder %v306, 0.0
    %vm319 = vcmp.ge.f32.partialorder %v308, 0.0
    %v320 = vmul.f32 %v286, 0.01
    %v321 = vmul.f32 %v288, 0.01
    %v322 = vmul.f32 %v291, 0.01
    %v323 = vmul.f32 %v293, 0.01
    %v324 = vmul.f32 %v296, 0.01
    %v325 = vmul.f32 %v298, 0.01
    %v326 = vmul.f32 %v301, 0.01
    %v327 = vmul.f32 %v303, 0.01
    %v328 = vmul.f32 %v306, 0.01
    %v329 = vmul.f32 %v308, 0.01
    %v330 = vsel %vm310, %v286, %v320
    %v331 = vsel %vm311, %v288, %v321
    %v332 = vsel %vm312, %v291, %v322
    %v333 = vsel %vm313, %v293, %v323
    %v334 = vsel %vm314, %v296, %v324
    %v335 = vsel %vm315, %v298, %v325
    %v336 = vsel %vm316, %v301, %v326
    %v337 = vsel %vm317, %v303, %v327
    %v338 = vsel %vm318, %v306, %v328
    %v339 = vsel %vm319, %v308, %v329
    %vm340 = vcmask 31744
    %341 = vst.msk [vmem:[%s3] sm:$0xff] %vm340, %v330
    %342 = vst.msk [vmem:[%s3 + $0x8] sm:$0xff] %vm340, %v331
    %343 = vst.msk [vmem:[%s3 + $0x10] sm:$0xff] %vm340, %v332
    %344 = vst.msk [vmem:[%s3 + $0x18] sm:$0xff] %vm340, %v333
    %345 = vst.msk [vmem:[%s3 + $0x20] sm:$0xff] %vm340, %v334
    %346 = vst.msk [vmem:[%s3 + $0x28] sm:$0xff] %vm340, %v335
    %347 = vst.msk [vmem:[%s3 + $0x30] sm:$0xff] %vm340, %v336
    %348 = vst.msk [vmem:[%s3 + $0x38] sm:$0xff] %vm340, %v337
    %349 = vst.msk [vmem:[%s3 + $0x40] sm:$0xff] %vm340, %v338
    %350 = vst.msk [vmem:[%s3 + $0x48] sm:$0xff] %vm340, %v339
    // Predicated region
    $region18: #{hourglass_forward.63} parent=1 // pred_check
      _
    $region19: #{hourglass_forward.63} parent=1 // pred_check_branch
      %352 = sbr.rel (0) target = $region21
    $region20: #{hourglass_forward.63} parent=1 // pred_region
      _
    $region21: #{hourglass_forward.63} parent=1 // pred_fallthru
      _
    // Predicated region
    $region22: #{hourglass_forward.63} parent=1 // pred_check
      _
    $region23: #{hourglass_forward.63} parent=1 // pred_check_branch
      %354 = sbr.rel (0) target = $region25
    $region24: #{hourglass_forward.63} parent=1 // pred_region
      _
    $region25: #{hourglass_forward.63} parent=1 // pred_fallthru
      _
    %355 = vsyncpa [#allocation3], 1

// kernel: hourglass_forward.64
$region0: #{hourglass_forward.64}
  #allocation0 [shape = 'u32[]', space=smem, size = 0x4, offset = 0x4, fixed_abs, tag = 'smem constant byte address 0x4 - core index']
  #allocation1 [shape = 'u32[72,128]{1,0:T(1,128)}', space=vmem, size = 0x9000, scoped, tag = 'internal scratch']
  %s0 = inlined_call_operand.vmem [shape: bf16[80,4], index: 0, kind: input, shape index: {}]
  %s1 = inlined_call_operand.hbm [shape: bf16[24,80], index: 1, kind: input, shape index: {}]
  %s2 = inlined_call_operand.vmem [shape: f32[24,1], index: 2, kind: input, shape index: {}]
  %s3 = inlined_call_operand.vmem [shape: f32[24,4], index: 3, kind: output, shape index: {}]
  %s4 = sld [smem:[#allocation0]]
  $region26: #{hourglass_forward.64} parent=0
    _
  %s6 = ssub.s32 1, %s4
  %s7 = scalar_select 0, %s6, %s4
  $region1: #{hourglass_forward.64} parent=0
    #allocation2 [shape = 'u8[6144]{0}', space=vmem, size = 0x1800, scoped, tag = 'input window, operand 1, single buffered']
    #allocation3 [shape = 's32[1]{0}', space=sflag, size = 0x4, scoped, tag = 'scoped memory for hourglass_forward.64']
    %8 = vsyncpa [#allocation3], 0
    // Predicated region
    $region2: #{hourglass_forward.64} parent=1 // pred_check
      _
    $region3: #{hourglass_forward.64} parent=1 // pred_check_branch
      %10 = sbr.rel (0) target = $region5
    $region4: #{hourglass_forward.64} parent=1 // pred_region
      _
    $region5: #{hourglass_forward.64} parent=1 // pred_fallthru
      _
    // Predicated region
    $region6: #{hourglass_forward.64} parent=1 // pred_check
      _
    $region7: #{hourglass_forward.64} parent=1 // pred_check_branch
      %12 = sbr.rel (0) target = $region9
    $region8: #{hourglass_forward.64} parent=1 // pred_region
      %14 = vsyncadd [#allocation3], 0
      %s15 = sshll.u32 %s1, 4
      %s16 = int_to_ptr.hbm [resolvable:$true] %s15
      %s17 = sshll.u32 [#allocation2], 4
      %s18 = int_to_ptr.vmem [resolvable:$true] %s17
      %23 = dma.hbm_to_vmem [thread:$0]  %s16, 192, %s18, [#allocation3], 64, 64, 4
    $region9: #{hourglass_forward.64} parent=1 // pred_fallthru
      _
    // Predicated region
    $region10: #{hourglass_forward.64} parent=1 // pred_check
      _
    $region11: #{hourglass_forward.64} parent=1 // pred_check_branch
      %25 = sbr.rel (0) target = $region13
    $region12: #{hourglass_forward.64} parent=1 // pred_region
      _
    $region13: #{hourglass_forward.64} parent=1 // pred_fallthru
      _
    // Predicated region
    $region14: #{hourglass_forward.64} parent=1 // pred_check
      _
    $region15: #{hourglass_forward.64} parent=1 // pred_check_branch
      %27 = sbr.rel (0) target = $region17
    $region16: #{hourglass_forward.64} parent=1 // pred_region
      %29 = dma.done [#allocation3], 192
    $region17: #{hourglass_forward.64} parent=1 // pred_fallthru
      _
    %v31 = vld [vmem:[#allocation2] sm:$0xf]
    %v32 = vld [vmem:[#allocation2 + $0x4] sm:$0xf]
    %v33 = vld [vmem:[#allocation2 + $0x8] sm:$0xf]
    %v34 = vld [vmem:[%s0] sm:$0xf]
    %v35 = vld [vmem:[%s0 + $0x4] sm:$0xf]
    %v36 = vld [vmem:[%s0 + $0x8] sm:$0xf]
    %v37 = vld [vmem:[%s0 + $0xc] sm:$0xf]
    %v38 = vld [vmem:[%s0 + $0x10] sm:$0xf]
    %v39 = vld [vmem:[%s0 + $0x14] sm:$0xf]
    %v40 = vld [vmem:[%s0 + $0x18] sm:$0xf]
    %v41 = vld [vmem:[%s0 + $0x1c] sm:$0xf]
    %v42 = vld [vmem:[%s0 + $0x20] sm:$0xf]
    %v43 = vld [vmem:[%s0 + $0x24] sm:$0xf]
    %v44 = vld [vmem:[%s2] sm:$0xff]
    %v45 = vld [vmem:[%s2 + $0x8] sm:$0xff]
    %v46 = vld [vmem:[%s2 + $0x10] sm:$0xff]
    %48 = vset.pattern.permute.xlu0 0
    %49 = vperm.xlu0 %48, %v44
    %v50 = vpop.permute.xlu0 %49
    %53 = vset.pattern.permute.xlu0 0
    %54 = vperm.xlu0 %53, %v45
    %v55 = vpop.permute.xlu0 %54
    %58 = vset.pattern.permute.xlu0 0
    %59 = vperm.xlu0 %58, %v46
    %v60 = vpop.permute.xlu0 %59
    %v65 = vunpack.c.l.b16 %v31
    %v66 = vunpack.c.l.b16 %v32
    %v67 = vunpack.c.l.b16 %v33
    %v68 = vpack.c.b16 %v66, %v65
    %v69 = vpack.c.b16 %v67, %v67
    %v80 = vunpack.c.l.b16 %v34
    %v81 = vunpack.c.l.b16 %v35
    %v82 = vunpack.c.l.b16 %v36
    %v83 = vunpack.c.l.b16 %v37
    %v84 = vunpack.c.l.b16 %v38
    %v85 = vunpack.c.l.b16 %v39
    %v86 = vunpack.c.l.b16 %v40
    %v87 = vunpack.c.l.b16 %v41
    %v88 = vunpack.c.l.b16 %v42
    %v89 = vunpack.c.l.b16 %v43
    %v90 = vpack.c.b16 %v81, %v80
    %v91 = vpack.c.b16 %v83, %v82
    %v92 = vpack.c.b16 %v85, %v84
    %v93 = vpack.c.b16 %v87, %v86
    %v94 = vpack.c.b16 %v89, %v88
    %vm100 = vcmask 654336
    %v102 = vsel %vm100, %v68, 0
    %v105 = vsel %vm100, %v69, 0
    %107 = vmatpush.bf16.msra.mxu0 0
    %108 = vmatpush.bf16.msra.mxu0 0
    %109 = vmatpush.bf16.msra.mxu0 0
    %110 = vmatpush.bf16.msra.mxu0 %v94
    %111 = vmatpush.bf16.msra.mxu0 %v93
    %112 = vmatpush.bf16.msra.mxu0 %v92
    %113 = vmatpush.bf16.msra.mxu0 %v91
    %114 = vmatpush.bf16.msra.mxu0 %v90
    %115 = vmatmul.bf16.gmra.mxu0 %v102
    %v116 = vpop.f32.mrf.mxu0
    %v117 = vadd.f32 %v50, %v116
    %v118 = vpop.f32.mrf.mxu0
    %v119 = vadd.f32 %v55, %v118
    %120 = vmatmul.bf16.gmra.mxu0 %v105
    %v121 = vpop.f32.mrf.mxu0
    %v122 = vadd.f32 %v60, %v121
    %v123 = vpop.f32.mrf.mxu0
    %124 = vdwg.mxu0
    %vm125 = vcmask 31744
    %126 = vst.msk [vmem:[%s3] sm:$0xff] %vm125, %v117
    %127 = vst.msk [vmem:[%s3 + $0x8] sm:$0xff] %vm125, %v119
    %128 = vst.msk [vmem:[%s3 + $0x10] sm:$0xff] %vm125, %v122
    // Predicated region
    $region18: #{hourglass_forward.64} parent=1 // pred_check
      _
    $region19: #{hourglass_forward.64} parent=1 // pred_check_branch
      %130 = sbr.rel (0) target = $region21
    $region20: #{hourglass_forward.64} parent=1 // pred_region
      _
    $region21: #{hourglass_forward.64} parent=1 // pred_fallthru
      _
    // Predicated region
    $region22: #{hourglass_forward.64} parent=1 // pred_check
      _
    $region23: #{hourglass_forward.64} parent=1 // pred_check_branch
      %132 = sbr.rel (0) target = $region25
    $region24: #{hourglass_forward.64} parent=1 // pred_region
      _
    $region25: #{hourglass_forward.64} parent=1 // pred_fallthru
      _
    %133 = vsyncpa [#allocation3], 1

// kernel: hourglass_forward.58
$region0: #{hourglass_forward.58}
  #allocation0 [shape = 'u32[]', space=smem, size = 0x4, offset = 0x4, fixed_abs, tag = 'smem constant byte address 0x4 - core index']
  #allocation1 [shape = 'u32[72,128]{1,0:T(1,128)}', space=vmem, size = 0x9000, scoped, tag = 'internal scratch']
  %s0 = inlined_call_operand.vmem [shape: bf16[192,16], index: 0, kind: input, shape index: {}]
  %s1 = inlined_call_operand.hbm [shape: bf16[96,192], index: 1, kind: input, shape index: {}]
  %s2 = inlined_call_operand.vmem [shape: f32[96,1], index: 2, kind: input, shape index: {}]
  %s3 = inlined_call_operand.vmem [shape: f32[96,16], index: 3, kind: output, shape index: {}]
  %s4 = sld [smem:[#allocation0]]
  $region26: #{hourglass_forward.58} parent=0
    _
  %s6 = ssub.s32 1, %s4
  %s7 = scalar_select 0, %s6, %s4
  $region1: #{hourglass_forward.58} parent=0
    #allocation2 [shape = 'u8[49152]{0}', space=vmem, size = 0xc000, scoped, tag = 'input window, operand 1, single buffered']
    #allocation3 [shape = 's32[1]{0}', space=sflag, size = 0x4, scoped, tag = 'scoped memory for hourglass_forward.58']
    %8 = vsyncpa [#allocation3], 0
    // Predicated region
    $region2: #{hourglass_forward.58} parent=1 // pred_check
      _
    $region3: #{hourglass_forward.58} parent=1 // pred_check_branch
      %10 = sbr.rel (0) target = $region5
    $region4: #{hourglass_forward.58} parent=1 // pred_region
      _
    $region5: #{hourglass_forward.58} parent=1 // pred_fallthru
      _
    // Predicated region
    $region6: #{hourglass_forward.58} parent=1 // pred_check
      _
    $region7: #{hourglass_forward.58} parent=1 // pred_check_branch
      %12 = sbr.rel (0) target = $region9
    $region8: #{hourglass_forward.58} parent=1 // pred_region
      %14 = vsyncadd [#allocation3], 0
      %s15 = sshll.u32 %s1, 4
      %s16 = int_to_ptr.hbm [resolvable:$true] %s15
      %s17 = sshll.u32 [#allocation2], 4
      %s18 = int_to_ptr.vmem [resolvable:$true] %s17
      %23 = dma.hbm_to_vmem [thread:$0]  %s16, 1536, %s18, [#allocation3], 128, 128, 8
    $region9: #{hourglass_forward.58} parent=1 // pred_fallthru
      _
    // Predicated region
    $region10: #{hourglass_forward.58} parent=1 // pred_check
      _
    $region11: #{hourglass_forward.58} parent=1 // pred_check_branch
      %25 = sbr.rel (0) target = $region13
    $region12: #{hourglass_forward.58} parent=1 // pred_region
      _
    $region13: #{hourglass_forward.58} parent=1 // pred_fallthru
      _
    // Predicated region
    $region14: #{hourglass_forward.58} parent=1 // pred_check
      _
    $region15: #{hourglass_forward.58} parent=1 // pred_check_branch
      %27 = sbr.rel (0) target = $region17
    $region16: #{hourglass_forward.58} parent=1 // pred_region
      %29 = dma.done [#allocation3], 1536
    $region17: #{hourglass_forward.58} parent=1 // pred_fallthru
      _
    %v31 = vld [vmem:[#allocation2] sm:$0xff]
    %v32 = vld [vmem:[#allocation2 + $0x8] sm:$0xff]
    %v33 = vld [vmem:[#allocation2 + $0x10] sm:$0xff]
    %v34 = vld [vmem:[#allocation2 + $0x18] sm:$0xff]
    %v35 = vld [vmem:[#allocation2 + $0x20] sm:$0xff]
    %v36 = vld [vmem:[#allocation2 + $0x28] sm:$0xff]
    %v37 = vld [vmem:[#allocation2 + $0x30] sm:$0xff]
    %v38 = vld [vmem:[#allocation2 + $0x38] sm:$0xff]
    %v39 = vld [vmem:[#allocation2 + $0x40] sm:$0xff]
    %v40 = vld [vmem:[#allocation2 + $0x48] sm:$0xff]
    %v41 = vld [vmem:[#allocation2 + $0x50] sm:$0xff]
    %v42 = vld [vmem:[#allocation2 + $0x58] sm:$0xff]
    %v43 = vld [vmem:[%s0] sm:$0xf]
    %v44 = vld [vmem:[%s0 + $0x4] sm:$0xf]
    %v45 = vld [vmem:[%s0 + $0x8] sm:$0xf]
    %v46 = vld [vmem:[%s0 + $0xc] sm:$0xf]
    %v47 = vld [vmem:[%s0 + $0x10] sm:$0xf]
    %v48 = vld [vmem:[%s0 + $0x14] sm:$0xf]
    %v49 = vld [vmem:[%s0 + $0x18] sm:$0xf]
    %v50 = vld [vmem:[%s0 + $0x1c] sm:$0xf]
    %v51 = vld [vmem:[%s0 + $0x20] sm:$0xf]
    %v52 = vld [vmem:[%s0 + $0x24] sm:$0xf]
    %v53 = vld [vmem:[%s0 + $0x28] sm:$0xf]
    %v54 = vld [vmem:[%s0 + $0x2c] sm:$0xf]
    %v55 = vld [vmem:[%s0 + $0x30] sm:$0xf]
    %v56 = vld [vmem:[%s0 + $0x34] sm:$0xf]
    %v57 = vld [vmem:[%s0 + $0x38] sm:$0xf]
    %v58 = vld [vmem:[%s0 + $0x3c] sm:$0xf]
    %v59 = vld [vmem:[%s0 + $0x40] sm:$0xf]
    %v60 = vld [vmem:[%s0 + $0x44] sm:$0xf]
    %v61 = vld [vmem:[%s0 + $0x48] sm:$0xf]
    %v62 = vld [vmem:[%s0 + $0x4c] sm:$0xf]
    %v63 = vld [vmem:[%s0 + $0x50] sm:$0xf]
    %v64 = vld [vmem:[%s0 + $0x54] sm:$0xf]
    %v65 = vld [vmem:[%s0 + $0x58] sm:$0xf]
    %v66 = vld [vmem:[%s0 + $0x5c] sm:$0xf]
    %v67 = vld [vmem:[%s2] sm:$0xff]
    %v68 = vld [vmem:[%s2 + $0x8] sm:$0xff]
    %v69 = vld [vmem:[%s2 + $0x10] sm:$0xff]
    %v70 = vld [vmem:[%s2 + $0x18] sm:$0xff]
    %v71 = vld [vmem:[%s2 + $0x20] sm:$0xff]
    %v72 = vld [vmem:[%s2 + $0x28] sm:$0xff]
    %v73 = vld [vmem:[%s2 + $0x30] sm:$0xff]
    %v74 = vld [vmem:[%s2 + $0x38] sm:$0xff]
    %v75 = vld [vmem:[%s2 + $0x40] sm:$0xff]
    %v76 = vld [vmem:[%s2 + $0x48] sm:$0xff]
    %v77 = vld [vmem:[%s2 + $0x50] sm:$0xff]
    %v78 = vld [vmem:[%s2 + $0x58] sm:$0xff]
    %80 = vset.pattern.permute.xlu0 0
    %81 = vperm.xlu0 %80, %v67
    %v82 = vpop.permute.xlu0 %81
    %85 = vset.pattern.permute.xlu0 0
    %86 = vperm.xlu0 %85, %v68
    %v87 = vpop.permute.xlu0 %86
    %90 = vset.pattern.permute.xlu0 0
    %91 = vperm.xlu0 %90, %v69
    %v92 = vpop.permute.xlu0 %91
    %95 = vset.pattern.permute.xlu0 0
    %96 = vperm.xlu0 %95, %v70
    %v97 = vpop.permute.xlu0 %96
    %100 = vset.pattern.permute.xlu0 0
    %101 = vperm.xlu0 %100, %v71
    %v102 = vpop.permute.xlu0 %101
    %105 = vset.pattern.permute.xlu0 0
    %106 = vperm.xlu0 %105, %v72
    %v107 = vpop.permute.xlu0 %106
    %110 = vset.pattern.permute.xlu0 0
    %111 = vperm.xlu0 %110, %v73
    %v112 = vpop.permute.xlu0 %111
    %115 = vset.pattern.permute.xlu0 0
    %116 = vperm.xlu0 %115, %v74
    %v117 = vpop.permute.xlu0 %116
    %120 = vset.pattern.permute.xlu0 0
    %121 = vperm.xlu0 %120, %v75
    %v122 = vpop.permute.xlu0 %121
    %125 = vset.pattern.permute.xlu0 0
    %126 = vperm.xlu0 %125, %v76
    %v127 = vpop.permute.xlu0 %126
    %130 = vset.pattern.permute.xlu0 0
    %131 = vperm.xlu0 %130, %v77
    %v132 = vpop.permute.xlu0 %131
    %135 = vset.pattern.permute.xlu0 0
    %136 = vperm.xlu0 %135, %v78
    %v137 = vpop.permute.xlu0 %136
    %v151 = vunpack.c.l.b16 %v31
    %v152 = vunpack.c.h.b16 %v31
    %v153 = vunpack.c.l.b16 %v32
    %v154 = vunpack.c.h.b16 %v32
    %v155 = vunpack.c.l.b16 %v33
    %v156 = vunpack.c.h.b16 %v33
    %v157 = vunpack.c.l.b16 %v34
    %v158 = vunpack.c.h.b16 %v34
    %v159 = vunpack.c.l.b16 %v35
    %v160 = vunpack.c.h.b16 %v35
    %v161 = vunpack.c.l.b16 %v36
    %v162 = vunpack.c.h.b16 %v36
    %v163 = vunpack.c.l.b16 %v37
    %v164 = vunpack.c.h.b16 %v37
    %v165 = vunpack.c.l.b16 %v38
    %v166 = vunpack.c.h.b16 %v38
    %v167 = vunpack.c.l.b16 %v39
    %v168 = vunpack.c.h.b16 %v39
    %v169 = vunpack.c.l.b16 %v40
    %v170 = vunpack.c.h.b16 %v40
    %v171 = vunpack.c.l.b16 %v41
    %v172 = vunpack.c.h.b16 %v41
    %v173 = vunpack.c.l.b16 %v42
    %v174 = vunpack.c.h.b16 %v42
    %v175 = vpack.c.b16 %v153, %v151
    %v176 = vpack.c.b16 %v154, %v152
    %v177 = vpack.c.b16 %v157, %v155
    %v178 = vpack.c.b16 %v158, %v156
    %v179 = vpack.c.b16 %v161, %v159
    %v180 = vpack.c.b16 %v162, %v160
    %v181 = vpack.c.b16 %v165, %v163
    %v182 = vpack.c.b16 %v166, %v164
    %v183 = vpack.c.b16 %v169, %v167
    %v184 = vpack.c.b16 %v170, %v168
    %v185 = vpack.c.b16 %v173, %v171
    %v186 = vpack.c.b16 %v174, %v172
    %v217 = vunpack.c.l.b16 %v43
    %v218 = vunpack.c.l.b16 %v44
    %v219 = vunpack.c.l.b16 %v45
    %v220 = vunpack.c.l.b16 %v46
    %v221 = vunpack.c.l.b16 %v47
    %v222 = vunpack.c.l.b16 %v48
    %v223 = vunpack.c.l.b16 %v49
    %v224 = vunpack.c.l.b16 %v50
    %v225 = vunpack.c.l.b16 %v51
    %v226 = vunpack.c.l.b16 %v52
    %v227 = vunpack.c.l.b16 %v53
    %v228 = vunpack.c.l.b16 %v54
    %v229 = vunpack.c.l.b16 %v55
    %v230 = vunpack.c.l.b16 %v56
    %v231 = vunpack.c.l.b16 %v57
    %v232 = vunpack.c.l.b16 %v58
    %v233 = vunpack.c.l.b16 %v59
    %v234 = vunpack.c.l.b16 %v60
    %v235 = vunpack.c.l.b16 %v61
    %v236 = vunpack.c.l.b16 %v62
    %v237 = vunpack.c.l.b16 %v63
    %v238 = vunpack.c.l.b16 %v64
    %v239 = vunpack.c.l.b16 %v65
    %v240 = vunpack.c.l.b16 %v66
    %v241 = vpack.c.b16 %v218, %v217
    %v242 = vpack.c.b16 %v220, %v219
    %v243 = vpack.c.b16 %v222, %v221
    %v244 = vpack.c.b16 %v224, %v223
    %v245 = vpack.c.b16 %v226, %v225
    %v246 = vpack.c.b16 %v228, %v227
    %v247 = vpack.c.b16 %v230, %v229
    %v248 = vpack.c.b16 %v232, %v231
    %v249 = vpack.c.b16 %v234, %v233
    %v250 = vpack.c.b16 %v236, %v235
    %v251 = vpack.c.b16 %v238, %v237
    %v252 = vpack.c.b16 %v240, %v239
    %vm265 = vcmask 523264
    %v267 = vsel %vm265, %v176, 0
    %v270 = vsel %vm265, %v178, 0
    %v273 = vsel %vm265, %v180, 0
    %v276 = vsel %vm265, %v182, 0
    %v279 = vsel %vm265, %v184, 0
    %v282 = vsel %vm265, %v186, 0
    %284 = vmatpush.bf16.msra.mxu0 %v248
    %285 = vmatpush.bf16.msra.mxu0 %v247
    %286 = vmatpush.bf16.msra.mxu0 %v246
    %287 = vmatpush.bf16.msra.mxu0 %v245
    %288 = vmatpush.bf16.msra.mxu0 %v244
    %289 = vmatpush.bf16.msra.mxu0 %v243
    %290 = vmatpush.bf16.msra.mxu0 %v242
    %291 = vmatpush.bf16.msra.mxu0 %v241
    %292 = vmatmul.bf16.gmra.mxu0 %v175
    %v293 = vpop.f32.mrf.mxu0
    %v294 = vadd.f32 %v82, %v293
    %v295 = vpop.f32.mrf.mxu0
    %v296 = vadd.f32 %v87, %v295
    %297 = vmatmul.bf16.gmra.mxu0 %v177
    %v298 = vpop.f32.mrf.mxu0
    %v299 = vadd.f32 %v92, %v298
    %v300 = vpop.f32.mrf.mxu0
    %v301 = vadd.f32 %v97, %v300
    %302 = vmatmul.bf16.gmra.mxu0 %v179
    %v303 = vpop.f32.mrf.mxu0
    %v304 = vadd.f32 %v102, %v303
    %v305 = vpop.f32.mrf.mxu0
    %v306 = vadd.f32 %v107, %v305
    %307 = vmatmul.bf16.gmra.mxu0 %v181
    %v308 = vpop.f32.mrf.mxu0
    %v309 = vadd.f32 %v112, %v308
    %v310 = vpop.f32.mrf.mxu0
    %v311 = vadd.f32 %v117, %v310
    %312 = vmatmul.bf16.gmra.mxu0 %v183
    %v313 = vpop.f32.mrf.mxu0
    %v314 = vadd.f32 %v122, %v313
    %v315 = vpop.f32.mrf.mxu0
    %v316 = vadd.f32 %v127, %v315
    %317 = vmatmul.bf16.gmra.mxu0 %v185
    %v318 = vpop.f32.mrf.mxu0
    %v319 = vadd.f32 %v132, %v318
    %v320 = vpop.f32.mrf.mxu0
    %v321 = vadd.f32 %v137, %v320
    %322 = vdwg.mxu0
    %323 = vmatpush.bf16.msra.mxu0 0
    %324 = vmatpush.bf16.msra.mxu0 0
    %325 = vmatpush.bf16.msra.mxu0 0
    %326 = vmatpush.bf16.msra.mxu0 0
    %327 = vmatpush.bf16.msra.mxu0 %v252
    %328 = vmatpush.bf16.msra.mxu0 %v251
    %329 = vmatpush.bf16.msra.mxu0 %v250
    %330 = vmatpush.bf16.msra.mxu0 %v249
    %331 = vmatmul.bf16.gmra.mxu0 %v267
    %v332 = vpop.f32.mrf.mxu0
    %v333 = vadd.f32 %v294, %v332
    %v334 = vpop.f32.mrf.mxu0
    %v335 = vadd.f32 %v296, %v334
    %336 = vmatmul.bf16.gmra.mxu0 %v270
    %v337 = vpop.f32.mrf.mxu0
    %v338 = vadd.f32 %v299, %v337
    %v339 = vpop.f32.mrf.mxu0
    %v340 = vadd.f32 %v301, %v339
    %341 = vmatmul.bf16.gmra.mxu0 %v273
    %v342 = vpop.f32.mrf.mxu0
    %v343 = vadd.f32 %v304, %v342
    %v344 = vpop.f32.mrf.mxu0
    %v345 = vadd.f32 %v306, %v344
    %346 = vmatmul.bf16.gmra.mxu0 %v276
    %v347 = vpop.f32.mrf.mxu0
    %v348 = vadd.f32 %v309, %v347
    %v349 = vpop.f32.mrf.mxu0
    %v350 = vadd.f32 %v311, %v349
    %351 = vmatmul.bf16.gmra.mxu0 %v279
    %v352 = vpop.f32.mrf.mxu0
    %v353 = vadd.f32 %v314, %v352
    %v354 = vpop.f32.mrf.mxu0
    %v355 = vadd.f32 %v316, %v354
    %356 = vmatmul.bf16.gmra.mxu0 %v282
    %v357 = vpop.f32.mrf.mxu0
    %v358 = vadd.f32 %v319, %v357
    %v359 = vpop.f32.mrf.mxu0
    %v360 = vadd.f32 %v321, %v359
    %361 = vdwg.mxu0
    %vm362 = vcmp.ge.f32.partialorder %v333, 0.0
    %vm363 = vcmp.ge.f32.partialorder %v335, 0.0
    %vm364 = vcmp.ge.f32.partialorder %v338, 0.0
    %vm365 = vcmp.ge.f32.partialorder %v340, 0.0
    %vm366 = vcmp.ge.f32.partialorder %v343, 0.0
    %vm367 = vcmp.ge.f32.partialorder %v345, 0.0
    %vm368 = vcmp.ge.f32.partialorder %v348, 0.0
    %vm369 = vcmp.ge.f32.partialorder %v350, 0.0
    %vm370 = vcmp.ge.f32.partialorder %v353, 0.0
    %vm371 = vcmp.ge.f32.partialorder %v355, 0.0
    %vm372 = vcmp.ge.f32.partialorder %v358, 0.0
    %vm373 = vcmp.ge.f32.partialorder %v360, 0.0
    %v374 = vmul.f32 %v333, 0.01
    %v375 = vmul.f32 %v335, 0.01
    %v376 = vmul.f32 %v338, 0.01
    %v377 = vmul.f32 %v340, 0.01
    %v378 = vmul.f32 %v343, 0.01
    %v379 = vmul.f32 %v345, 0.01
    %v380 = vmul.f32 %v348, 0.01
    %v381 = vmul.f32 %v350, 0.01
    %v382 = vmul.f32 %v353, 0.01
    %v383 = vmul.f32 %v355, 0.01
    %v384 = vmul.f32 %v358, 0.01
    %v385 = vmul.f32 %v360, 0.01
    %v386 = vsel %vm362, %v333, %v374
    %v387 = vsel %vm363, %v335, %v375
    %v388 = vsel %vm364, %v338, %v376
    %v389 = vsel %vm365, %v340, %v377
    %v390 = vsel %vm366, %v343, %v378
    %v391 = vsel %vm367, %v345, %v379
    %v392 = vsel %vm368, %v348, %v380
    %v393 = vsel %vm369, %v350, %v381
    %v394 = vsel %vm370, %v353, %v382
    %v395 = vsel %vm371, %v355, %v383
    %v396 = vsel %vm372, %v358, %v384
    %v397 = vsel %vm373, %v360, %v385
    %vm398 = vcmask 130048
    %399 = vst.msk [vmem:[%s3] sm:$0xff] %vm398, %v386
    %400 = vst.msk [vmem:[%s3 + $0x8] sm:$0xff] %vm398, %v387
    %401 = vst.msk [vmem:[%s3 + $0x10] sm:$0xff] %vm398, %v388
    %402 = vst.msk [vmem:[%s3 + $0x18] sm:$0xff] %vm398, %v389
    %403 = vst.msk [vmem:[%s3 + $0x20] sm:$0xff] %vm398, %v390
    %404 = vst.msk [vmem:[%s3 + $0x28] sm:$0xff] %vm398, %v391
    %405 = vst.msk [vmem:[%s3 + $0x30] sm:$0xff] %vm398, %v392
    %406 = vst.msk [vmem:[%s3 + $0x38] sm:$0xff] %vm398, %v393
    %407 = vst.msk [vmem:[%s3 + $0x40] sm:$0xff] %vm398, %v394
    %408 = vst.msk [vmem:[%s3 + $0x48] sm:$0xff] %vm398, %v395
    %409 = vst.msk [vmem:[%s3 + $0x50] sm:$0xff] %vm398, %v396
    %410 = vst.msk [vmem:[%s3 + $0x58] sm:$0xff] %vm398, %v397
    // Predicated region
    $region18: #{hourglass_forward.58} parent=1 // pred_check
      _
    $region19: #{hourglass_forward.58} parent=1 // pred_check_branch
      %412 = sbr.rel (0) target = $region21
    $region20: #{hourglass_forward.58} parent=1 // pred_region
      _
    $region21: #{hourglass_forward.58} parent=1 // pred_fallthru
      _
    // Predicated region
    $region22: #{hourglass_forward.58} parent=1 // pred_check
      _
    $region23: #{hourglass_forward.58} parent=1 // pred_check_branch
      %414 = sbr.rel (0) target = $region25
    $region24: #{hourglass_forward.58} parent=1 // pred_region
      _
    $region25: #{hourglass_forward.58} parent=1 // pred_fallthru
      _
    %415 = vsyncpa [#allocation3], 1

// kernel: hourglass_forward.51
$region0: #{hourglass_forward.51}
  #allocation0 [shape = 'u32[]', space=smem, size = 0x4, offset = 0x4, fixed_abs, tag = 'smem constant byte address 0x4 - core index']
  #allocation1 [shape = 'u32[72,128]{1,0:T(1,128)}', space=vmem, size = 0x9000, scoped, tag = 'internal scratch']
  %s0 = inlined_call_operand.vmem [shape: bf16[108,256], index: 0, kind: input, shape index: {}]
  %s1 = inlined_call_operand.vmem [shape: bf16[8,108], index: 1, kind: input, shape index: {}]
  %s2 = inlined_call_operand.vmem [shape: f32[8,1], index: 2, kind: input, shape index: {}]
  %s3 = inlined_call_operand.vmem [shape: f32[8,256], index: 3, kind: output, shape index: {}]
  %s4 = sld [smem:[#allocation0]]
  $region22: #{hourglass_forward.51} parent=0
    _
  %s6 = ssub.s32 1, %s4
  %s7 = scalar_select 0, %s6, %s4
  // Predicated region
  $region2: #{hourglass_forward.51} parent=0 // pred_check
    _
  $region3: #{hourglass_forward.51} parent=0 // pred_check_branch
    %9 = sbr.rel (0) target = $region5
  $region4: #{hourglass_forward.51} parent=0 // pred_region
    _
  $region5: #{hourglass_forward.51} parent=0 // pred_fallthru
    _
  // Predicated region
  $region6: #{hourglass_forward.51} parent=0 // pred_check
    _
  $region7: #{hourglass_forward.51} parent=0 // pred_check_branch
    %11 = sbr.rel (0) target = $region9
  $region8: #{hourglass_forward.51} parent=0 // pred_region
    _
  $region9: #{hourglass_forward.51} parent=0 // pred_fallthru
    _
  // Predicated region
  $region10: #{hourglass_forward.51} parent=0 // pred_check
    _
  $region11: #{hourglass_forward.51} parent=0 // pred_check_branch
    %13 = sbr.rel (0) target = $region13
  $region12: #{hourglass_forward.51} parent=0 // pred_region
    _
  $region13: #{hourglass_forward.51} parent=0 // pred_fallthru
    _
  %v15 = vld [vmem:[%s1] sm:$0xf]
  %v16 = vld [vmem:[%s0] sm:$0xff]
  %v17 = vld [vmem:[%s0 + $0x8] sm:$0xff]
  %v18 = vld [vmem:[%s0 + $0x10] sm:$0xff]
  %v19 = vld [vmem:[%s0 + $0x18] sm:$0xff]
  %v20 = vld [vmem:[%s0 + $0x20] sm:$0xff]
  %v21 = vld [vmem:[%s0 + $0x28] sm:$0xff]
  %v22 = vld [vmem:[%s0 + $0x30] sm:$0xff]
  %v23 = vld [vmem:[%s0 + $0x38] sm:$0xff]
  %v24 = vld [vmem:[%s0 + $0x40] sm:$0xff]
  %v25 = vld [vmem:[%s0 + $0x48] sm:$0xff]
  %v26 = vld [vmem:[%s0 + $0x50] sm:$0xff]
  %v27 = vld [vmem:[%s0 + $0x58] sm:$0xff]
  %v28 = vld [vmem:[%s0 + $0x60] sm:$0xff]
  %v29 = vld [vmem:[%s0 + $0x68] sm:$0x33]
  %v30 = vld [vmem:[%s2] sm:$0xff]
  %32 = vset.pattern.permute.xlu0 0
  %33 = vperm.xlu0 %32, %v30
  %v34 = vpop.permute.xlu0 %33
  %v50 = vunpack.c.l.b16 %v16
  %v51 = vunpack.c.h.b16 %v16
  %v52 = vunpack.c.l.b16 %v17
  %v53 = vunpack.c.h.b16 %v17
  %v54 = vunpack.c.l.b16 %v18
  %v55 = vunpack.c.h.b16 %v18
  %v56 = vunpack.c.l.b16 %v19
  %v57 = vunpack.c.h.b16 %v19
  %v58 = vunpack.c.l.b16 %v20
  %v59 = vunpack.c.h.b16 %v20
  %v60 = vunpack.c.l.b16 %v21
  %v61 = vunpack.c.h.b16 %v21
  %v62 = vunpack.c.l.b16 %v22
  %v63 = vunpack.c.h.b16 %v22
  %v64 = vunpack.c.l.b16 %v23
  %v65 = vunpack.c.h.b16 %v23
  %v66 = vunpack.c.l.b16 %v24
  %v67 = vunpack.c.h.b16 %v24
  %v68 = vunpack.c.l.b16 %v25
  %v69 = vunpack.c.h.b16 %v25
  %v70 = vunpack.c.l.b16 %v26
  %v71 = vunpack.c.h.b16 %v26
  %v72 = vunpack.c.l.b16 %v27
  %v73 = vunpack.c.h.b16 %v27
  %v74 = vunpack.c.l.b16 %v28
  %v75 = vunpack.c.h.b16 %v28
  %v76 = vunpack.c.l.b16 %v29
  %v77 = vunpack.c.h.b16 %v29
  %v78 = vpack.c.b16 %v52, %v50
  %v79 = vpack.c.b16 %v53, %v51
  %v80 = vpack.c.b16 %v56, %v54
  %v81 = vpack.c.b16 %v57, %v55
  %v82 = vpack.c.b16 %v60, %v58
  %v83 = vpack.c.b16 %v61, %v59
  %v84 = vpack.c.b16 %v64, %v62
  %v85 = vpack.c.b16 %v65, %v63
  %v86 = vpack.c.b16 %v68, %v66
  %v87 = vpack.c.b16 %v69, %v67
  %v88 = vpack.c.b16 %v72, %v70
  %v89 = vpack.c.b16 %v73, %v71
  %v90 = vpack.c.b16 %v76, %v74
  %v91 = vpack.c.b16 %v77, %v75
  %vm104 = vcmask 883712
  %v106 = vsel %vm104, %v15, 0
  %vm108 = vcmask 1045504
  %v110 = vsel %vm108, %v90, 0
  %v113 = vsel %vm108, %v91, 0
  %115 = vmatpush.bf16.msra.mxu0 0
  %116 = vmatpush.bf16.msra.mxu0 %v110
  %117 = vmatpush.bf16.msra.mxu0 %v88
  %118 = vmatpush.bf16.msra.mxu0 %v86
  %119 = vmatpush.bf16.msra.mxu0 %v84
  %120 = vmatpush.bf16.msra.mxu0 %v82
  %121 = vmatpush.bf16.msra.mxu0 %v80
  %122 = vmatpush.bf16.msra.mxu0 %v78
  %123 = vmatmul.bf16.gmra.mxu0 %v106
  %v124 = vpop.f32.mrf.mxu0
  %v125 = vadd.f32 %v34, %v124
  %v126 = vpop.f32.mrf.mxu0
  %127 = vdwg.mxu0
  %128 = vmatpush.bf16.msra.mxu0 0
  %129 = vmatpush.bf16.msra.mxu0 %v113
  %130 = vmatpush.bf16.msra.mxu0 %v89
  %131 = vmatpush.bf16.msra.mxu0 %v87
  %132 = vmatpush.bf16.msra.mxu0 %v85
  %133 = vmatpush.bf16.msra.mxu0 %v83
  %134 = vmatpush.bf16.msra.mxu0 %v81
  %135 = vmatpush.bf16.msra.mxu0 %v79
  %136 = vmatmul.bf16.gmra.mxu0 %v106
  %v137 = vpop.f32.mrf.mxu0
  %v138 = vadd.f32 %v34, %v137
  %v139 = vpop.f32.mrf.mxu0
  %140 = vdwg.mxu0
  %vm141 = vcmp.ge.f32.partialorder %v125, 0.0
  %vm142 = vcmp.ge.f32.partialorder %v138, 0.0
  %v143 = vmul.f32 %v125, 0.01
  %v144 = vmul.f32 %v138, 0.01
  %v145 = vsel %vm141, %v125, %v143
  %v146 = vsel %vm142, %v138, %v144
  %147 = vst [vmem:[%s3] sm:$0xff] %v145
  %148 = vst [vmem:[%s3 + $0x8] sm:$0xff] %v146
  // Predicated region
  $region14: #{hourglass_forward.51} parent=0 // pred_check
    _
  $region15: #{hourglass_forward.51} parent=0 // pred_check_branch
    %150 = sbr.rel (0) target = $region17
  $region16: #{hourglass_forward.51} parent=0 // pred_region
    _
  $region17: #{hourglass_forward.51} parent=0 // pred_fallthru
    _
  // Predicated region
  $region18: #{hourglass_forward.51} parent=0 // pred_check
    _
  $region19: #{hourglass_forward.51} parent=0 // pred_check_branch
    %152 = sbr.rel (0) target = $region21
  $region20: #{hourglass_forward.51} parent=0 // pred_region
    _
  $region21: #{hourglass_forward.51} parent=0 // pred_fallthru
    _

// kernel: hourglass_forward.52
$region0: #{hourglass_forward.52}
  #allocation0 [shape = 'u32[]', space=smem, size = 0x4, offset = 0x4, fixed_abs, tag = 'smem constant byte address 0x4 - core index']
  #allocation1 [shape = 'u32[72,128]{1,0:T(1,128)}', space=vmem, size = 0x9000, scoped, tag = 'internal scratch']
  %s0 = inlined_call_operand.vmem [shape: bf16[216,256], index: 0, kind: input, shape index: {}]
  %s1 = inlined_call_operand.vmem [shape: bf16[8,216], index: 1, kind: input, shape index: {}]
  %s2 = inlined_call_operand.vmem [shape: f32[8,1], index: 2, kind: input, shape index: {}]
  %s3 = inlined_call_operand.vmem [shape: f32[8,256], index: 3, kind: output, shape index: {}]
  %s4 = sld [smem:[#allocation0]]
  $region22: #{hourglass_forward.52} parent=0
    _
  %s6 = ssub.s32 1, %s4
  %s7 = scalar_select 0, %s6, %s4
  // Predicated region
  $region2: #{hourglass_forward.52} parent=0 // pred_check
    _
  $region3: #{hourglass_forward.52} parent=0 // pred_check_branch
    %9 = sbr.rel (0) target = $region5
  $region4: #{hourglass_forward.52} parent=0 // pred_region
    _
  $region5: #{hourglass_forward.52} parent=0 // pred_fallthru
    _
  // Predicated region
  $region6: #{hourglass_forward.52} parent=0 // pred_check
    _
  $region7: #{hourglass_forward.52} parent=0 // pred_check_branch
    %11 = sbr.rel (0) target = $region9
  $region8: #{hourglass_forward.52} parent=0 // pred_region
    _
  $region9: #{hourglass_forward.52} parent=0 // pred_fallthru
    _
  // Predicated region
  $region10: #{hourglass_forward.52} parent=0 // pred_check
    _
  $region11: #{hourglass_forward.52} parent=0 // pred_check_branch
    %13 = sbr.rel (0) target = $region13
  $region12: #{hourglass_forward.52} parent=0 // pred_region
    _
  $region13: #{hourglass_forward.52} parent=0 // pred_fallthru
    _
  %v15 = vld [vmem:[%s1] sm:$0xff]
  %v16 = vld [vmem:[%s0] sm:$0xff]
  %v17 = vld [vmem:[%s0 + $0x8] sm:$0xff]
  %v18 = vld [vmem:[%s0 + $0x10] sm:$0xff]
  %v19 = vld [vmem:[%s0 + $0x18] sm:$0xff]
  %v20 = vld [vmem:[%s0 + $0x20] sm:$0xff]
  %v21 = vld [vmem:[%s0 + $0x28] sm:$0xff]
  %v22 = vld [vmem:[%s0 + $0x30] sm:$0xff]
  %v23 = vld [vmem:[%s0 + $0x38] sm:$0xff]
  %v24 = vld [vmem:[%s0 + $0x40] sm:$0xff]
  %v25 = vld [vmem:[%s0 + $0x48] sm:$0xff]
  %v26 = vld [vmem:[%s0 + $0x50] sm:$0xff]
  %v27 = vld [vmem:[%s0 + $0x58] sm:$0xff]
  %v28 = vld [vmem:[%s0 + $0x60] sm:$0xff]
  %v29 = vld [vmem:[%s0 + $0x68] sm:$0xff]
  %v30 = vld [vmem:[%s0 + $0x70] sm:$0xff]
  %v31 = vld [vmem:[%s0 + $0x78] sm:$0xff]
  %v32 = vld [vmem:[%s0 + $0x80] sm:$0xff]
  %v33 = vld [vmem:[%s0 + $0x88] sm:$0xff]
  %v34 = vld [vmem:[%s0 + $0x90] sm:$0xff]
  %v35 = vld [vmem:[%s0 + $0x98] sm:$0xff]
  %v36 = vld [vmem:[%s0 + $0xa0] sm:$0xff]
  %v37 = vld [vmem:[%s0 + $0xa8] sm:$0xff]
  %v38 = vld [vmem:[%s0 + $0xb0] sm:$0xff]
  %v39 = vld [vmem:[%s0 + $0xb8] sm:$0xff]
  %v40 = vld [vmem:[%s0 + $0xc0] sm:$0xff]
  %v41 = vld [vmem:[%s0 + $0xc8] sm:$0xff]
  %v42 = vld [vmem:[%s0 + $0xd0] sm:$0xff]
  %v43 = vld [vmem:[%s2] sm:$0xff]
  %45 = vset.pattern.permute.xlu0 0
  %46 = vperm.xlu0 %45, %v43
  %v47 = vpop.permute.xlu0 %46
  %v50 = vunpack.c.l.b16 %v15
  %v51 = vunpack.c.h.b16 %v15
  %v52 = vpack.c.b16 %v50, %v50
  %v53 = vpack.c.b16 %v51, %v51
  %v82 = vunpack.c.l.b16 %v16
  %v83 = vunpack.c.h.b16 %v16
  %v84 = vunpack.c.l.b16 %v17
  %v85 = vunpack.c.h.b16 %v17
  %v86 = vunpack.c.l.b16 %v18
  %v87 = vunpack.c.h.b16 %v18
  %v88 = vunpack.c.l.b16 %v19
  %v89 = vunpack.c.h.b16 %v19
  %v90 = vunpack.c.l.b16 %v20
  %v91 = vunpack.c.h.b16 %v20
  %v92 = vunpack.c.l.b16 %v21
  %v93 = vunpack.c.h.b16 %v21
  %v94 = vunpack.c.l.b16 %v22
  %v95 = vunpack.c.h.b16 %v22
  %v96 = vunpack.c.l.b16 %v23
  %v97 = vunpack.c.h.b16 %v23
  %v98 = vunpack.c.l.b16 %v24
  %v99 = vunpack.c.h.b16 %v24
  %v100 = vunpack.c.l.b16 %v25
  %v101 = vunpack.c.h.b16 %v25
  %v102 = vunpack.c.l.b16 %v26
  %v103 = vunpack.c.h.b16 %v26
  %v104 = vunpack.c.l.b16 %v27
  %v105 = vunpack.c.h.b16 %v27
  %v106 = vunpack.c.l.b16 %v28
  %v107 = vunpack.c.h.b16 %v28
  %v108 = vunpack.c.l.b16 %v29
  %v109 = vunpack.c.h.b16 %v29
  %v110 = vunpack.c.l.b16 %v30
  %v111 = vunpack.c.h.b16 %v30
  %v112 = vunpack.c.l.b16 %v31
  %v113 = vunpack.c.h.b16 %v31
  %v114 = vunpack.c.l.b16 %v32
  %v115 = vunpack.c.h.b16 %v32
  %v116 = vunpack.c.l.b16 %v33
  %v117 = vunpack.c.h.b16 %v33
  %v118 = vunpack.c.l.b16 %v34
  %v119 = vunpack.c.h.b16 %v34
  %v120 = vunpack.c.l.b16 %v35
  %v121 = vunpack.c.h.b16 %v35
  %v122 = vunpack.c.l.b16 %v36
  %v123 = vunpack.c.h.b16 %v36
  %v124 = vunpack.c.l.b16 %v37
  %v125 = vunpack.c.h.b16 %v37
  %v126 = vunpack.c.l.b16 %v38
  %v127 = vunpack.c.h.b16 %v38
  %v128 = vunpack.c.l.b16 %v39
  %v129 = vunpack.c.h.b16 %v39
  %v130 = vunpack.c.l.b16 %v40
  %v131 = vunpack.c.h.b16 %v40
  %v132 = vunpack.c.l.b16 %v41
  %v133 = vunpack.c.h.b16 %v41
  %v134 = vunpack.c.l.b16 %v42
  %v135 = vunpack.c.h.b16 %v42
  %v136 = vpack.c.b16 %v84, %v82
  %v137 = vpack.c.b16 %v85, %v83
  %v138 = vpack.c.b16 %v88, %v86
  %v139 = vpack.c.b16 %v89, %v87
  %v140 = vpack.c.b16 %v92, %v90
  %v141 = vpack.c.b16 %v93, %v91
  %v142 = vpack.c.b16 %v96, %v94
  %v143 = vpack.c.b16 %v97, %v95
  %v144 = vpack.c.b16 %v100, %v98
  %v145 = vpack.c.b16 %v101, %v99
  %v146 = vpack.c.b16 %v104, %v102
  %v147 = vpack.c.b16 %v105, %v103
  %v148 = vpack.c.b16 %v108, %v106
  %v149 = vpack.c.b16 %v109, %v107
  %v150 = vpack.c.b16 %v112, %v110
  %v151 = vpack.c.b16 %v113, %v111
  %v152 = vpack.c.b16 %v116, %v114
  %v153 = vpack.c.b16 %v117, %v115
  %v154 = vpack.c.b16 %v120, %v118
  %v155 = vpack.c.b16 %v121, %v119
  %v156 = vpack.c.b16 %v124, %v122
  %v157 = vpack.c.b16 %v125, %v123
  %v158 = vpack.c.b16 %v128, %v126
  %v159 = vpack.c.b16 %v129, %v127
  %v160 = vpack.c.b16 %v132, %v130
  %v161 = vpack.c.b16 %v133, %v131
  %v162 = vpack.c.b16 %v134, %v134
  %v163 = vpack.c.b16 %v135, %v135
  %vm190 = vcmask 719872
  %v192 = vsel %vm190, %v53, 0
  %vm194 = vcmask 1043456
  %v196 = vsel %vm194, %v162, 0
  %v199 = vsel %vm194, %v163, 0
  %201 = vmatpush.bf16.msra.mxu0 %v150
  %202 = vmatpush.bf16.msra.mxu0 %v148
  %203 = vmatpush.bf16.msra.mxu0 %v146
  %204 = vmatpush.bf16.msra.mxu0 %v144
  %205 = vmatpush.bf16.msra.mxu0 %v142
  %206 = vmatpush.bf16.msra.mxu0 %v140
  %207 = vmatpush.bf16.msra.mxu0 %v138
  %208 = vmatpush.bf16.msra.mxu0 %v136
  %209 = vmatmul.bf16.gmra.mxu0 %v52
  %v210 = vpop.f32.mrf.mxu0
  %v211 = vadd.f32 %v47, %v210
  %v212 = vpop.f32.mrf.mxu0
  %213 = vdwg.mxu0
  %214 = vmatpush.bf16.msra.mxu0 0
  %215 = vmatpush.bf16.msra.mxu0 0
  %216 = vmatpush.bf16.msra.mxu0 %v196
  %217 = vmatpush.bf16.msra.mxu0 %v160
  %218 = vmatpush.bf16.msra.mxu0 %v158
  %219 = vmatpush.bf16.msra.mxu0 %v156
  %220 = vmatpush.bf16.msra.mxu0 %v154
  %221 = vmatpush.bf16.msra.mxu0 %v152
  %222 = vmatmul.bf16.gmra.mxu0 %v192
  %v223 = vpop.f32.mrf.mxu0
  %v224 = vadd.f32 %v211, %v223
  %v225 = vpop.f32.mrf.mxu0
  %226 = vdwg.mxu0
  %227 = vmatpush.bf16.msra.mxu0 %v151
  %228 = vmatpush.bf16.msra.mxu0 %v149
  %229 = vmatpush.bf16.msra.mxu0 %v147
  %230 = vmatpush.bf16.msra.mxu0 %v145
  %231 = vmatpush.bf16.msra.mxu0 %v143
  %232 = vmatpush.bf16.msra.mxu0 %v141
  %233 = vmatpush.bf16.msra.mxu0 %v139
  %234 = vmatpush.bf16.msra.mxu0 %v137
  %235 = vmatmul.bf16.gmra.mxu0 %v52
  %v236 = vpop.f32.mrf.mxu0
  %v237 = vadd.f32 %v47, %v236
  %v238 = vpop.f32.mrf.mxu0
  %239 = vdwg.mxu0
  %240 = vmatpush.bf16.msra.mxu0 0
  %241 = vmatpush.bf16.msra.mxu0 0
  %242 = vmatpush.bf16.msra.mxu0 %v199
  %243 = vmatpush.bf16.msra.mxu0 %v161
  %244 = vmatpush.bf16.msra.mxu0 %v159
  %245 = vmatpush.bf16.msra.mxu0 %v157
  %246 = vmatpush.bf16.msra.mxu0 %v155
  %247 = vmatpush.bf16.msra.mxu0 %v153
  %248 = vmatmul.bf16.gmra.mxu0 %v192
  %v249 = vpop.f32.mrf.mxu0
  %v250 = vadd.f32 %v237, %v249
  %v251 = vpop.f32.mrf.mxu0
  %252 = vdwg.mxu0
  %vm253 = vcmp.ge.f32.partialorder %v224, 0.0
  %vm254 = vcmp.ge.f32.partialorder %v250, 0.0
  %v255 = vmul.f32 %v224, 0.01
  %v256 = vmul.f32 %v250, 0.01
  %v257 = vsel %vm253, %v224, %v255
  %v258 = vsel %vm254, %v250, %v256
  %259 = vst [vmem:[%s3] sm:$0xff] %v257
  %260 = vst [vmem:[%s3 + $0x8] sm:$0xff] %v258
  // Predicated region
  $region14: #{hourglass_forward.52} parent=0 // pred_check
    _
  $region15: #{hourglass_forward.52} parent=0 // pred_check_branch
    %262 = sbr.rel (0) target = $region17
  $region16: #{hourglass_forward.52} parent=0 // pred_region
    _
  $region17: #{hourglass_forward.52} parent=0 // pred_fallthru
    _
  // Predicated region
  $region18: #{hourglass_forward.52} parent=0 // pred_check
    _
  $region19: #{hourglass_forward.52} parent=0 // pred_check_branch
    %264 = sbr.rel (0) target = $region21
  $region20: #{hourglass_forward.52} parent=0 // pred_region
    _
  $region21: #{hourglass_forward.52} parent=0 // pred_fallthru
    _

// kernel: hourglass_forward.55
$region0: #{hourglass_forward.55}
  #allocation0 [shape = 'u32[]', space=smem, size = 0x4, offset = 0x4, fixed_abs, tag = 'smem constant byte address 0x4 - core index']
  #allocation1 [shape = 'u32[72,128]{1,0:T(1,128)}', space=vmem, size = 0x9000, scoped, tag = 'internal scratch']
  %s0 = inlined_call_operand.vmem [shape: f32[8,1,64], index: 0, kind: input, shape index: {}]
  %s1 = inlined_call_operand.vmem [shape: f32[8,4,64], index: 1, kind: input, shape index: {}]
  %s2 = inlined_call_operand.vmem [shape: f32[8,4,64], index: 2, kind: output, shape index: {}]
  %s3 = sld [smem:[#allocation0]]
  $region18: #{hourglass_forward.55} parent=0
    _
  %s5 = ssub.s32 1, %s3
  %s6 = scalar_select 0, %s5, %s3
  // Predicated region
  $region2: #{hourglass_forward.55} parent=0 // pred_check
    _
  $region3: #{hourglass_forward.55} parent=0 // pred_check_branch
    %8 = sbr.rel (0) target = $region5
  $region4: #{hourglass_forward.55} parent=0 // pred_region
    _
  $region5: #{hourglass_forward.55} parent=0 // pred_fallthru
    _
  // Predicated region
  $region6: #{hourglass_forward.55} parent=0 // pred_check
    _
  $region7: #{hourglass_forward.55} parent=0 // pred_check_branch
    %10 = sbr.rel (0) target = $region9
  $region8: #{hourglass_forward.55} parent=0 // pred_region
    _
  $region9: #{hourglass_forward.55} parent=0 // pred_fallthru
    _
  %v11 = vld [vmem:[%s0] sm:$0x1]
  %v12 = vld [vmem:[%s0 + $0x1] sm:$0x1]
  %v13 = vld [vmem:[%s0 + $0x2] sm:$0x1]
  %v14 = vld [vmem:[%s0 + $0x3] sm:$0x1]
  %v15 = vld [vmem:[%s0 + $0x4] sm:$0x1]
  %v16 = vld [vmem:[%s0 + $0x5] sm:$0x1]
  %v17 = vld [vmem:[%s0 + $0x6] sm:$0x1]
  %v18 = vld [vmem:[%s0 + $0x7] sm:$0x1]
  %v19 = vsub.f32 0.0, %v11
  %v20 = vsub.f32 0.0, %v12
  %v21 = vsub.f32 0.0, %v13
  %v22 = vsub.f32 0.0, %v14
  %v23 = vsub.f32 0.0, %v15
  %v24 = vsub.f32 0.0, %v16
  %v25 = vsub.f32 0.0, %v17
  %v26 = vsub.f32 0.0, %v18
  %v27 = vmul.f32 %v19, 1.442695
  %v28 = vpow.pop %v27
  %v29 = vmul.f32 %v20, 1.442695
  %v30 = vpow.pop %v29
  %v31 = vmul.f32 %v21, 1.442695
  %v32 = vpow.pop %v31
  %v33 = vmul.f32 %v22, 1.442695
  %v34 = vpow.pop %v33
  %v35 = vmul.f32 %v23, 1.442695
  %v36 = vpow.pop %v35
  %v37 = vmul.f32 %v24, 1.442695
  %v38 = vpow.pop %v37
  %v39 = vmul.f32 %v25, 1.442695
  %v40 = vpow.pop %v39
  %v41 = vmul.f32 %v26, 1.442695
  %v42 = vpow.pop %v41
  %v43 = vadd.f32 %v28, 1.0
  %v44 = vadd.f32 %v30, 1.0
  %v45 = vadd.f32 %v32, 1.0
  %v46 = vadd.f32 %v34, 1.0
  %v47 = vadd.f32 %v36, 1.0
  %v48 = vadd.f32 %v38, 1.0
  %v49 = vadd.f32 %v40, 1.0
  %v50 = vadd.f32 %v42, 1.0
  %v51 = vrcp.pop %v43
  %v52 = vmul.f32 %v43, %v51
  %v53 = vsub.f32 1.0, %v52
  %v54 = vmul.f32 %v51, %v53
  %v55 = vadd.f32 %v51, %v54
  %vm56 = vweird.f32 %v43
  %vm57 = vweird.f32 %v51
  %vm58 = vmor %vm56, %vm57
  %v59 = vsel %vm58, %v51, %v55
  %v60 = vand.u32 2147483647, %v43
  %vm61 = vcmp.eq.f32.partialorder %v60, 8.507059e+37
  %v62 = vand.u32 %v43, 2147483648
  %v63 = vor.u32 1.1754944e-38, %v62
  %v64 = vsel %vm61, %v63, %v59
  %v65 = vmul.f32 1.0, %v64
  %v66 = vrcp.pop %v44
  %v67 = vmul.f32 %v44, %v66
  %v68 = vsub.f32 1.0, %v67
  %v69 = vmul.f32 %v66, %v68
  %v70 = vadd.f32 %v66, %v69
  %vm71 = vweird.f32 %v44
  %vm72 = vweird.f32 %v66
  %vm73 = vmor %vm71, %vm72
  %v74 = vsel %vm73, %v66, %v70
  %v75 = vand.u32 2147483647, %v44
  %vm76 = vcmp.eq.f32.partialorder %v75, 8.507059e+37
  %v77 = vand.u32 %v44, 2147483648
  %v78 = vor.u32 1.1754944e-38, %v77
  %v79 = vsel %vm76, %v78, %v74
  %v80 = vmul.f32 1.0, %v79
  %v81 = vrcp.pop %v45
  %v82 = vmul.f32 %v45, %v81
  %v83 = vsub.f32 1.0, %v82
  %v84 = vmul.f32 %v81, %v83
  %v85 = vadd.f32 %v81, %v84
  %vm86 = vweird.f32 %v45
  %vm87 = vweird.f32 %v81
  %vm88 = vmor %vm86, %vm87
  %v89 = vsel %vm88, %v81, %v85
  %v90 = vand.u32 2147483647, %v45
  %vm91 = vcmp.eq.f32.partialorder %v90, 8.507059e+37
  %v92 = vand.u32 %v45, 2147483648
  %v93 = vor.u32 1.1754944e-38, %v92
  %v94 = vsel %vm91, %v93, %v89
  %v95 = vmul.f32 1.0, %v94
  %v96 = vrcp.pop %v46
  %v97 = vmul.f32 %v46, %v96
  %v98 = vsub.f32 1.0, %v97
  %v99 = vmul.f32 %v96, %v98
  %v100 = vadd.f32 %v96, %v99
  %vm101 = vweird.f32 %v46
  %vm102 = vweird.f32 %v96
  %vm103 = vmor %vm101, %vm102
  %v104 = vsel %vm103, %v96, %v100
  %v105 = vand.u32 2147483647, %v46
  %vm106 = vcmp.eq.f32.partialorder %v105, 8.507059e+37
  %v107 = vand.u32 %v46, 2147483648
  %v108 = vor.u32 1.1754944e-38, %v107
  %v109 = vsel %vm106, %v108, %v104
  %v110 = vmul.f32 1.0, %v109
  %v111 = vrcp.pop %v47
  %v112 = vmul.f32 %v47, %v111
  %v113 = vsub.f32 1.0, %v112
  %v114 = vmul.f32 %v111, %v113
  %v115 = vadd.f32 %v111, %v114
  %vm116 = vweird.f32 %v47
  %vm117 = vweird.f32 %v111
  %vm118 = vmor %vm116, %vm117
  %v119 = vsel %vm118, %v111, %v115
  %v120 = vand.u32 2147483647, %v47
  %vm121 = vcmp.eq.f32.partialorder %v120, 8.507059e+37
  %v122 = vand.u32 %v47, 2147483648
  %v123 = vor.u32 1.1754944e-38, %v122
  %v124 = vsel %vm121, %v123, %v119
  %v125 = vmul.f32 1.0, %v124
  %v126 = vrcp.pop %v48
  %v127 = vmul.f32 %v48, %v126
  %v128 = vsub.f32 1.0, %v127
  %v129 = vmul.f32 %v126, %v128
  %v130 = vadd.f32 %v126, %v129
  %vm131 = vweird.f32 %v48
  %vm132 = vweird.f32 %v126
  %vm133 = vmor %vm131, %vm132
  %v134 = vsel %vm133, %v126, %v130
  %v135 = vand.u32 2147483647, %v48
  %vm136 = vcmp.eq.f32.partialorder %v135, 8.507059e+37
  %v137 = vand.u32 %v48, 2147483648
  %v138 = vor.u32 1.1754944e-38, %v137
  %v139 = vsel %vm136, %v138, %v134
  %v140 = vmul.f32 1.0, %v139
  %v141 = vrcp.pop %v49
  %v142 = vmul.f32 %v49, %v141
  %v143 = vsub.f32 1.0, %v142
  %v144 = vmul.f32 %v141, %v143
  %v145 = vadd.f32 %v141, %v144
  %vm146 = vweird.f32 %v49
  %vm147 = vweird.f32 %v141
  %vm148 = vmor %vm146, %vm147
  %v149 = vsel %vm148, %v141, %v145
  %v150 = vand.u32 2147483647, %v49
  %vm151 = vcmp.eq.f32.partialorder %v150, 8.507059e+37
  %v152 = vand.u32 %v49, 2147483648
  %v153 = vor.u32 1.1754944e-38, %v152
  %v154 = vsel %vm151, %v153, %v149
  %v155 = vmul.f32 1.0, %v154
  %v156 = vrcp.pop %v50
  %v157 = vmul.f32 %v50, %v156
  %v158 = vsub.f32 1.0, %v157
  %v159 = vmul.f32 %v156, %v158
  %v160 = vadd.f32 %v156, %v159
  %vm161 = vweird.f32 %v50
  %vm162 = vweird.f32 %v156
  %vm163 = vmor %vm161, %vm162
  %v164 = vsel %vm163, %v156, %v160
  %v165 = vand.u32 2147483647, %v50
  %vm166 = vcmp.eq.f32.partialorder %v165, 8.507059e+37
  %v167 = vand.u32 %v50, 2147483648
  %v168 = vor.u32 1.1754944e-38, %v167
  %v169 = vsel %vm166, %v168, %v164
  %v170 = vmul.f32 1.0, %v169
  %v171 = vld [vmem:[%s1] sm:$0xf]
  %v172 = vld [vmem:[%s1 + $0x4] sm:$0xf]
  %v173 = vld [vmem:[%s1 + $0x8] sm:$0xf]
  %v174 = vld [vmem:[%s1 + $0xc] sm:$0xf]
  %v175 = vld [vmem:[%s1 + $0x10] sm:$0xf]
  %v176 = vld [vmem:[%s1 + $0x14] sm:$0xf]
  %v177 = vld [vmem:[%s1 + $0x18] sm:$0xf]
  %v178 = vld [vmem:[%s1 + $0x1c] sm:$0xf]
  %v187 = vperm.slane %v65, 0
  %v188 = vperm.slane %v80, 0
  %v189 = vperm.slane %v95, 0
  %v190 = vperm.slane %v110, 0
  %v191 = vperm.slane %v125, 0
  %v192 = vperm.slane %v140, 0
  %v193 = vperm.slane %v155, 0
  %v194 = vperm.slane %v170, 0
  %v203 = vmul.f32 %v187, %v171
  %v204 = vmul.f32 %v188, %v172
  %v205 = vmul.f32 %v189, %v173
  %v206 = vmul.f32 %v190, %v174
  %v207 = vmul.f32 %v191, %v175
  %v208 = vmul.f32 %v192, %v176
  %v209 = vmul.f32 %v193, %v177
  %v210 = vmul.f32 %v194, %v178
  %vm211 = vcmask 519168
  %212 = vst.msk [vmem:[%s2] sm:$0xf] %vm211, %v203
  %213 = vst.msk [vmem:[%s2 + $0x4] sm:$0xf] %vm211, %v204
  %214 = vst.msk [vmem:[%s2 + $0x8] sm:$0xf] %vm211, %v205
  %215 = vst.msk [vmem:[%s2 + $0xc] sm:$0xf] %vm211, %v206
  %216 = vst.msk [vmem:[%s2 + $0x10] sm:$0xf] %vm211, %v207
  %217 = vst.msk [vmem:[%s2 + $0x14] sm:$0xf] %vm211, %v208
  %218 = vst.msk [vmem:[%s2 + $0x18] sm:$0xf] %vm211, %v209
  %219 = vst.msk [vmem:[%s2 + $0x1c] sm:$0xf] %vm211, %v210
  // Predicated region
  $region10: #{hourglass_forward.55} parent=0 // pred_check
    _
  $region11: #{hourglass_forward.55} parent=0 // pred_check_branch
    %221 = sbr.rel (0) target = $region13
  $region12: #{hourglass_forward.55} parent=0 // pred_region
    _
  $region13: #{hourglass_forward.55} parent=0 // pred_fallthru
    _
  // Predicated region
  $region14: #{hourglass_forward.55} parent=0 // pred_check
    _
  $region15: #{hourglass_forward.55} parent=0 // pred_check_branch
    %223 = sbr.rel (0) target = $region17
  $region16: #{hourglass_forward.55} parent=0 // pred_region
    _
  $region17: #{hourglass_forward.55} parent=0 // pred_fallthru
    _

// kernel: hourglass_forward.56
$region0: #{hourglass_forward.56}
  #allocation0 [shape = 'u32[]', space=smem, size = 0x4, offset = 0x4, fixed_abs, tag = 'smem constant byte address 0x4 - core index']
  #allocation1 [shape = 'u32[72,128]{1,0:T(1,128)}', space=vmem, size = 0x9000, scoped, tag = 'internal scratch']
  %s0 = inlined_call_operand.vmem [shape: bf16[216,32], index: 0, kind: input, shape index: {}]
  %s1 = inlined_call_operand.vmem [shape: bf16[16,216], index: 1, kind: input, shape index: {}]
  %s2 = inlined_call_operand.vmem [shape: f32[16,1], index: 2, kind: input, shape index: {}]
  %s3 = inlined_call_operand.vmem [shape: f32[16,32], index: 3, kind: output, shape index: {}]
  %s4 = sld [smem:[#allocation0]]
  $region22: #{hourglass_forward.56} parent=0
    _
  %s6 = ssub.s32 1, %s4
  %s7 = scalar_select 0, %s6, %s4
  // Predicated region
  $region2: #{hourglass_forward.56} parent=0 // pred_check
    _
  $region3: #{hourglass_forward.56} parent=0 // pred_check_branch
    %9 = sbr.rel (0) target = $region5
  $region4: #{hourglass_forward.56} parent=0 // pred_region
    _
  $region5: #{hourglass_forward.56} parent=0 // pred_fallthru
    _
  // Predicated region
  $region6: #{hourglass_forward.56} parent=0 // pred_check
    _
  $region7: #{hourglass_forward.56} parent=0 // pred_check_branch
    %11 = sbr.rel (0) target = $region9
  $region8: #{hourglass_forward.56} parent=0 // pred_region
    _
  $region9: #{hourglass_forward.56} parent=0 // pred_fallthru
    _
  // Predicated region
  $region10: #{hourglass_forward.56} parent=0 // pred_check
    _
  $region11: #{hourglass_forward.56} parent=0 // pred_check_branch
    %13 = sbr.rel (0) target = $region13
  $region12: #{hourglass_forward.56} parent=0 // pred_region
    _
  $region13: #{hourglass_forward.56} parent=0 // pred_fallthru
    _
  %v15 = vld [vmem:[%s1] sm:$0xff]
  %v16 = vld [vmem:[%s1 + $0x8] sm:$0xff]
  %v17 = vld [vmem:[%s0] sm:$0xf]
  %v18 = vld [vmem:[%s0 + $0x4] sm:$0xf]
  %v19 = vld [vmem:[%s0 + $0x8] sm:$0xf]
  %v20 = vld [vmem:[%s0 + $0xc] sm:$0xf]
  %v21 = vld [vmem:[%s0 + $0x10] sm:$0xf]
  %v22 = vld [vmem:[%s0 + $0x14] sm:$0xf]
  %v23 = vld [vmem:[%s0 + $0x18] sm:$0xf]
  %v24 = vld [vmem:[%s0 + $0x1c] sm:$0xf]
  %v25 = vld [vmem:[%s0 + $0x20] sm:$0xf]
  %v26 = vld [vmem:[%s0 + $0x24] sm:$0xf]
  %v27 = vld [vmem:[%s0 + $0x28] sm:$0xf]
  %v28 = vld [vmem:[%s0 + $0x2c] sm:$0xf]
  %v29 = vld [vmem:[%s0 + $0x30] sm:$0xf]
  %v30 = vld [vmem:[%s0 + $0x34] sm:$0xf]
  %v31 = vld [vmem:[%s0 + $0x38] sm:$0xf]
  %v32 = vld [vmem:[%s0 + $0x3c] sm:$0xf]
  %v33 = vld [vmem:[%s0 + $0x40] sm:$0xf]
  %v34 = vld [vmem:[%s0 + $0x44] sm:$0xf]
  %v35 = vld [vmem:[%s0 + $0x48] sm:$0xf]
  %v36 = vld [vmem:[%s0 + $0x4c] sm:$0xf]
  %v37 = vld [vmem:[%s0 + $0x50] sm:$0xf]
  %v38 = vld [vmem:[%s0 + $0x54] sm:$0xf]
  %v39 = vld [vmem:[%s0 + $0x58] sm:$0xf]
  %v40 = vld [vmem:[%s0 + $0x5c] sm:$0xf]
  %v41 = vld [vmem:[%s0 + $0x60] sm:$0xf]
  %v42 = vld [vmem:[%s0 + $0x64] sm:$0xf]
  %v43 = vld [vmem:[%s0 + $0x68] sm:$0xf]
  %v44 = vld [vmem:[%s2] sm:$0xff]
  %v45 = vld [vmem:[%s2 + $0x8] sm:$0xff]
  %47 = vset.pattern.permute.xlu0 0
  %48 = vperm.xlu0 %47, %v44
  %v49 = vpop.permute.xlu0 %48
  %52 = vset.pattern.permute.xlu0 0
  %53 = vperm.xlu0 %52, %v45
  %v54 = vpop.permute.xlu0 %53
  %v58 = vunpack.c.l.b16 %v15
  %v59 = vunpack.c.h.b16 %v15
  %v60 = vunpack.c.l.b16 %v16
  %v61 = vunpack.c.h.b16 %v16
  %v62 = vpack.c.b16 %v60, %v58
  %v63 = vpack.c.b16 %v61, %v59
  %v92 = vunpack.c.l.b16 %v17
  %v93 = vunpack.c.l.b16 %v18
  %v94 = vunpack.c.l.b16 %v19
  %v95 = vunpack.c.l.b16 %v20
  %v96 = vunpack.c.l.b16 %v21
  %v97 = vunpack.c.l.b16 %v22
  %v98 = vunpack.c.l.b16 %v23
  %v99 = vunpack.c.l.b16 %v24
  %v100 = vunpack.c.l.b16 %v25
  %v101 = vunpack.c.l.b16 %v26
  %v102 = vunpack.c.l.b16 %v27
  %v103 = vunpack.c.l.b16 %v28
  %v104 = vunpack.c.l.b16 %v29
  %v105 = vunpack.c.l.b16 %v30
  %v106 = vunpack.c.l.b16 %v31
  %v107 = vunpack.c.l.b16 %v32
  %v108 = vunpack.c.l.b16 %v33
  %v109 = vunpack.c.l.b16 %v34
  %v110 = vunpack.c.l.b16 %v35
  %v111 = vunpack.c.l.b16 %v36
  %v112 = vunpack.c.l.b16 %v37
  %v113 = vunpack.c.l.b16 %v38
  %v114 = vunpack.c.l.b16 %v39
  %v115 = vunpack.c.l.b16 %v40
  %v116 = vunpack.c.l.b16 %v41
  %v117 = vunpack.c.l.b16 %v42
  %v118 = vunpack.c.l.b16 %v43
  %v119 = vpack.c.b16 %v93, %v92
  %v120 = vpack.c.b16 %v95, %v94
  %v121 = vpack.c.b16 %v97, %v96
  %v122 = vpack.c.b16 %v99, %v98
  %v123 = vpack.c.b16 %v101, %v100
  %v124 = vpack.c.b16 %v103, %v102
  %v125 = vpack.c.b16 %v105, %v104
  %v126 = vpack.c.b16 %v107, %v106
  %v127 = vpack.c.b16 %v109, %v108
  %v128 = vpack.c.b16 %v111, %v110
  %v129 = vpack.c.b16 %v113, %v112
  %v130 = vpack.c.b16 %v115, %v114
  %v131 = vpack.c.b16 %v117, %v116
  %v132 = vpack.c.b16 %v118, %v118
  %vm146 = vcmask 719872
  %v148 = vsel %vm146, %v63, 0
  %vm150 = vcmask 1043456
  %v152 = vsel %vm150, %v132, 0
  %154 = vmatpush.bf16.msra.mxu0 %v126
  %155 = vmatpush.bf16.msra.mxu0 %v125
  %156 = vmatpush.bf16.msra.mxu0 %v124
  %157 = vmatpush.bf16.msra.mxu0 %v123
  %158 = vmatpush.bf16.msra.mxu0 %v122
  %159 = vmatpush.bf16.msra.mxu0 %v121
  %160 = vmatpush.bf16.msra.mxu0 %v120
  %161 = vmatpush.bf16.msra.mxu0 %v119
  %162 = vmatmul.bf16.gmra.mxu0 %v62
  %v163 = vpop.f32.mrf.mxu0
  %v164 = vadd.f32 %v49, %v163
  %v165 = vpop.f32.mrf.mxu0
  %v166 = vadd.f32 %v54, %v165
  %167 = vdwg.mxu0
  %168 = vmatpush.bf16.msra.mxu0 0
  %169 = vmatpush.bf16.msra.mxu0 0
  %170 = vmatpush.bf16.msra.mxu0 %v152
  %171 = vmatpush.bf16.msra.mxu0 %v131
  %172 = vmatpush.bf16.msra.mxu0 %v130
  %173 = vmatpush.bf16.msra.mxu0 %v129
  %174 = vmatpush.bf16.msra.mxu0 %v128
  %175 = vmatpush.bf16.msra.mxu0 %v127
  %176 = vmatmul.bf16.gmra.mxu0 %v148
  %v177 = vpop.f32.mrf.mxu0
  %v178 = vadd.f32 %v164, %v177
  %v179 = vpop.f32.mrf.mxu0
  %v180 = vadd.f32 %v166, %v179
  %181 = vdwg.mxu0
  %vm182 = vcmp.ge.f32.partialorder %v178, 0.0
  %vm183 = vcmp.ge.f32.partialorder %v180, 0.0
  %v184 = vmul.f32 %v178, 0.01
  %v185 = vmul.f32 %v180, 0.01
  %v186 = vsel %vm182, %v178, %v184
  %v187 = vsel %vm183, %v180, %v185
  %vm188 = vcmask 261120
  %189 = vst.msk [vmem:[%s3] sm:$0xff] %vm188, %v186
  %190 = vst.msk [vmem:[%s3 + $0x8] sm:$0xff] %vm188, %v187
  // Predicated region
  $region14: #{hourglass_forward.56} parent=0 // pred_check
    _
  $region15: #{hourglass_forward.56} parent=0 // pred_check_branch
    %192 = sbr.rel (0) target = $region17
  $region16: #{hourglass_forward.56} parent=0 // pred_region
    _
  $region17: #{hourglass_forward.56} parent=0 // pred_fallthru
    _
  // Predicated region
  $region18: #{hourglass_forward.56} parent=0 // pred_check
    _
  $region19: #{hourglass_forward.56} parent=0 // pred_check_branch
    %194 = sbr.rel (0) target = $region21
  $region20: #{hourglass_forward.56} parent=0 // pred_region
    _
  $region21: #{hourglass_forward.56} parent=0 // pred_fallthru
    _

// kernel: hourglass_forward.57
$region0: #{hourglass_forward.57}
  #allocation0 [shape = 'u32[]', space=smem, size = 0x4, offset = 0x4, fixed_abs, tag = 'smem constant byte address 0x4 - core index']
  #allocation1 [shape = 'u32[72,128]{1,0:T(1,128)}', space=vmem, size = 0x9000, scoped, tag = 'internal scratch']
  %s0 = inlined_call_operand.vmem [shape: bf16[432,32], index: 0, kind: input, shape index: {}]
  %s1 = inlined_call_operand.vmem [shape: bf16[16,432], index: 1, kind: input, shape index: {}]
  %s2 = inlined_call_operand.vmem [shape: f32[16,1], index: 2, kind: input, shape index: {}]
  %s3 = inlined_call_operand.vmem [shape: f32[16,32], index: 3, kind: output, shape index: {}]
  %s4 = sld [smem:[#allocation0]]
  $region22: #{hourglass_forward.57} parent=0
    _
  %s6 = ssub.s32 1, %s4
  %s7 = scalar_select 0, %s6, %s4
  // Predicated region
  $region2: #{hourglass_forward.57} parent=0 // pred_check
    _
  $region3: #{hourglass_forward.57} parent=0 // pred_check_branch
    %9 = sbr.rel (0) target = $region5
  $region4: #{hourglass_forward.57} parent=0 // pred_region
    _
  $region5: #{hourglass_forward.57} parent=0 // pred_fallthru
    _
  // Predicated region
  $region6: #{hourglass_forward.57} parent=0 // pred_check
    _
  $region7: #{hourglass_forward.57} parent=0 // pred_check_branch
    %11 = sbr.rel (0) target = $region9
  $region8: #{hourglass_forward.57} parent=0 // pred_region
    _
  $region9: #{hourglass_forward.57} parent=0 // pred_fallthru
    _
  // Predicated region
  $region10: #{hourglass_forward.57} parent=0 // pred_check
    _
  $region11: #{hourglass_forward.57} parent=0 // pred_check_branch
    %13 = sbr.rel (0) target = $region13
  $region12: #{hourglass_forward.57} parent=0 // pred_region
    _
  $region13: #{hourglass_forward.57} parent=0 // pred_fallthru
    _
  %v15 = vld [vmem:[%s1] sm:$0xff]
  %v16 = vld [vmem:[%s1 + $0x8] sm:$0xff]
  %v17 = vld [vmem:[%s1 + $0x10] sm:$0xff]
  %v18 = vld [vmem:[%s1 + $0x18] sm:$0xff]
  %v19 = vld [vmem:[%s0] sm:$0xf]
  %v20 = vld [vmem:[%s0 + $0x4] sm:$0xf]
  %v21 = vld [vmem:[%s0 + $0x8] sm:$0xf]
  %v22 = vld [vmem:[%s0 + $0xc] sm:$0xf]
  %v23 = vld [vmem:[%s0 + $0x10] sm:$0xf]
  %v24 = vld [vmem:[%s0 + $0x14] sm:$0xf]
  %v25 = vld [vmem:[%s0 + $0x18] sm:$0xf]
  %v26 = vld [vmem:[%s0 + $0x1c] sm:$0xf]
  %v27 = vld [vmem:[%s0 + $0x20] sm:$0xf]
  %v28 = vld [vmem:[%s0 + $0x24] sm:$0xf]
  %v29 = vld [vmem:[%s0 + $0x28] sm:$0xf]
  %v30 = vld [vmem:[%s0 + $0x2c] sm:$0xf]
  %v31 = vld [vmem:[%s0 + $0x30] sm:$0xf]
  %v32 = vld [vmem:[%s0 + $0x34] sm:$0xf]
  %v33 = vld [vmem:[%s0 + $0x38] sm:$0xf]
  %v34 = vld [vmem:[%s0 + $0x3c] sm:$0xf]
  %v35 = vld [vmem:[%s0 + $0x40] sm:$0xf]
  %v36 = vld [vmem:[%s0 + $0x44] sm:$0xf]
  %v37 = vld [vmem:[%s0 + $0x48] sm:$0xf]
  %v38 = vld [vmem:[%s0 + $0x4c] sm:$0xf]
  %v39 = vld [vmem:[%s0 + $0x50] sm:$0xf]
  %v40 = vld [vmem:[%s0 + $0x54] sm:$0xf]
  %v41 = vld [vmem:[%s0 + $0x58] sm:$0xf]
  %v42 = vld [vmem:[%s0 + $0x5c] sm:$0xf]
  %v43 = vld [vmem:[%s0 + $0x60] sm:$0xf]
  %v44 = vld [vmem:[%s0 + $0x64] sm:$0xf]
  %v45 = vld [vmem:[%s0 + $0x68] sm:$0xf]
  %v46 = vld [vmem:[%s0 + $0x6c] sm:$0xf]
  %v47 = vld [vmem:[%s0 + $0x70] sm:$0xf]
  %v48 = vld [vmem:[%s0 + $0x74] sm:$0xf]
  %v49 = vld [vmem:[%s0 + $0x78] sm:$0xf]
  %v50 = vld [vmem:[%s0 + $0x7c] sm:$0xf]
  %v51 = vld [vmem:[%s0 + $0x80] sm:$0xf]
  %v52 = vld [vmem:[%s0 + $0x84] sm:$0xf]
  %v53 = vld [vmem:[%s0 + $0x88] sm:$0xf]
  %v54 = vld [vmem:[%s0 + $0x8c] sm:$0xf]
  %v55 = vld [vmem:[%s0 + $0x90] sm:$0xf]
  %v56 = vld [vmem:[%s0 + $0x94] sm:$0xf]
  %v57 = vld [vmem:[%s0 + $0x98] sm:$0xf]
  %v58 = vld [vmem:[%s0 + $0x9c] sm:$0xf]
  %v59 = vld [vmem:[%s0 + $0xa0] sm:$0xf]
  %v60 = vld [vmem:[%s0 + $0xa4] sm:$0xf]
  %v61 = vld [vmem:[%s0 + $0xa8] sm:$0xf]
  %v62 = vld [vmem:[%s0 + $0xac] sm:$0xf]
  %v63 = vld [vmem:[%s0 + $0xb0] sm:$0xf]
  %v64 = vld [vmem:[%s0 + $0xb4] sm:$0xf]
  %v65 = vld [vmem:[%s0 + $0xb8] sm:$0xf]
  %v66 = vld [vmem:[%s0 + $0xbc] sm:$0xf]
  %v67 = vld [vmem:[%s0 + $0xc0] sm:$0xf]
  %v68 = vld [vmem:[%s0 + $0xc4] sm:$0xf]
  %v69 = vld [vmem:[%s0 + $0xc8] sm:$0xf]
  %v70 = vld [vmem:[%s0 + $0xcc] sm:$0xf]
  %v71 = vld [vmem:[%s0 + $0xd0] sm:$0xf]
  %v72 = vld [vmem:[%s0 + $0xd4] sm:$0xf]
  %v73 = vld [vmem:[%s2] sm:$0xff]
  %v74 = vld [vmem:[%s2 + $0x8] sm:$0xff]
  %76 = vset.pattern.permute.xlu0 0
  %77 = vperm.xlu0 %76, %v73
  %v78 = vpop.permute.xlu0 %77
  %81 = vset.pattern.permute.xlu0 0
  %82 = vperm.xlu0 %81, %v74
  %v83 = vpop.permute.xlu0 %82
  %v89 = vunpack.c.l.b16 %v15
  %v90 = vunpack.c.h.b16 %v15
  %v91 = vunpack.c.l.b16 %v16
  %v92 = vunpack.c.h.b16 %v16
  %v93 = vunpack.c.l.b16 %v17
  %v94 = vunpack.c.h.b16 %v17
  %v95 = vunpack.c.l.b16 %v18
  %v96 = vunpack.c.h.b16 %v18
  %v97 = vpack.c.b16 %v93, %v89
  %v98 = vpack.c.b16 %v94, %v90
  %v99 = vpack.c.b16 %v95, %v91
  %v100 = vpack.c.b16 %v96, %v92
  %v158 = vunpack.c.l.b16 %v19
  %v159 = vunpack.c.l.b16 %v20
  %v160 = vunpack.c.l.b16 %v21
  %v161 = vunpack.c.l.b16 %v22
  %v162 = vunpack.c.l.b16 %v23
  %v163 = vunpack.c.l.b16 %v24
  %v164 = vunpack.c.l.b16 %v25
  %v165 = vunpack.c.l.b16 %v26
  %v166 = vunpack.c.l.b16 %v27
  %v167 = vunpack.c.l.b16 %v28
  %v168 = vunpack.c.l.b16 %v29
  %v169 = vunpack.c.l.b16 %v30
  %v170 = vunpack.c.l.b16 %v31
  %v171 = vunpack.c.l.b16 %v32
  %v172 = vunpack.c.l.b16 %v33
  %v173 = vunpack.c.l.b16 %v34
  %v174 = vunpack.c.l.b16 %v35
  %v175 = vunpack.c.l.b16 %v36
  %v176 = vunpack.c.l.b16 %v37
  %v177 = vunpack.c.l.b16 %v38
  %v178 = vunpack.c.l.b16 %v39
  %v179 = vunpack.c.l.b16 %v40
  %v180 = vunpack.c.l.b16 %v41
  %v181 = vunpack.c.l.b16 %v42
  %v182 = vunpack.c.l.b16 %v43
  %v183 = vunpack.c.l.b16 %v44
  %v184 = vunpack.c.l.b16 %v45
  %v185 = vunpack.c.l.b16 %v46
  %v186 = vunpack.c.l.b16 %v47
  %v187 = vunpack.c.l.b16 %v48
  %v188 = vunpack.c.l.b16 %v49
  %v189 = vunpack.c.l.b16 %v50
  %v190 = vunpack.c.l.b16 %v51
  %v191 = vunpack.c.l.b16 %v52
  %v192 = vunpack.c.l.b16 %v53
  %v193 = vunpack.c.l.b16 %v54
  %v194 = vunpack.c.l.b16 %v55
  %v195 = vunpack.c.l.b16 %v56
  %v196 = vunpack.c.l.b16 %v57
  %v197 = vunpack.c.l.b16 %v58
  %v198 = vunpack.c.l.b16 %v59
  %v199 = vunpack.c.l.b16 %v60
  %v200 = vunpack.c.l.b16 %v61
  %v201 = vunpack.c.l.b16 %v62
  %v202 = vunpack.c.l.b16 %v63
  %v203 = vunpack.c.l.b16 %v64
  %v204 = vunpack.c.l.b16 %v65
  %v205 = vunpack.c.l.b16 %v66
  %v206 = vunpack.c.l.b16 %v67
  %v207 = vunpack.c.l.b16 %v68
  %v208 = vunpack.c.l.b16 %v69
  %v209 = vunpack.c.l.b16 %v70
  %v210 = vunpack.c.l.b16 %v71
  %v211 = vunpack.c.l.b16 %v72
  %v212 = vpack.c.b16 %v159, %v158
  %v213 = vpack.c.b16 %v161, %v160
  %v214 = vpack.c.b16 %v163, %v162
  %v215 = vpack.c.b16 %v165, %v164
  %v216 = vpack.c.b16 %v167, %v166
  %v217 = vpack.c.b16 %v169, %v168
  %v218 = vpack.c.b16 %v171, %v170
  %v219 = vpack.c.b16 %v173, %v172
  %v220 = vpack.c.b16 %v175, %v174
  %v221 = vpack.c.b16 %v177, %v176
  %v222 = vpack.c.b16 %v179, %v178
  %v223 = vpack.c.b16 %v181, %v180
  %v224 = vpack.c.b16 %v183, %v182
  %v225 = vpack.c.b16 %v185, %v184
  %v226 = vpack.c.b16 %v187, %v186
  %v227 = vpack.c.b16 %v189, %v188
  %v228 = vpack.c.b16 %v191, %v190
  %v229 = vpack.c.b16 %v193, %v192
  %v230 = vpack.c.b16 %v195, %v194
  %v231 = vpack.c.b16 %v197, %v196
  %v232 = vpack.c.b16 %v199, %v198
  %v233 = vpack.c.b16 %v201, %v200
  %v234 = vpack.c.b16 %v203, %v202
  %v235 = vpack.c.b16 %v205, %v204
  %v236 = vpack.c.b16 %v207, %v206
  %v237 = vpack.c.b16 %v209, %v208
  %v238 = vpack.c.b16 %v211, %v210
  %vm266 = vcmask 392192
  %v268 = vsel %vm266, %v100, 0
  %270 = vmatpush.bf16.msra.mxu0 %v219
  %271 = vmatpush.bf16.msra.mxu0 %v218
  %272 = vmatpush.bf16.msra.mxu0 %v217
  %273 = vmatpush.bf16.msra.mxu0 %v216
  %274 = vmatpush.bf16.msra.mxu0 %v215
  %275 = vmatpush.bf16.msra.mxu0 %v214
  %276 = vmatpush.bf16.msra.mxu0 %v213
  %277 = vmatpush.bf16.msra.mxu0 %v212
  %278 = vmatmul.bf16.gmra.mxu0 %v97
  %v279 = vpop.f32.mrf.mxu0
  %v280 = vadd.f32 %v78, %v279
  %v281 = vpop.f32.mrf.mxu0
  %v282 = vadd.f32 %v83, %v281
  %283 = vdwg.mxu0
  %284 = vmatpush.bf16.msra.mxu0 %v227
  %285 = vmatpush.bf16.msra.mxu0 %v226
  %286 = vmatpush.bf16.msra.mxu0 %v225
  %287 = vmatpush.bf16.msra.mxu0 %v224
  %288 = vmatpush.bf16.msra.mxu0 %v223
  %289 = vmatpush.bf16.msra.mxu0 %v222
  %290 = vmatpush.bf16.msra.mxu0 %v221
  %291 = vmatpush.bf16.msra.mxu0 %v220
  %292 = vmatmul.bf16.gmra.mxu0 %v98
  %v293 = vpop.f32.mrf.mxu0
  %v294 = vadd.f32 %v280, %v293
  %v295 = vpop.f32.mrf.mxu0
  %v296 = vadd.f32 %v282, %v295
  %297 = vdwg.mxu0
  %298 = vmatpush.bf16.msra.mxu0 %v235
  %299 = vmatpush.bf16.msra.mxu0 %v234
  %300 = vmatpush.bf16.msra.mxu0 %v233
  %301 = vmatpush.bf16.msra.mxu0 %v232
  %302 = vmatpush.bf16.msra.mxu0 %v231
  %303 = vmatpush.bf16.msra.mxu0 %v230
  %304 = vmatpush.bf16.msra.mxu0 %v229
  %305 = vmatpush.bf16.msra.mxu0 %v228
  %306 = vmatmul.bf16.gmra.mxu0 %v99
  %v307 = vpop.f32.mrf.mxu0
  %v308 = vadd.f32 %v294, %v307
  %v309 = vpop.f32.mrf.mxu0
  %v310 = vadd.f32 %v296, %v309
  %311 = vdwg.mxu0
  %312 = vmatpush.bf16.msra.mxu0 0
  %313 = vmatpush.bf16.msra.mxu0 0
  %314 = vmatpush.bf16.msra.mxu0 0
  %315 = vmatpush.bf16.msra.mxu0 0
  %316 = vmatpush.bf16.msra.mxu0 0
  %317 = vmatpush.bf16.msra.mxu0 %v238
  %318 = vmatpush.bf16.msra.mxu0 %v237
  %319 = vmatpush.bf16.msra.mxu0 %v236
  %320 = vmatmul.bf16.gmra.mxu0 %v268
  %v321 = vpop.f32.mrf.mxu0
  %v322 = vadd.f32 %v308, %v321
  %v323 = vpop.f32.mrf.mxu0
  %v324 = vadd.f32 %v310, %v323
  %325 = vdwg.mxu0
  %vm326 = vcmp.ge.f32.partialorder %v322, 0.0
  %vm327 = vcmp.ge.f32.partialorder %v324, 0.0
  %v328 = vmul.f32 %v322, 0.01
  %v329 = vmul.f32 %v324, 0.01
  %v330 = vsel %vm326, %v322, %v328
  %v331 = vsel %vm327, %v324, %v329
  %vm332 = vcmask 261120
  %333 = vst.msk [vmem:[%s3] sm:$0xff] %vm332, %v330
  %334 = vst.msk [vmem:[%s3 + $0x8] sm:$0xff] %vm332, %v331
  // Predicated region
  $region14: #{hourglass_forward.57} parent=0 // pred_check
    _
  $region15: #{hourglass_forward.57} parent=0 // pred_check_branch
    %336 = sbr.rel (0) target = $region17
  $region16: #{hourglass_forward.57} parent=0 // pred_region
    _
  $region17: #{hourglass_forward.57} parent=0 // pred_fallthru
    _
  // Predicated region
  $region18: #{hourglass_forward.57} parent=0 // pred_check
    _
  $region19: #{hourglass_forward.57} parent=0 // pred_check_branch
    %338 = sbr.rel (0) target = $region21
  $region20: #{hourglass_forward.57} parent=0 // pred_region
    _
  $region21: #{hourglass_forward.57} parent=0 // pred_fallthru
    _

// kernel: hourglass_forward.60
$region0: #{hourglass_forward.60}
  #allocation0 [shape = 'u32[]', space=smem, size = 0x4, offset = 0x4, fixed_abs, tag = 'smem constant byte address 0x4 - core index']
  #allocation1 [shape = 'u32[72,128]{1,0:T(1,128)}', space=vmem, size = 0x9000, scoped, tag = 'internal scratch']
  %s0 = inlined_call_operand.vmem [shape: f32[16,1,16], index: 0, kind: input, shape index: {}]
  %s1 = inlined_call_operand.vmem [shape: f32[16,2,16], index: 1, kind: input, shape index: {}]
  %s2 = inlined_call_operand.vmem [shape: f32[16,2,16], index: 2, kind: output, shape index: {}]
  %s3 = sld [smem:[#allocation0]]
  $region41: #{hourglass_forward.60} parent=0
    _
  %s5 = ssub.s32 1, %s3
  %s6 = scalar_select 0, %s5, %s3
  loop: start=0, step=1, limit=4
  $region2: #{hourglass_forward.60} parent=0 // loop_pre_header
    _
  $region3: #{hourglass_forward.60} parent=0 // loop_header
    %s8 = sphi 0, %s12
    %p9 = scmp.ge.s32.totalorder %s8, 4
    %s18 = sphi 0, %s20
    %s21 = sphi 0, %s18
    %s22 = sphi 0, %s21
    %s38 = sphi 0, %s22
    %s44 = sphi 0, %s46
    %s47 = sphi 0, %s44
    %s48 = sphi 0, %s47
    %s64 = sphi 0, %s48
    %s70 = sphi 0, %s72
    %s73 = sphi 0, %s70
    %s74 = sphi 0, %s73
    %s90 = sphi 0, %s74
  $region4: #{hourglass_forward.60} parent=0 // loop_header_branch
    %11 = sbr.rel (%p9) target = $region8
  $region5: #{hourglass_forward.60} parent=0 // loop_body
    %s13 = ssub.s32 %s8, 1
    %s14 = ssub.s32 %s8, 2
    %s15 = sadd.s32 %s8, 1
    %s16 = ssub.s32 %s8, %s15
    %p17 = scmp.eq.s32.totalorder %s16, 0
    %s19 = sadd.s32 %s18, 1
    %s20 = scalar_select %p17, %s18, %s19
    %p23 = pneg %p17
    %p24 = scmp.eq.s32.totalorder %s8, 1
    %p25 = por %p23, %p24
    %p26 = scmp.ne.s32.totalorder %s18, %s21
    %p27 = scmp.eq.s32.totalorder %s8, 0
    %p28 = por %p26, %p27
    %p29 = scmp.ne.s32.totalorder %s18, %s21
    %p30 = scmp.eq.s32.totalorder %s13, 1
    %p31 = por %p29, %p30
    %p32 = scmp.ne.s32.totalorder %s21, %s22
    %p33 = scmp.eq.s32.totalorder %s13, 0
    %p34 = por %p32, %p33
    %p35 = scmp.ne.s32.totalorder %s21, %s22
    %p36 = scmp.eq.s32.totalorder %s14, 1
    %p37 = por %p35, %p36
    %p39 = scmp.ne.s32.totalorder %s22, %s38
    %p40 = scmp.eq.s32.totalorder %s14, 0
    %p41 = por %p39, %p40
    %s42 = ssub.s32 %s8, %s15
    %p43 = scmp.eq.s32.totalorder %s42, 0
    %s45 = sadd.s32 %s44, 1
    %s46 = scalar_select %p43, %s44, %s45
    %p49 = pneg %p43
    %p50 = scmp.eq.s32.totalorder %s8, 1
    %p51 = por %p49, %p50
    %p52 = scmp.ne.s32.totalorder %s44, %s47
    %p53 = scmp.eq.s32.totalorder %s8, 0
    %p54 = por %p52, %p53
    %p55 = scmp.ne.s32.totalorder %s44, %s47
    %p56 = scmp.eq.s32.totalorder %s13, 1
    %p57 = por %p55, %p56
    %p58 = scmp.ne.s32.totalorder %s47, %s48
    %p59 = scmp.eq.s32.totalorder %s13, 0
    %p60 = por %p58, %p59
    %p61 = scmp.ne.s32.totalorder %s47, %s48
    %p62 = scmp.eq.s32.totalorder %s14, 1
    %p63 = por %p61, %p62
    %p65 = scmp.ne.s32.totalorder %s48, %s64
    %p66 = scmp.eq.s32.totalorder %s14, 0
    %p67 = por %p65, %p66
    %s68 = ssub.s32 %s8, %s15
    %p69 = scmp.eq.s32.totalorder %s68, 0
    %s71 = sadd.s32 %s70, 1
    %s72 = scalar_select %p69, %s70, %s71
    %p75 = pneg %p69
    %p76 = scmp.eq.s32.totalorder %s8, 1
    %p77 = por %p75, %p76
    %p78 = scmp.ne.s32.totalorder %s70, %s73
    %p79 = scmp.eq.s32.totalorder %s8, 0
    %p80 = por %p78, %p79
    %p81 = scmp.ne.s32.totalorder %s70, %s73
    %p82 = scmp.eq.s32.totalorder %s13, 1
    %p83 = por %p81, %p82
    %p84 = scmp.ne.s32.totalorder %s73, %s74
    %p85 = scmp.eq.s32.totalorder %s13, 0
    %p86 = por %p84, %p85
    %p87 = scmp.ne.s32.totalorder %s73, %s74
    %p88 = scmp.eq.s32.totalorder %s14, 1
    %p89 = por %p87, %p88
    %p91 = scmp.ne.s32.totalorder %s74, %s90
    %p92 = scmp.eq.s32.totalorder %s14, 0
    %p93 = por %p91, %p92
    %p94 = scmp.le.s32.totalorder 1, %s8
    %p95 = scmp.lt.s32.totalorder %s8, 3
    %p96 = pnand %p94, %p95
    %p97 = pneg %p96
    // Predicated region
    $region9: #{hourglass_forward.60} parent=5 // pred_check
      _
    $region10: #{hourglass_forward.60} parent=5 // pred_check_branch
      %99 = sbr.rel (%p96) target = $region12
    $region11: #{hourglass_forward.60} parent=5 // pred_region
      %s100 = ssub.s32 %s8, 1
    $region12: #{hourglass_forward.60} parent=5 // pred_fallthru
      _
    %p101 = scmp.lt.s32.totalorder %s8, 2
    // Predicated region
    $region13: #{hourglass_forward.60} parent=5 // pred_check
      %p102 = pneg %p101
    $region14: #{hourglass_forward.60} parent=5 // pred_check_branch
      %104 = sbr.rel (%p102) target = $region16
    $region15: #{hourglass_forward.60} parent=5 // pred_region
      // Predicated region
      $region17: #{hourglass_forward.60} parent=15 // pred_check
        %p105 = pneg %p28
      $region18: #{hourglass_forward.60} parent=15 // pred_check_branch
        %107 = sbr.rel (%p105) target = $region20
      $region19: #{hourglass_forward.60} parent=15 // pred_region
        %s108 = smul.u32 8, %s8
        %p109 = scmp.lt.s32.totalorder %s108, 15
        %s110 = scalar_select %p109, %s108, 15
        %s111 = scalar_lea.vmem %s0, %s110
        %s112 = smul.u32 8, %s8
      $region20: #{hourglass_forward.60} parent=15 // pred_fallthru
        _
      // Predicated region
      $region21: #{hourglass_forward.60} parent=15 // pred_check
        %p113 = pneg %p54
      $region22: #{hourglass_forward.60} parent=15 // pred_check_branch
        %115 = sbr.rel (%p113) target = $region24
      $region23: #{hourglass_forward.60} parent=15 // pred_region
        %s116 = smul.u32 8, %s8
        %p117 = scmp.lt.s32.totalorder %s116, 15
        %s118 = scalar_select %p117, %s116, 15
        %s119 = smul.addr %s118, 2
        %s120 = scalar_lea.vmem %s1, %s119
        %s121 = smul.u32 8, %s8
      $region24: #{hourglass_forward.60} parent=15 // pred_fallthru
        _
    $region16: #{hourglass_forward.60} parent=5 // pred_fallthru
      _
    %p122 = scmp.le.s32.totalorder 1, %s8
    %p123 = scmp.lt.s32.totalorder %s8, 3
    %p124 = pnand %p122, %p123
    %p125 = pneg %p124
    // Predicated region
    $region25: #{hourglass_forward.60} parent=5 // pred_check
      _
    $region26: #{hourglass_forward.60} parent=5 // pred_check_branch
      %127 = sbr.rel (%p124) target = $region28
    $region27: #{hourglass_forward.60} parent=5 // pred_region
      %s128 = ssub.s32 %s8, 1
      %s129 = smul.u32 8, %s13
      %p130 = scmp.lt.s32.totalorder %s129, 15
      %s131 = scalar_select %p130, %s129, 15
      %s132 = scalar_lea.vmem %s0, %s131
      %p133 = pneg %p34
      %p134 = pneg %p31
      %s135 = smul.u32 8, %s13
      %p136 = scmp.lt.s32.totalorder %s135, 15
      %s137 = scalar_select %p136, %s135, 15
      %s138 = smul.addr %s137, 2
      %s139 = scalar_lea.vmem %s1, %s138
      %p140 = pneg %p60
      %p141 = pneg %p57
      %p142 = pneg %p86
      %p143 = pneg %p83
      %s144 = smul.u32 8, %s13
      %p145 = scmp.lt.s32.totalorder %s144, 15
      %s146 = scalar_select %p145, %s144, 15
      %s147 = smul.addr %s146, 2
      %s148 = scalar_lea.vmem %s2, %s147
      %s149 = smul.u32 8, %s13
      %p150 = scmp.lt.s32.totalorder %s149, 15
      %s151 = scalar_select %p150, %s149, 15
      %s152 = scalar_lea.vmem %s0, %s151
      %s153 = smul.u32 8, %s13
      %s154 = smul.u32 8, %s13
      %p155 = scmp.lt.s32.totalorder %s154, 15
      %s156 = scalar_select %p155, %s154, 15
      %s157 = smul.addr %s156, 2
      %s158 = scalar_lea.vmem %s1, %s157
      %s159 = smul.u32 8, %s13
      %s160 = smul.u32 8, %s13
      %p161 = scmp.lt.s32.totalorder %s160, 15
      %s162 = scalar_select %p161, %s160, 15
      %s163 = smul.addr %s162, 2
      %s164 = scalar_lea.vmem %s2, %s163
      %s165 = smul.u32 8, %s13
      %v166 = vld [vmem:[%s152] sm:$0x1]
      %v167 = vld [vmem:[%s152 + $0x1] sm:$0x1]
      %v168 = vld [vmem:[%s152 + $0x2] sm:$0x1]
      %v169 = vld [vmem:[%s152 + $0x3] sm:$0x1]
      %v170 = vld [vmem:[%s152 + $0x4] sm:$0x1]
      %v171 = vld [vmem:[%s152 + $0x5] sm:$0x1]
      %v172 = vld [vmem:[%s152 + $0x6] sm:$0x1]
      %v173 = vld [vmem:[%s152 + $0x7] sm:$0x1]
      %v174 = vsub.f32 0.0, %v166
      %v175 = vsub.f32 0.0, %v167
      %v176 = vsub.f32 0.0, %v168
      %v177 = vsub.f32 0.0, %v169
      %v178 = vsub.f32 0.0, %v170
      %v179 = vsub.f32 0.0, %v171
      %v180 = vsub.f32 0.0, %v172
      %v181 = vsub.f32 0.0, %v173
      %v182 = vmul.f32 %v174, 1.442695
      %v183 = vpow.pop %v182
      %v184 = vmul.f32 %v175, 1.442695
      %v185 = vpow.pop %v184
      %v186 = vmul.f32 %v176, 1.442695
      %v187 = vpow.pop %v186
      %v188 = vmul.f32 %v177, 1.442695
      %v189 = vpow.pop %v188
      %v190 = vmul.f32 %v178, 1.442695
      %v191 = vpow.pop %v190
      %v192 = vmul.f32 %v179, 1.442695
      %v193 = vpow.pop %v192
      %v194 = vmul.f32 %v180, 1.442695
      %v195 = vpow.pop %v194
      %v196 = vmul.f32 %v181, 1.442695
      %v197 = vpow.pop %v196
      %v198 = vadd.f32 %v183, 1.0
      %v199 = vadd.f32 %v185, 1.0
      %v200 = vadd.f32 %v187, 1.0
      %v201 = vadd.f32 %v189, 1.0
      %v202 = vadd.f32 %v191, 1.0
      %v203 = vadd.f32 %v193, 1.0
      %v204 = vadd.f32 %v195, 1.0
      %v205 = vadd.f32 %v197, 1.0
      %v206 = vrcp.pop %v198
      %v207 = vmul.f32 %v198, %v206
      %v208 = vsub.f32 1.0, %v207
      %v209 = vmul.f32 %v206, %v208
      %v210 = vadd.f32 %v206, %v209
      %vm211 = vweird.f32 %v198
      %vm212 = vweird.f32 %v206
      %vm213 = vmor %vm211, %vm212
      %v214 = vsel %vm213, %v206, %v210
      %v215 = vand.u32 2147483647, %v198
      %vm216 = vcmp.eq.f32.partialorder %v215, 8.507059e+37
      %v217 = vand.u32 %v198, 2147483648
      %v218 = vor.u32 1.1754944e-38, %v217
      %v219 = vsel %vm216, %v218, %v214
      %v220 = vmul.f32 1.0, %v219
      %v221 = vrcp.pop %v199
      %v222 = vmul.f32 %v199, %v221
      %v223 = vsub.f32 1.0, %v222
      %v224 = vmul.f32 %v221, %v223
      %v225 = vadd.f32 %v221, %v224
      %vm226 = vweird.f32 %v199
      %vm227 = vweird.f32 %v221
      %vm228 = vmor %vm226, %vm227
      %v229 = vsel %vm228, %v221, %v225
      %v230 = vand.u32 2147483647, %v199
      %vm231 = vcmp.eq.f32.partialorder %v230, 8.507059e+37
      %v232 = vand.u32 %v199, 2147483648
      %v233 = vor.u32 1.1754944e-38, %v232
      %v234 = vsel %vm231, %v233, %v229
      %v235 = vmul.f32 1.0, %v234
      %v236 = vrcp.pop %v200
      %v237 = vmul.f32 %v200, %v236
      %v238 = vsub.f32 1.0, %v237
      %v239 = vmul.f32 %v236, %v238
      %v240 = vadd.f32 %v236, %v239
      %vm241 = vweird.f32 %v200
      %vm242 = vweird.f32 %v236
      %vm243 = vmor %vm241, %vm242
      %v244 = vsel %vm243, %v236, %v240
      %v245 = vand.u32 2147483647, %v200
      %vm246 = vcmp.eq.f32.partialorder %v245, 8.507059e+37
      %v247 = vand.u32 %v200, 2147483648
      %v248 = vor.u32 1.1754944e-38, %v247
      %v249 = vsel %vm246, %v248, %v244
      %v250 = vmul.f32 1.0, %v249
      %v251 = vrcp.pop %v201
      %v252 = vmul.f32 %v201, %v251
      %v253 = vsub.f32 1.0, %v252
      %v254 = vmul.f32 %v251, %v253
      %v255 = vadd.f32 %v251, %v254
      %vm256 = vweird.f32 %v201
      %vm257 = vweird.f32 %v251
      %vm258 = vmor %vm256, %vm257
      %v259 = vsel %vm258, %v251, %v255
      %v260 = vand.u32 2147483647, %v201
      %vm261 = vcmp.eq.f32.partialorder %v260, 8.507059e+37
      %v262 = vand.u32 %v201, 2147483648
      %v263 = vor.u32 1.1754944e-38, %v262
      %v264 = vsel %vm261, %v263, %v259
      %v265 = vmul.f32 1.0, %v264
      %v266 = vrcp.pop %v202
      %v267 = vmul.f32 %v202, %v266
      %v268 = vsub.f32 1.0, %v267
      %v269 = vmul.f32 %v266, %v268
      %v270 = vadd.f32 %v266, %v269
      %vm271 = vweird.f32 %v202
      %vm272 = vweird.f32 %v266
      %vm273 = vmor %vm271, %vm272
      %v274 = vsel %vm273, %v266, %v270
      %v275 = vand.u32 2147483647, %v202
      %vm276 = vcmp.eq.f32.partialorder %v275, 8.507059e+37
      %v277 = vand.u32 %v202, 2147483648
      %v278 = vor.u32 1.1754944e-38, %v277
      %v279 = vsel %vm276, %v278, %v274
      %v280 = vmul.f32 1.0, %v279
      %v281 = vrcp.pop %v203
      %v282 = vmul.f32 %v203, %v281
      %v283 = vsub.f32 1.0, %v282
      %v284 = vmul.f32 %v281, %v283
      %v285 = vadd.f32 %v281, %v284
      %vm286 = vweird.f32 %v203
      %vm287 = vweird.f32 %v281
      %vm288 = vmor %vm286, %vm287
      %v289 = vsel %vm288, %v281, %v285
      %v290 = vand.u32 2147483647, %v203
      %vm291 = vcmp.eq.f32.partialorder %v290, 8.507059e+37
      %v292 = vand.u32 %v203, 2147483648
      %v293 = vor.u32 1.1754944e-38, %v292
      %v294 = vsel %vm291, %v293, %v289
      %v295 = vmul.f32 1.0, %v294
      %v296 = vrcp.pop %v204
      %v297 = vmul.f32 %v204, %v296
      %v298 = vsub.f32 1.0, %v297
      %v299 = vmul.f32 %v296, %v298
      %v300 = vadd.f32 %v296, %v299
      %vm301 = vweird.f32 %v204
      %vm302 = vweird.f32 %v296
      %vm303 = vmor %vm301, %vm302
      %v304 = vsel %vm303, %v296, %v300
      %v305 = vand.u32 2147483647, %v204
      %vm306 = vcmp.eq.f32.partialorder %v305, 8.507059e+37
      %v307 = vand.u32 %v204, 2147483648
      %v308 = vor.u32 1.1754944e-38, %v307
      %v309 = vsel %vm306, %v308, %v304
      %v310 = vmul.f32 1.0, %v309
      %v311 = vrcp.pop %v205
      %v312 = vmul.f32 %v205, %v311
      %v313 = vsub.f32 1.0, %v312
      %v314 = vmul.f32 %v311, %v313
      %v315 = vadd.f32 %v311, %v314
      %vm316 = vweird.f32 %v205
      %vm317 = vweird.f32 %v311
      %vm318 = vmor %vm316, %vm317
      %v319 = vsel %vm318, %v311, %v315
      %v320 = vand.u32 2147483647, %v205
      %vm321 = vcmp.eq.f32.partialorder %v320, 8.507059e+37
      %v322 = vand.u32 %v205, 2147483648
      %v323 = vor.u32 1.1754944e-38, %v322
      %v324 = vsel %vm321, %v323, %v319
      %v325 = vmul.f32 1.0, %v324
      %v326 = vld [vmem:[%s158] sm:$0x3]
      %v327 = vld [vmem:[%s158 + $0x2] sm:$0x3]
      %v328 = vld [vmem:[%s158 + $0x4] sm:$0x3]
      %v329 = vld [vmem:[%s158 + $0x6] sm:$0x3]
      %v330 = vld [vmem:[%s158 + $0x8] sm:$0x3]
      %v331 = vld [vmem:[%s158 + $0xa] sm:$0x3]
      %v332 = vld [vmem:[%s158 + $0xc] sm:$0x3]
      %v333 = vld [vmem:[%s158 + $0xe] sm:$0x3]
      %v342 = vperm.slane %v220, 0
      %v343 = vperm.slane %v235, 0
      %v344 = vperm.slane %v250, 0
      %v345 = vperm.slane %v265, 0
      %v346 = vperm.slane %v280, 0
      %v347 = vperm.slane %v295, 0
      %v348 = vperm.slane %v310, 0
      %v349 = vperm.slane %v325, 0
      %v358 = vmul.f32 %v342, %v326
      %v359 = vmul.f32 %v343, %v327
      %v360 = vmul.f32 %v344, %v328
      %v361 = vmul.f32 %v345, %v329
      %v362 = vmul.f32 %v346, %v330
      %v363 = vmul.f32 %v347, %v331
      %v364 = vmul.f32 %v348, %v332
      %v365 = vmul.f32 %v349, %v333
      %vm366 = vcmask 123904
      %367 = vst.msk [vmem:[%s164] sm:$0x3] %vm366, %v358
      %368 = vst.msk [vmem:[%s164 + $0x2] sm:$0x3] %vm366, %v359
      %369 = vst.msk [vmem:[%s164 + $0x4] sm:$0x3] %vm366, %v360
      %370 = vst.msk [vmem:[%s164 + $0x6] sm:$0x3] %vm366, %v361
      %371 = vst.msk [vmem:[%s164 + $0x8] sm:$0x3] %vm366, %v362
      %372 = vst.msk [vmem:[%s164 + $0xa] sm:$0x3] %vm366, %v363
      %373 = vst.msk [vmem:[%s164 + $0xc] sm:$0x3] %vm366, %v364
      %374 = vst.msk [vmem:[%s164 + $0xe] sm:$0x3] %vm366, %v365
      %s375 = smul.u32 8, %s13
      %p376 = scmp.lt.s32.totalorder %s375, 15
      %s377 = scalar_select %p376, %s375, 15
      %s378 = smul.addr %s377, 2
      %s379 = scalar_lea.vmem %s2, %s378
      // Predicated region
      $region29: #{hourglass_forward.60} parent=27 // pred_check
        %p380 = pneg %p83
      $region30: #{hourglass_forward.60} parent=27 // pred_check_branch
        %382 = sbr.rel (%p380) target = $region32
      $region31: #{hourglass_forward.60} parent=27 // pred_region
        %s383 = smul.u32 8, %s13
      $region32: #{hourglass_forward.60} parent=27 // pred_fallthru
        _
    $region28: #{hourglass_forward.60} parent=5 // pred_fallthru
      _
    %p384 = scmp.le.s32.totalorder 2, %s8
    // Predicated region
    $region33: #{hourglass_forward.60} parent=5 // pred_check
      %p385 = pneg %p384
    $region34: #{hourglass_forward.60} parent=5 // pred_check_branch
      %387 = sbr.rel (%p385) target = $region36
    $region35: #{hourglass_forward.60} parent=5 // pred_region
      %s388 = ssub.s32 %s8, 2
      // Predicated region
      $region37: #{hourglass_forward.60} parent=35 // pred_check
        %p389 = pneg %p89
      $region38: #{hourglass_forward.60} parent=35 // pred_check_branch
        %391 = sbr.rel (%p389) target = $region40
      $region39: #{hourglass_forward.60} parent=35 // pred_region
        %s392 = smul.u32 8, %s14
        %p393 = scmp.lt.s32.totalorder %s392, 15
        %s394 = scalar_select %p393, %s392, 15
        %s395 = smul.addr %s394, 2
        %s396 = scalar_lea.vmem %s2, %s395
      $region40: #{hourglass_forward.60} parent=35 // pred_fallthru
        _
    $region36: #{hourglass_forward.60} parent=5 // pred_fallthru
      _
  $region6: #{hourglass_forward.60} parent=0 // loop_footer
    %s12 = sadd.s32 1, %s8
  $region7: #{hourglass_forward.60} parent=0 // loop_footer_branch
    %7 = sbr.rel target = $region3
  $region8: #{hourglass_forward.60} parent=0 // loop_exit
    _

// kernel: hourglass_forward.61
$region0: #{hourglass_forward.61}
  #allocation0 [shape = 'u32[]', space=smem, size = 0x4, offset = 0x4, fixed_abs, tag = 'smem constant byte address 0x4 - core index']
  #allocation1 [shape = 'u32[72,128]{1,0:T(1,128)}', space=vmem, size = 0x9000, scoped, tag = 'internal scratch']
  %s0 = inlined_call_operand.vmem [shape: bf16[432,4], index: 0, kind: input, shape index: {}]
  %s1 = inlined_call_operand.vmem [shape: bf16[24,432], index: 1, kind: input, shape index: {}]
  %s2 = inlined_call_operand.vmem [shape: f32[24,1], index: 2, kind: input, shape index: {}]
  %s3 = inlined_call_operand.vmem [shape: f32[24,4], index: 3, kind: output, shape index: {}]
  %s4 = sld [smem:[#allocation0]]
  $region22: #{hourglass_forward.61} parent=0
    _
  %s6 = ssub.s32 1, %s4
  %s7 = scalar_select 0, %s6, %s4
  // Predicated region
  $region2: #{hourglass_forward.61} parent=0 // pred_check
    _
  $region3: #{hourglass_forward.61} parent=0 // pred_check_branch
    %9 = sbr.rel (0) target = $region5
  $region4: #{hourglass_forward.61} parent=0 // pred_region
    _
  $region5: #{hourglass_forward.61} parent=0 // pred_fallthru
    _
  // Predicated region
  $region6: #{hourglass_forward.61} parent=0 // pred_check
    _
  $region7: #{hourglass_forward.61} parent=0 // pred_check_branch
    %11 = sbr.rel (0) target = $region9
  $region8: #{hourglass_forward.61} parent=0 // pred_region
    _
  $region9: #{hourglass_forward.61} parent=0 // pred_fallthru
    _
  // Predicated region
  $region10: #{hourglass_forward.61} parent=0 // pred_check
    _
  $region11: #{hourglass_forward.61} parent=0 // pred_check_branch
    %13 = sbr.rel (0) target = $region13
  $region12: #{hourglass_forward.61} parent=0 // pred_region
    _
  $region13: #{hourglass_forward.61} parent=0 // pred_fallthru
    _
  %v15 = vld [vmem:[%s1] sm:$0xff]
  %v16 = vld [vmem:[%s1 + $0x8] sm:$0xff]
  %v17 = vld [vmem:[%s1 + $0x10] sm:$0xff]
  %v18 = vld [vmem:[%s1 + $0x18] sm:$0xff]
  %v19 = vld [vmem:[%s1 + $0x20] sm:$0xff]
  %v20 = vld [vmem:[%s1 + $0x28] sm:$0xff]
  %v21 = vld [vmem:[%s0] sm:$0xf]
  %v22 = vld [vmem:[%s0 + $0x4] sm:$0xf]
  %v23 = vld [vmem:[%s0 + $0x8] sm:$0xf]
  %v24 = vld [vmem:[%s0 + $0xc] sm:$0xf]
  %v25 = vld [vmem:[%s0 + $0x10] sm:$0xf]
  %v26 = vld [vmem:[%s0 + $0x14] sm:$0xf]
  %v27 = vld [vmem:[%s0 + $0x18] sm:$0xf]
  %v28 = vld [vmem:[%s0 + $0x1c] sm:$0xf]
  %v29 = vld [vmem:[%s0 + $0x20] sm:$0xf]
  %v30 = vld [vmem:[%s0 + $0x24] sm:$0xf]
  %v31 = vld [vmem:[%s0 + $0x28] sm:$0xf]
  %v32 = vld [vmem:[%s0 + $0x2c] sm:$0xf]
  %v33 = vld [vmem:[%s0 + $0x30] sm:$0xf]
  %v34 = vld [vmem:[%s0 + $0x34] sm:$0xf]
  %v35 = vld [vmem:[%s0 + $0x38] sm:$0xf]
  %v36 = vld [vmem:[%s0 + $0x3c] sm:$0xf]
  %v37 = vld [vmem:[%s0 + $0x40] sm:$0xf]
  %v38 = vld [vmem:[%s0 + $0x44] sm:$0xf]
  %v39 = vld [vmem:[%s0 + $0x48] sm:$0xf]
  %v40 = vld [vmem:[%s0 + $0x4c] sm:$0xf]
  %v41 = vld [vmem:[%s0 + $0x50] sm:$0xf]
  %v42 = vld [vmem:[%s0 + $0x54] sm:$0xf]
  %v43 = vld [vmem:[%s0 + $0x58] sm:$0xf]
  %v44 = vld [vmem:[%s0 + $0x5c] sm:$0xf]
  %v45 = vld [vmem:[%s0 + $0x60] sm:$0xf]
  %v46 = vld [vmem:[%s0 + $0x64] sm:$0xf]
  %v47 = vld [vmem:[%s0 + $0x68] sm:$0xf]
  %v48 = vld [vmem:[%s0 + $0x6c] sm:$0xf]
  %v49 = vld [vmem:[%s0 + $0x70] sm:$0xf]
  %v50 = vld [vmem:[%s0 + $0x74] sm:$0xf]
  %v51 = vld [vmem:[%s0 + $0x78] sm:$0xf]
  %v52 = vld [vmem:[%s0 + $0x7c] sm:$0xf]
  %v53 = vld [vmem:[%s0 + $0x80] sm:$0xf]
  %v54 = vld [vmem:[%s0 + $0x84] sm:$0xf]
  %v55 = vld [vmem:[%s0 + $0x88] sm:$0xf]
  %v56 = vld [vmem:[%s0 + $0x8c] sm:$0xf]
  %v57 = vld [vmem:[%s0 + $0x90] sm:$0xf]
  %v58 = vld [vmem:[%s0 + $0x94] sm:$0xf]
  %v59 = vld [vmem:[%s0 + $0x98] sm:$0xf]
  %v60 = vld [vmem:[%s0 + $0x9c] sm:$0xf]
  %v61 = vld [vmem:[%s0 + $0xa0] sm:$0xf]
  %v62 = vld [vmem:[%s0 + $0xa4] sm:$0xf]
  %v63 = vld [vmem:[%s0 + $0xa8] sm:$0xf]
  %v64 = vld [vmem:[%s0 + $0xac] sm:$0xf]
  %v65 = vld [vmem:[%s0 + $0xb0] sm:$0xf]
  %v66 = vld [vmem:[%s0 + $0xb4] sm:$0xf]
  %v67 = vld [vmem:[%s0 + $0xb8] sm:$0xf]
  %v68 = vld [vmem:[%s0 + $0xbc] sm:$0xf]
  %v69 = vld [vmem:[%s0 + $0xc0] sm:$0xf]
  %v70 = vld [vmem:[%s0 + $0xc4] sm:$0xf]
  %v71 = vld [vmem:[%s0 + $0xc8] sm:$0xf]
  %v72 = vld [vmem:[%s0 + $0xcc] sm:$0xf]
  %v73 = vld [vmem:[%s0 + $0xd0] sm:$0xf]
  %v74 = vld [vmem:[%s0 + $0xd4] sm:$0xf]
  %v75 = vld [vmem:[%s2] sm:$0xff]
  %v76 = vld [vmem:[%s2 + $0x8] sm:$0xff]
  %v77 = vld [vmem:[%s2 + $0x10] sm:$0xff]
  %79 = vset.pattern.permute.xlu0 0
  %80 = vperm.xlu0 %79, %v75
  %v81 = vpop.permute.xlu0 %80
  %84 = vset.pattern.permute.xlu0 0
  %85 = vperm.xlu0 %84, %v76
  %v86 = vpop.permute.xlu0 %85
  %89 = vset.pattern.permute.xlu0 0
  %90 = vperm.xlu0 %89, %v77
  %v91 = vpop.permute.xlu0 %90
  %v99 = vunpack.c.l.b16 %v15
  %v100 = vunpack.c.h.b16 %v15
  %v101 = vunpack.c.l.b16 %v16
  %v102 = vunpack.c.h.b16 %v16
  %v103 = vunpack.c.l.b16 %v17
  %v104 = vunpack.c.h.b16 %v17
  %v105 = vunpack.c.l.b16 %v18
  %v106 = vunpack.c.h.b16 %v18
  %v107 = vunpack.c.l.b16 %v19
  %v108 = vunpack.c.h.b16 %v19
  %v109 = vunpack.c.l.b16 %v20
  %v110 = vunpack.c.h.b16 %v20
  %v111 = vpack.c.b16 %v103, %v99
  %v112 = vpack.c.b16 %v104, %v100
  %v113 = vpack.c.b16 %v105, %v101
  %v114 = vpack.c.b16 %v106, %v102
  %v115 = vpack.c.b16 %v107, %v107
  %v116 = vpack.c.b16 %v108, %v108
  %v117 = vpack.c.b16 %v109, %v109
  %v118 = vpack.c.b16 %v110, %v110
  %v179 = vunpack.c.l.b16 %v21
  %v180 = vunpack.c.l.b16 %v22
  %v181 = vunpack.c.l.b16 %v23
  %v182 = vunpack.c.l.b16 %v24
  %v183 = vunpack.c.l.b16 %v25
  %v184 = vunpack.c.l.b16 %v26
  %v185 = vunpack.c.l.b16 %v27
  %v186 = vunpack.c.l.b16 %v28
  %v187 = vunpack.c.l.b16 %v29
  %v188 = vunpack.c.l.b16 %v30
  %v189 = vunpack.c.l.b16 %v31
  %v190 = vunpack.c.l.b16 %v32
  %v191 = vunpack.c.l.b16 %v33
  %v192 = vunpack.c.l.b16 %v34
  %v193 = vunpack.c.l.b16 %v35
  %v194 = vunpack.c.l.b16 %v36
  %v195 = vunpack.c.l.b16 %v37
  %v196 = vunpack.c.l.b16 %v38
  %v197 = vunpack.c.l.b16 %v39
  %v198 = vunpack.c.l.b16 %v40
  %v199 = vunpack.c.l.b16 %v41
  %v200 = vunpack.c.l.b16 %v42
  %v201 = vunpack.c.l.b16 %v43
  %v202 = vunpack.c.l.b16 %v44
  %v203 = vunpack.c.l.b16 %v45
  %v204 = vunpack.c.l.b16 %v46
  %v205 = vunpack.c.l.b16 %v47
  %v206 = vunpack.c.l.b16 %v48
  %v207 = vunpack.c.l.b16 %v49
  %v208 = vunpack.c.l.b16 %v50
  %v209 = vunpack.c.l.b16 %v51
  %v210 = vunpack.c.l.b16 %v52
  %v211 = vunpack.c.l.b16 %v53
  %v212 = vunpack.c.l.b16 %v54
  %v213 = vunpack.c.l.b16 %v55
  %v214 = vunpack.c.l.b16 %v56
  %v215 = vunpack.c.l.b16 %v57
  %v216 = vunpack.c.l.b16 %v58
  %v217 = vunpack.c.l.b16 %v59
  %v218 = vunpack.c.l.b16 %v60
  %v219 = vunpack.c.l.b16 %v61
  %v220 = vunpack.c.l.b16 %v62
  %v221 = vunpack.c.l.b16 %v63
  %v222 = vunpack.c.l.b16 %v64
  %v223 = vunpack.c.l.b16 %v65
  %v224 = vunpack.c.l.b16 %v66
  %v225 = vunpack.c.l.b16 %v67
  %v226 = vunpack.c.l.b16 %v68
  %v227 = vunpack.c.l.b16 %v69
  %v228 = vunpack.c.l.b16 %v70
  %v229 = vunpack.c.l.b16 %v71
  %v230 = vunpack.c.l.b16 %v72
  %v231 = vunpack.c.l.b16 %v73
  %v232 = vunpack.c.l.b16 %v74
  %v233 = vpack.c.b16 %v180, %v179
  %v234 = vpack.c.b16 %v182, %v181
  %v235 = vpack.c.b16 %v184, %v183
  %v236 = vpack.c.b16 %v186, %v185
  %v237 = vpack.c.b16 %v188, %v187
  %v238 = vpack.c.b16 %v190, %v189
  %v239 = vpack.c.b16 %v192, %v191
  %v240 = vpack.c.b16 %v194, %v193
  %v241 = vpack.c.b16 %v196, %v195
  %v242 = vpack.c.b16 %v198, %v197
  %v243 = vpack.c.b16 %v200, %v199
  %v244 = vpack.c.b16 %v202, %v201
  %v245 = vpack.c.b16 %v204, %v203
  %v246 = vpack.c.b16 %v206, %v205
  %v247 = vpack.c.b16 %v208, %v207
  %v248 = vpack.c.b16 %v210, %v209
  %v249 = vpack.c.b16 %v212, %v211
  %v250 = vpack.c.b16 %v214, %v213
  %v251 = vpack.c.b16 %v216, %v215
  %v252 = vpack.c.b16 %v218, %v217
  %v253 = vpack.c.b16 %v220, %v219
  %v254 = vpack.c.b16 %v222, %v221
  %v255 = vpack.c.b16 %v224, %v223
  %v256 = vpack.c.b16 %v226, %v225
  %v257 = vpack.c.b16 %v228, %v227
  %v258 = vpack.c.b16 %v230, %v229
  %v259 = vpack.c.b16 %v232, %v231
  %vm287 = vcmask 392192
  %v289 = vsel %vm287, %v114, 0
  %v292 = vsel %vm287, %v118, 0
  %294 = vmatpush.bf16.msra.mxu0 %v240
  %295 = vmatpush.bf16.msra.mxu0 %v239
  %296 = vmatpush.bf16.msra.mxu0 %v238
  %297 = vmatpush.bf16.msra.mxu0 %v237
  %298 = vmatpush.bf16.msra.mxu0 %v236
  %299 = vmatpush.bf16.msra.mxu0 %v235
  %300 = vmatpush.bf16.msra.mxu0 %v234
  %301 = vmatpush.bf16.msra.mxu0 %v233
  %302 = vmatmul.bf16.gmra.mxu0 %v111
  %v303 = vpop.f32.mrf.mxu0
  %v304 = vadd.f32 %v81, %v303
  %v305 = vpop.f32.mrf.mxu0
  %v306 = vadd.f32 %v86, %v305
  %307 = vmatmul.bf16.gmra.mxu0 %v115
  %v308 = vpop.f32.mrf.mxu0
  %v309 = vadd.f32 %v91, %v308
  %v310 = vpop.f32.mrf.mxu0
  %311 = vdwg.mxu0
  %312 = vmatpush.bf16.msra.mxu0 %v248
  %313 = vmatpush.bf16.msra.mxu0 %v247
  %314 = vmatpush.bf16.msra.mxu0 %v246
  %315 = vmatpush.bf16.msra.mxu0 %v245
  %316 = vmatpush.bf16.msra.mxu0 %v244
  %317 = vmatpush.bf16.msra.mxu0 %v243
  %318 = vmatpush.bf16.msra.mxu0 %v242
  %319 = vmatpush.bf16.msra.mxu0 %v241
  %320 = vmatmul.bf16.gmra.mxu0 %v112
  %v321 = vpop.f32.mrf.mxu0
  %v322 = vadd.f32 %v304, %v321
  %v323 = vpop.f32.mrf.mxu0
  %v324 = vadd.f32 %v306, %v323
  %325 = vmatmul.bf16.gmra.mxu0 %v116
  %v326 = vpop.f32.mrf.mxu0
  %v327 = vadd.f32 %v309, %v326
  %v328 = vpop.f32.mrf.mxu0
  %329 = vdwg.mxu0
  %330 = vmatpush.bf16.msra.mxu0 %v256
  %331 = vmatpush.bf16.msra.mxu0 %v255
  %332 = vmatpush.bf16.msra.mxu0 %v254
  %333 = vmatpush.bf16.msra.mxu0 %v253
  %334 = vmatpush.bf16.msra.mxu0 %v252
  %335 = vmatpush.bf16.msra.mxu0 %v251
  %336 = vmatpush.bf16.msra.mxu0 %v250
  %337 = vmatpush.bf16.msra.mxu0 %v249
  %338 = vmatmul.bf16.gmra.mxu0 %v113
  %v339 = vpop.f32.mrf.mxu0
  %v340 = vadd.f32 %v322, %v339
  %v341 = vpop.f32.mrf.mxu0
  %v342 = vadd.f32 %v324, %v341
  %343 = vmatmul.bf16.gmra.mxu0 %v117
  %v344 = vpop.f32.mrf.mxu0
  %v345 = vadd.f32 %v327, %v344
  %v346 = vpop.f32.mrf.mxu0
  %347 = vdwg.mxu0
  %348 = vmatpush.bf16.msra.mxu0 0
  %349 = vmatpush.bf16.msra.mxu0 0
  %350 = vmatpush.bf16.msra.mxu0 0
  %351 = vmatpush.bf16.msra.mxu0 0
  %352 = vmatpush.bf16.msra.mxu0 0
  %353 = vmatpush.bf16.msra.mxu0 %v259
  %354 = vmatpush.bf16.msra.mxu0 %v258
  %355 = vmatpush.bf16.msra.mxu0 %v257
  %356 = vmatmul.bf16.gmra.mxu0 %v289
  %v357 = vpop.f32.mrf.mxu0
  %v358 = vadd.f32 %v340, %v357
  %v359 = vpop.f32.mrf.mxu0
  %v360 = vadd.f32 %v342, %v359
  %361 = vmatmul.bf16.gmra.mxu0 %v292
  %v362 = vpop.f32.mrf.mxu0
  %v363 = vadd.f32 %v345, %v362
  %v364 = vpop.f32.mrf.mxu0
  %365 = vdwg.mxu0
  %vm366 = vcmp.ge.f32.partialorder %v358, 0.0
  %vm367 = vcmp.ge.f32.partialorder %v360, 0.0
  %vm368 = vcmp.ge.f32.partialorder %v363, 0.0
  %v369 = vmul.f32 %v358, 0.01
  %v370 = vmul.f32 %v360, 0.01
  %v371 = vmul.f32 %v363, 0.01
  %v372 = vsel %vm366, %v358, %v369
  %v373 = vsel %vm367, %v360, %v370
  %v374 = vsel %vm368, %v363, %v371
  %vm375 = vcmask 31744
  %376 = vst.msk [vmem:[%s3] sm:$0xff] %vm375, %v372
  %377 = vst.msk [vmem:[%s3 + $0x8] sm:$0xff] %vm375, %v373
  %378 = vst.msk [vmem:[%s3 + $0x10] sm:$0xff] %vm375, %v374
  // Predicated region
  $region14: #{hourglass_forward.61} parent=0 // pred_check
    _
  $region15: #{hourglass_forward.61} parent=0 // pred_check_branch
    %380 = sbr.rel (0) target = $region17
  $region16: #{hourglass_forward.61} parent=0 // pred_region
    _
  $region17: #{hourglass_forward.61} parent=0 // pred_fallthru
    _
  // Predicated region
  $region18: #{hourglass_forward.61} parent=0 // pred_check
    _
  $region19: #{hourglass_forward.61} parent=0 // pred_check_branch
    %382 = sbr.rel (0) target = $region21
  $region20: #{hourglass_forward.61} parent=0 // pred_region
    _
  $region21: #{hourglass_forward.61} parent=0 // pred_fallthru
    _

// kernel: hourglass_forward.65
$region0: #{hourglass_forward.65}
  #allocation0 [shape = 'u32[]', space=smem, size = 0x4, offset = 0x4, fixed_abs, tag = 'smem constant byte address 0x4 - core index']
  #allocation1 [shape = 'u32[72,128]{1,0:T(1,128)}', space=vmem, size = 0x9000, scoped, tag = 'internal scratch']
  %s0 = inlined_call_operand.vmem [shape: f32[24,1,4], index: 0, kind: input, shape index: {}]
  %s1 = inlined_call_operand.vmem [shape: f32[24,1,4], index: 1, kind: input, shape index: {}]
  %s2 = inlined_call_operand.vmem [shape: f32[24,1,4], index: 2, kind: output, shape index: {}]
  %s3 = sld [smem:[#allocation0]]
  $region41: #{hourglass_forward.65} parent=0
    _
  %s5 = ssub.s32 1, %s3
  %s6 = scalar_select 0, %s5, %s3
  loop: start=0, step=1, limit=5
  $region2: #{hourglass_forward.65} parent=0 // loop_pre_header
    _
  $region3: #{hourglass_forward.65} parent=0 // loop_header
    %s8 = sphi 0, %s12
    %p9 = scmp.ge.s32.totalorder %s8, 5
    %s18 = sphi 0, %s20
    %s21 = sphi 0, %s18
    %s22 = sphi 0, %s21
    %s38 = sphi 0, %s22
    %s44 = sphi 0, %s46
    %s47 = sphi 0, %s44
    %s48 = sphi 0, %s47
    %s64 = sphi 0, %s48
    %s70 = sphi 0, %s72
    %s73 = sphi 0, %s70
    %s74 = sphi 0, %s73
    %s90 = sphi 0, %s74
  $region4: #{hourglass_forward.65} parent=0 // loop_header_branch
    %11 = sbr.rel (%p9) target = $region8
  $region5: #{hourglass_forward.65} parent=0 // loop_body
    %s13 = ssub.s32 %s8, 1
    %s14 = ssub.s32 %s8, 2
    %s15 = sadd.s32 %s8, 1
    %s16 = ssub.s32 %s8, %s15
    %p17 = scmp.eq.s32.totalorder %s16, 0
    %s19 = sadd.s32 %s18, 1
    %s20 = scalar_select %p17, %s18, %s19
    %p23 = pneg %p17
    %p24 = scmp.eq.s32.totalorder %s8, 2
    %p25 = por %p23, %p24
    %p26 = scmp.ne.s32.totalorder %s18, %s21
    %p27 = scmp.eq.s32.totalorder %s8, 0
    %p28 = por %p26, %p27
    %p29 = scmp.ne.s32.totalorder %s18, %s21
    %p30 = scmp.eq.s32.totalorder %s13, 2
    %p31 = por %p29, %p30
    %p32 = scmp.ne.s32.totalorder %s21, %s22
    %p33 = scmp.eq.s32.totalorder %s13, 0
    %p34 = por %p32, %p33
    %p35 = scmp.ne.s32.totalorder %s21, %s22
    %p36 = scmp.eq.s32.totalorder %s14, 2
    %p37 = por %p35, %p36
    %p39 = scmp.ne.s32.totalorder %s22, %s38
    %p40 = scmp.eq.s32.totalorder %s14, 0
    %p41 = por %p39, %p40
    %s42 = ssub.s32 %s8, %s15
    %p43 = scmp.eq.s32.totalorder %s42, 0
    %s45 = sadd.s32 %s44, 1
    %s46 = scalar_select %p43, %s44, %s45
    %p49 = pneg %p43
    %p50 = scmp.eq.s32.totalorder %s8, 2
    %p51 = por %p49, %p50
    %p52 = scmp.ne.s32.totalorder %s44, %s47
    %p53 = scmp.eq.s32.totalorder %s8, 0
    %p54 = por %p52, %p53
    %p55 = scmp.ne.s32.totalorder %s44, %s47
    %p56 = scmp.eq.s32.totalorder %s13, 2
    %p57 = por %p55, %p56
    %p58 = scmp.ne.s32.totalorder %s47, %s48
    %p59 = scmp.eq.s32.totalorder %s13, 0
    %p60 = por %p58, %p59
    %p61 = scmp.ne.s32.totalorder %s47, %s48
    %p62 = scmp.eq.s32.totalorder %s14, 2
    %p63 = por %p61, %p62
    %p65 = scmp.ne.s32.totalorder %s48, %s64
    %p66 = scmp.eq.s32.totalorder %s14, 0
    %p67 = por %p65, %p66
    %s68 = ssub.s32 %s8, %s15
    %p69 = scmp.eq.s32.totalorder %s68, 0
    %s71 = sadd.s32 %s70, 1
    %s72 = scalar_select %p69, %s70, %s71
    %p75 = pneg %p69
    %p76 = scmp.eq.s32.totalorder %s8, 2
    %p77 = por %p75, %p76
    %p78 = scmp.ne.s32.totalorder %s70, %s73
    %p79 = scmp.eq.s32.totalorder %s8, 0
    %p80 = por %p78, %p79
    %p81 = scmp.ne.s32.totalorder %s70, %s73
    %p82 = scmp.eq.s32.totalorder %s13, 2
    %p83 = por %p81, %p82
    %p84 = scmp.ne.s32.totalorder %s73, %s74
    %p85 = scmp.eq.s32.totalorder %s13, 0
    %p86 = por %p84, %p85
    %p87 = scmp.ne.s32.totalorder %s73, %s74
    %p88 = scmp.eq.s32.totalorder %s14, 2
    %p89 = por %p87, %p88
    %p91 = scmp.ne.s32.totalorder %s74, %s90
    %p92 = scmp.eq.s32.totalorder %s14, 0
    %p93 = por %p91, %p92
    %p94 = scmp.le.s32.totalorder 1, %s8
    %p95 = scmp.lt.s32.totalorder %s8, 4
    %p96 = pnand %p94, %p95
    %p97 = pneg %p96
    // Predicated region
    $region9: #{hourglass_forward.65} parent=5 // pred_check
      _
    $region10: #{hourglass_forward.65} parent=5 // pred_check_branch
      %99 = sbr.rel (%p96) target = $region12
    $region11: #{hourglass_forward.65} parent=5 // pred_region
      %s100 = ssub.s32 %s8, 1
    $region12: #{hourglass_forward.65} parent=5 // pred_fallthru
      _
    %p101 = scmp.lt.s32.totalorder %s8, 3
    // Predicated region
    $region13: #{hourglass_forward.65} parent=5 // pred_check
      %p102 = pneg %p101
    $region14: #{hourglass_forward.65} parent=5 // pred_check_branch
      %104 = sbr.rel (%p102) target = $region16
    $region15: #{hourglass_forward.65} parent=5 // pred_region
      // Predicated region
      $region17: #{hourglass_forward.65} parent=15 // pred_check
        %p105 = pneg %p28
      $region18: #{hourglass_forward.65} parent=15 // pred_check_branch
        %107 = sbr.rel (%p105) target = $region20
      $region19: #{hourglass_forward.65} parent=15 // pred_region
        %s108 = smul.u32 8, %s8
        %p109 = scmp.lt.s32.totalorder %s108, 23
        %s110 = scalar_select %p109, %s108, 23
        %s111 = scalar_lea.vmem %s0, %s110
        %s112 = smul.u32 8, %s8
      $region20: #{hourglass_forward.65} parent=15 // pred_fallthru
        _
      // Predicated region
      $region21: #{hourglass_forward.65} parent=15 // pred_check
        %p113 = pneg %p54
      $region22: #{hourglass_forward.65} parent=15 // pred_check_branch
        %115 = sbr.rel (%p113) target = $region24
      $region23: #{hourglass_forward.65} parent=15 // pred_region
        %s116 = smul.u32 8, %s8
        %p117 = scmp.lt.s32.totalorder %s116, 23
        %s118 = scalar_select %p117, %s116, 23
        %s119 = scalar_lea.vmem %s1, %s118
        %s120 = smul.u32 8, %s8
      $region24: #{hourglass_forward.65} parent=15 // pred_fallthru
        _
    $region16: #{hourglass_forward.65} parent=5 // pred_fallthru
      _
    %p121 = scmp.le.s32.totalorder 1, %s8
    %p122 = scmp.lt.s32.totalorder %s8, 4
    %p123 = pnand %p121, %p122
    %p124 = pneg %p123
    // Predicated region
    $region25: #{hourglass_forward.65} parent=5 // pred_check
      _
    $region26: #{hourglass_forward.65} parent=5 // pred_check_branch
      %126 = sbr.rel (%p123) target = $region28
    $region27: #{hourglass_forward.65} parent=5 // pred_region
      %s127 = ssub.s32 %s8, 1
      %s128 = smul.u32 8, %s13
      %p129 = scmp.lt.s32.totalorder %s128, 23
      %s130 = scalar_select %p129, %s128, 23
      %s131 = scalar_lea.vmem %s0, %s130
      %p132 = pneg %p34
      %p133 = pneg %p31
      %s134 = smul.u32 8, %s13
      %p135 = scmp.lt.s32.totalorder %s134, 23
      %s136 = scalar_select %p135, %s134, 23
      %s137 = scalar_lea.vmem %s1, %s136
      %p138 = pneg %p60
      %p139 = pneg %p57
      %p140 = pneg %p86
      %p141 = pneg %p83
      %s142 = smul.u32 8, %s13
      %p143 = scmp.lt.s32.totalorder %s142, 23
      %s144 = scalar_select %p143, %s142, 23
      %s145 = scalar_lea.vmem %s2, %s144
      %s146 = smul.u32 8, %s13
      %p147 = scmp.lt.s32.totalorder %s146, 23
      %s148 = scalar_select %p147, %s146, 23
      %s149 = scalar_lea.vmem %s0, %s148
      %s150 = smul.u32 8, %s13
      %s151 = smul.u32 8, %s13
      %p152 = scmp.lt.s32.totalorder %s151, 23
      %s153 = scalar_select %p152, %s151, 23
      %s154 = scalar_lea.vmem %s1, %s153
      %s155 = smul.u32 8, %s13
      %s156 = smul.u32 8, %s13
      %p157 = scmp.lt.s32.totalorder %s156, 23
      %s158 = scalar_select %p157, %s156, 23
      %s159 = scalar_lea.vmem %s2, %s158
      %s160 = smul.u32 8, %s13
      %v161 = vld [vmem:[%s149] sm:$0x1]
      %v162 = vld [vmem:[%s149 + $0x1] sm:$0x1]
      %v163 = vld [vmem:[%s149 + $0x2] sm:$0x1]
      %v164 = vld [vmem:[%s149 + $0x3] sm:$0x1]
      %v165 = vld [vmem:[%s149 + $0x4] sm:$0x1]
      %v166 = vld [vmem:[%s149 + $0x5] sm:$0x1]
      %v167 = vld [vmem:[%s149 + $0x6] sm:$0x1]
      %v168 = vld [vmem:[%s149 + $0x7] sm:$0x1]
      %v169 = vsub.f32 0.0, %v161
      %v170 = vsub.f32 0.0, %v162
      %v171 = vsub.f32 0.0, %v163
      %v172 = vsub.f32 0.0, %v164
      %v173 = vsub.f32 0.0, %v165
      %v174 = vsub.f32 0.0, %v166
      %v175 = vsub.f32 0.0, %v167
      %v176 = vsub.f32 0.0, %v168
      %v177 = vmul.f32 %v169, 1.442695
      %v178 = vpow.pop %v177
      %v179 = vmul.f32 %v170, 1.442695
      %v180 = vpow.pop %v179
      %v181 = vmul.f32 %v171, 1.442695
      %v182 = vpow.pop %v181
      %v183 = vmul.f32 %v172, 1.442695
      %v184 = vpow.pop %v183
      %v185 = vmul.f32 %v173, 1.442695
      %v186 = vpow.pop %v185
      %v187 = vmul.f32 %v174, 1.442695
      %v188 = vpow.pop %v187
      %v189 = vmul.f32 %v175, 1.442695
      %v190 = vpow.pop %v189
      %v191 = vmul.f32 %v176, 1.442695
      %v192 = vpow.pop %v191
      %v193 = vadd.f32 %v178, 1.0
      %v194 = vadd.f32 %v180, 1.0
      %v195 = vadd.f32 %v182, 1.0
      %v196 = vadd.f32 %v184, 1.0
      %v197 = vadd.f32 %v186, 1.0
      %v198 = vadd.f32 %v188, 1.0
      %v199 = vadd.f32 %v190, 1.0
      %v200 = vadd.f32 %v192, 1.0
      %v201 = vrcp.pop %v193
      %v202 = vmul.f32 %v193, %v201
      %v203 = vsub.f32 1.0, %v202
      %v204 = vmul.f32 %v201, %v203
      %v205 = vadd.f32 %v201, %v204
      %vm206 = vweird.f32 %v193
      %vm207 = vweird.f32 %v201
      %vm208 = vmor %vm206, %vm207
      %v209 = vsel %vm208, %v201, %v205
      %v210 = vand.u32 2147483647, %v193
      %vm211 = vcmp.eq.f32.partialorder %v210, 8.507059e+37
      %v212 = vand.u32 %v193, 2147483648
      %v213 = vor.u32 1.1754944e-38, %v212
      %v214 = vsel %vm211, %v213, %v209
      %v215 = vmul.f32 1.0, %v214
      %v216 = vrcp.pop %v194
      %v217 = vmul.f32 %v194, %v216
      %v218 = vsub.f32 1.0, %v217
      %v219 = vmul.f32 %v216, %v218
      %v220 = vadd.f32 %v216, %v219
      %vm221 = vweird.f32 %v194
      %vm222 = vweird.f32 %v216
      %vm223 = vmor %vm221, %vm222
      %v224 = vsel %vm223, %v216, %v220
      %v225 = vand.u32 2147483647, %v194
      %vm226 = vcmp.eq.f32.partialorder %v225, 8.507059e+37
      %v227 = vand.u32 %v194, 2147483648
      %v228 = vor.u32 1.1754944e-38, %v227
      %v229 = vsel %vm226, %v228, %v224
      %v230 = vmul.f32 1.0, %v229
      %v231 = vrcp.pop %v195
      %v232 = vmul.f32 %v195, %v231
      %v233 = vsub.f32 1.0, %v232
      %v234 = vmul.f32 %v231, %v233
      %v235 = vadd.f32 %v231, %v234
      %vm236 = vweird.f32 %v195
      %vm237 = vweird.f32 %v231
      %vm238 = vmor %vm236, %vm237
      %v239 = vsel %vm238, %v231, %v235
      %v240 = vand.u32 2147483647, %v195
      %vm241 = vcmp.eq.f32.partialorder %v240, 8.507059e+37
      %v242 = vand.u32 %v195, 2147483648
      %v243 = vor.u32 1.1754944e-38, %v242
      %v244 = vsel %vm241, %v243, %v239
      %v245 = vmul.f32 1.0, %v244
      %v246 = vrcp.pop %v196
      %v247 = vmul.f32 %v196, %v246
      %v248 = vsub.f32 1.0, %v247
      %v249 = vmul.f32 %v246, %v248
      %v250 = vadd.f32 %v246, %v249
      %vm251 = vweird.f32 %v196
      %vm252 = vweird.f32 %v246
      %vm253 = vmor %vm251, %vm252
      %v254 = vsel %vm253, %v246, %v250
      %v255 = vand.u32 2147483647, %v196
      %vm256 = vcmp.eq.f32.partialorder %v255, 8.507059e+37
      %v257 = vand.u32 %v196, 2147483648
      %v258 = vor.u32 1.1754944e-38, %v257
      %v259 = vsel %vm256, %v258, %v254
      %v260 = vmul.f32 1.0, %v259
      %v261 = vrcp.pop %v197
      %v262 = vmul.f32 %v197, %v261
      %v263 = vsub.f32 1.0, %v262
      %v264 = vmul.f32 %v261, %v263
      %v265 = vadd.f32 %v261, %v264
      %vm266 = vweird.f32 %v197
      %vm267 = vweird.f32 %v261
      %vm268 = vmor %vm266, %vm267
      %v269 = vsel %vm268, %v261, %v265
      %v270 = vand.u32 2147483647, %v197
      %vm271 = vcmp.eq.f32.partialorder %v270, 8.507059e+37
      %v272 = vand.u32 %v197, 2147483648
      %v273 = vor.u32 1.1754944e-38, %v272
      %v274 = vsel %vm271, %v273, %v269
      %v275 = vmul.f32 1.0, %v274
      %v276 = vrcp.pop %v198
      %v277 = vmul.f32 %v198, %v276
      %v278 = vsub.f32 1.0, %v277
      %v279 = vmul.f32 %v276, %v278
      %v280 = vadd.f32 %v276, %v279
      %vm281 = vweird.f32 %v198
      %vm282 = vweird.f32 %v276
      %vm283 = vmor %vm281, %vm282
      %v284 = vsel %vm283, %v276, %v280
      %v285 = vand.u32 2147483647, %v198
      %vm286 = vcmp.eq.f32.partialorder %v285, 8.507059e+37
      %v287 = vand.u32 %v198, 2147483648
      %v288 = vor.u32 1.1754944e-38, %v287
      %v289 = vsel %vm286, %v288, %v284
      %v290 = vmul.f32 1.0, %v289
      %v291 = vrcp.pop %v199
      %v292 = vmul.f32 %v199, %v291
      %v293 = vsub.f32 1.0, %v292
      %v294 = vmul.f32 %v291, %v293
      %v295 = vadd.f32 %v291, %v294
      %vm296 = vweird.f32 %v199
      %vm297 = vweird.f32 %v291
      %vm298 = vmor %vm296, %vm297
      %v299 = vsel %vm298, %v291, %v295
      %v300 = vand.u32 2147483647, %v199
      %vm301 = vcmp.eq.f32.partialorder %v300, 8.507059e+37
      %v302 = vand.u32 %v199, 2147483648
      %v303 = vor.u32 1.1754944e-38, %v302
      %v304 = vsel %vm301, %v303, %v299
      %v305 = vmul.f32 1.0, %v304
      %v306 = vrcp.pop %v200
      %v307 = vmul.f32 %v200, %v306
      %v308 = vsub.f32 1.0, %v307
      %v309 = vmul.f32 %v306, %v308
      %v310 = vadd.f32 %v306, %v309
      %vm311 = vweird.f32 %v200
      %vm312 = vweird.f32 %v306
      %vm313 = vmor %vm311, %vm312
      %v314 = vsel %vm313, %v306, %v310
      %v315 = vand.u32 2147483647, %v200
      %vm316 = vcmp.eq.f32.partialorder %v315, 8.507059e+37
      %v317 = vand.u32 %v200, 2147483648
      %v318 = vor.u32 1.1754944e-38, %v317
      %v319 = vsel %vm316, %v318, %v314
      %v320 = vmul.f32 1.0, %v319
      %v321 = vld [vmem:[%s154] sm:$0x1]
      %v322 = vld [vmem:[%s154 + $0x1] sm:$0x1]
      %v323 = vld [vmem:[%s154 + $0x2] sm:$0x1]
      %v324 = vld [vmem:[%s154 + $0x3] sm:$0x1]
      %v325 = vld [vmem:[%s154 + $0x4] sm:$0x1]
      %v326 = vld [vmem:[%s154 + $0x5] sm:$0x1]
      %v327 = vld [vmem:[%s154 + $0x6] sm:$0x1]
      %v328 = vld [vmem:[%s154 + $0x7] sm:$0x1]
      %v329 = vmul.f32 %v215, %v321
      %v330 = vmul.f32 %v230, %v322
      %v331 = vmul.f32 %v245, %v323
      %v332 = vmul.f32 %v260, %v324
      %v333 = vmul.f32 %v275, %v325
      %v334 = vmul.f32 %v290, %v326
      %v335 = vmul.f32 %v305, %v327
      %v336 = vmul.f32 %v320, %v328
      %vm337 = vcmask 24576
      %338 = vst.msk [vmem:[%s159] sm:$0x1] %vm337, %v329
      %339 = vst.msk [vmem:[%s159 + $0x1] sm:$0x1] %vm337, %v330
      %340 = vst.msk [vmem:[%s159 + $0x2] sm:$0x1] %vm337, %v331
      %341 = vst.msk [vmem:[%s159 + $0x3] sm:$0x1] %vm337, %v332
      %342 = vst.msk [vmem:[%s159 + $0x4] sm:$0x1] %vm337, %v333
      %343 = vst.msk [vmem:[%s159 + $0x5] sm:$0x1] %vm337, %v334
      %344 = vst.msk [vmem:[%s159 + $0x6] sm:$0x1] %vm337, %v335
      %345 = vst.msk [vmem:[%s159 + $0x7] sm:$0x1] %vm337, %v336
      %s346 = smul.u32 8, %s13
      %p347 = scmp.lt.s32.totalorder %s346, 23
      %s348 = scalar_select %p347, %s346, 23
      %s349 = scalar_lea.vmem %s2, %s348
      // Predicated region
      $region29: #{hourglass_forward.65} parent=27 // pred_check
        %p350 = pneg %p83
      $region30: #{hourglass_forward.65} parent=27 // pred_check_branch
        %352 = sbr.rel (%p350) target = $region32
      $region31: #{hourglass_forward.65} parent=27 // pred_region
        %s353 = smul.u32 8, %s13
      $region32: #{hourglass_forward.65} parent=27 // pred_fallthru
        _
    $region28: #{hourglass_forward.65} parent=5 // pred_fallthru
      _
    %p354 = scmp.le.s32.totalorder 2, %s8
    // Predicated region
    $region33: #{hourglass_forward.65} parent=5 // pred_check
      %p355 = pneg %p354
    $region34: #{hourglass_forward.65} parent=5 // pred_check_branch
      %357 = sbr.rel (%p355) target = $region36
    $region35: #{hourglass_forward.65} parent=5 // pred_region
      %s358 = ssub.s32 %s8, 2
      // Predicated region
      $region37: #{hourglass_forward.65} parent=35 // pred_check
        %p359 = pneg %p89
      $region38: #{hourglass_forward.65} parent=35 // pred_check_branch
        %361 = sbr.rel (%p359) target = $region40
      $region39: #{hourglass_forward.65} parent=35 // pred_region
        %s362 = smul.u32 8, %s14
        %p363 = scmp.lt.s32.totalorder %s362, 23
        %s364 = scalar_select %p363, %s362, 23
        %s365 = scalar_lea.vmem %s2, %s364
      $region40: #{hourglass_forward.65} parent=35 // pred_fallthru
        _
    $region36: #{hourglass_forward.65} parent=5 // pred_fallthru
      _
  $region6: #{hourglass_forward.65} parent=0 // loop_footer
    %s12 = sadd.s32 1, %s8
  $region7: #{hourglass_forward.65} parent=0 // loop_footer_branch
    %7 = sbr.rel target = $region3
  $region8: #{hourglass_forward.65} parent=0 // loop_exit
    _

// kernel: hourglass_forward.62
$region0: #{hourglass_forward.62}
  #allocation0 [shape = 'u32[]', space=smem, size = 0x4, offset = 0x4, fixed_abs, tag = 'smem constant byte address 0x4 - core index']
  #allocation1 [shape = 'u32[72,128]{1,0:T(1,128)}', space=vmem, size = 0x9000, scoped, tag = 'internal scratch']
  %s0 = inlined_call_operand.vmem [shape: bf16[648,4], index: 0, kind: input, shape index: {}]
  %s1 = inlined_call_operand.vmem [shape: bf16[24,648], index: 1, kind: input, shape index: {}]
  %s2 = inlined_call_operand.vmem [shape: f32[24,1], index: 2, kind: input, shape index: {}]
  %s3 = inlined_call_operand.vmem [shape: f32[24,4], index: 3, kind: output, shape index: {}]
  %s4 = sld [smem:[#allocation0]]
  $region22: #{hourglass_forward.62} parent=0
    _
  %s6 = ssub.s32 1, %s4
  %s7 = scalar_select 0, %s6, %s4
  // Predicated region
  $region2: #{hourglass_forward.62} parent=0 // pred_check
    _
  $region3: #{hourglass_forward.62} parent=0 // pred_check_branch
    %9 = sbr.rel (0) target = $region5
  $region4: #{hourglass_forward.62} parent=0 // pred_region
    _
  $region5: #{hourglass_forward.62} parent=0 // pred_fallthru
    _
  // Predicated region
  $region6: #{hourglass_forward.62} parent=0 // pred_check
    _
  $region7: #{hourglass_forward.62} parent=0 // pred_check_branch
    %11 = sbr.rel (0) target = $region9
  $region8: #{hourglass_forward.62} parent=0 // pred_region
    _
  $region9: #{hourglass_forward.62} parent=0 // pred_fallthru
    _
  // Predicated region
  $region10: #{hourglass_forward.62} parent=0 // pred_check
    _
  $region11: #{hourglass_forward.62} parent=0 // pred_check_branch
    %13 = sbr.rel (0) target = $region13
  $region12: #{hourglass_forward.62} parent=0 // pred_region
    _
  $region13: #{hourglass_forward.62} parent=0 // pred_fallthru
    _
  %v15 = vld [vmem:[%s1] sm:$0xff]
  %v16 = vld [vmem:[%s1 + $0x8] sm:$0xff]
  %v17 = vld [vmem:[%s1 + $0x10] sm:$0xff]
  %v18 = vld [vmem:[%s1 + $0x18] sm:$0xff]
  %v19 = vld [vmem:[%s1 + $0x20] sm:$0xff]
  %v20 = vld [vmem:[%s1 + $0x28] sm:$0xff]
  %v21 = vld [vmem:[%s1 + $0x30] sm:$0xff]
  %v22 = vld [vmem:[%s1 + $0x38] sm:$0xff]
  %v23 = vld [vmem:[%s1 + $0x40] sm:$0xff]
  %v24 = vld [vmem:[%s0] sm:$0xf]
  %v25 = vld [vmem:[%s0 + $0x4] sm:$0xf]
  %v26 = vld [vmem:[%s0 + $0x8] sm:$0xf]
  %v27 = vld [vmem:[%s0 + $0xc] sm:$0xf]
  %v28 = vld [vmem:[%s0 + $0x10] sm:$0xf]
  %v29 = vld [vmem:[%s0 + $0x14] sm:$0xf]
  %v30 = vld [vmem:[%s0 + $0x18] sm:$0xf]
  %v31 = vld [vmem:[%s0 + $0x1c] sm:$0xf]
  %v32 = vld [vmem:[%s0 + $0x20] sm:$0xf]
  %v33 = vld [vmem:[%s0 + $0x24] sm:$0xf]
  %v34 = vld [vmem:[%s0 + $0x28] sm:$0xf]
  %v35 = vld [vmem:[%s0 + $0x2c] sm:$0xf]
  %v36 = vld [vmem:[%s0 + $0x30] sm:$0xf]
  %v37 = vld [vmem:[%s0 + $0x34] sm:$0xf]
  %v38 = vld [vmem:[%s0 + $0x38] sm:$0xf]
  %v39 = vld [vmem:[%s0 + $0x3c] sm:$0xf]
  %v40 = vld [vmem:[%s0 + $0x40] sm:$0xf]
  %v41 = vld [vmem:[%s0 + $0x44] sm:$0xf]
  %v42 = vld [vmem:[%s0 + $0x48] sm:$0xf]
  %v43 = vld [vmem:[%s0 + $0x4c] sm:$0xf]
  %v44 = vld [vmem:[%s0 + $0x50] sm:$0xf]
  %v45 = vld [vmem:[%s0 + $0x54] sm:$0xf]
  %v46 = vld [vmem:[%s0 + $0x58] sm:$0xf]
  %v47 = vld [vmem:[%s0 + $0x5c] sm:$0xf]
  %v48 = vld [vmem:[%s0 + $0x60] sm:$0xf]
  %v49 = vld [vmem:[%s0 + $0x64] sm:$0xf]
  %v50 = vld [vmem:[%s0 + $0x68] sm:$0xf]
  %v51 = vld [vmem:[%s0 + $0x6c] sm:$0xf]
  %v52 = vld [vmem:[%s0 + $0x70] sm:$0xf]
  %v53 = vld [vmem:[%s0 + $0x74] sm:$0xf]
  %v54 = vld [vmem:[%s0 + $0x78] sm:$0xf]
  %v55 = vld [vmem:[%s0 + $0x7c] sm:$0xf]
  %v56 = vld [vmem:[%s0 + $0x80] sm:$0xf]
  %v57 = vld [vmem:[%s0 + $0x84] sm:$0xf]
  %v58 = vld [vmem:[%s0 + $0x88] sm:$0xf]
  %v59 = vld [vmem:[%s0 + $0x8c] sm:$0xf]
  %v60 = vld [vmem:[%s0 + $0x90] sm:$0xf]
  %v61 = vld [vmem:[%s0 + $0x94] sm:$0xf]
  %v62 = vld [vmem:[%s0 + $0x98] sm:$0xf]
  %v63 = vld [vmem:[%s0 + $0x9c] sm:$0xf]
  %v64 = vld [vmem:[%s0 + $0xa0] sm:$0xf]
  %v65 = vld [vmem:[%s0 + $0xa4] sm:$0xf]
  %v66 = vld [vmem:[%s0 + $0xa8] sm:$0xf]
  %v67 = vld [vmem:[%s0 + $0xac] sm:$0xf]
  %v68 = vld [vmem:[%s0 + $0xb0] sm:$0xf]
  %v69 = vld [vmem:[%s0 + $0xb4] sm:$0xf]
  %v70 = vld [vmem:[%s0 + $0xb8] sm:$0xf]
  %v71 = vld [vmem:[%s0 + $0xbc] sm:$0xf]
  %v72 = vld [vmem:[%s0 + $0xc0] sm:$0xf]
  %v73 = vld [vmem:[%s0 + $0xc4] sm:$0xf]
  %v74 = vld [vmem:[%s0 + $0xc8] sm:$0xf]
  %v75 = vld [vmem:[%s0 + $0xcc] sm:$0xf]
  %v76 = vld [vmem:[%s0 + $0xd0] sm:$0xf]
  %v77 = vld [vmem:[%s0 + $0xd4] sm:$0xf]
  %v78 = vld [vmem:[%s0 + $0xd8] sm:$0xf]
  %v79 = vld [vmem:[%s0 + $0xdc] sm:$0xf]
  %v80 = vld [vmem:[%s0 + $0xe0] sm:$0xf]
  %v81 = vld [vmem:[%s0 + $0xe4] sm:$0xf]
  %v82 = vld [vmem:[%s0 + $0xe8] sm:$0xf]
  %v83 = vld [vmem:[%s0 + $0xec] sm:$0xf]
  %v84 = vld [vmem:[%s0 + $0xf0] sm:$0xf]
  %v85 = vld [vmem:[%s0 + $0xf4] sm:$0xf]
  %v86 = vld [vmem:[%s0 + $0xf8] sm:$0xf]
  %v87 = vld [vmem:[%s0 + $0xfc] sm:$0xf]
  %v88 = vld [vmem:[%s0 + $0x100] sm:$0xf]
  %v89 = vld [vmem:[%s0 + $0x104] sm:$0xf]
  %v90 = vld [vmem:[%s0 + $0x108] sm:$0xf]
  %v91 = vld [vmem:[%s0 + $0x10c] sm:$0xf]
  %v92 = vld [vmem:[%s0 + $0x110] sm:$0xf]
  %v93 = vld [vmem:[%s0 + $0x114] sm:$0xf]
  %v94 = vld [vmem:[%s0 + $0x118] sm:$0xf]
  %v95 = vld [vmem:[%s0 + $0x11c] sm:$0xf]
  %v96 = vld [vmem:[%s0 + $0x120] sm:$0xf]
  %v97 = vld [vmem:[%s0 + $0x124] sm:$0xf]
  %v98 = vld [vmem:[%s0 + $0x128] sm:$0xf]
  %v99 = vld [vmem:[%s0 + $0x12c] sm:$0xf]
  %v100 = vld [vmem:[%s0 + $0x130] sm:$0xf]
  %v101 = vld [vmem:[%s0 + $0x134] sm:$0xf]
  %v102 = vld [vmem:[%s0 + $0x138] sm:$0xf]
  %v103 = vld [vmem:[%s0 + $0x13c] sm:$0xf]
  %v104 = vld [vmem:[%s0 + $0x140] sm:$0xf]
  %v105 = vld [vmem:[%s2] sm:$0xff]
  %v106 = vld [vmem:[%s2 + $0x8] sm:$0xff]
  %v107 = vld [vmem:[%s2 + $0x10] sm:$0xff]
  %109 = vset.pattern.permute.xlu0 0
  %110 = vperm.xlu0 %109, %v105
  %v111 = vpop.permute.xlu0 %110
  %114 = vset.pattern.permute.xlu0 0
  %115 = vperm.xlu0 %114, %v106
  %v116 = vpop.permute.xlu0 %115
  %119 = vset.pattern.permute.xlu0 0
  %120 = vperm.xlu0 %119, %v107
  %v121 = vpop.permute.xlu0 %120
  %v132 = vunpack.c.l.b16 %v15
  %v133 = vunpack.c.h.b16 %v15
  %v134 = vunpack.c.l.b16 %v16
  %v135 = vunpack.c.h.b16 %v16
  %v136 = vunpack.c.l.b16 %v17
  %v137 = vunpack.c.h.b16 %v17
  %v138 = vunpack.c.l.b16 %v18
  %v139 = vunpack.c.h.b16 %v18
  %v140 = vunpack.c.l.b16 %v19
  %v141 = vunpack.c.h.b16 %v19
  %v142 = vunpack.c.l.b16 %v20
  %v143 = vunpack.c.h.b16 %v20
  %v144 = vunpack.c.l.b16 %v21
  %v145 = vunpack.c.h.b16 %v21
  %v146 = vunpack.c.l.b16 %v22
  %v147 = vunpack.c.h.b16 %v22
  %v148 = vunpack.c.l.b16 %v23
  %v149 = vunpack.c.h.b16 %v23
  %v150 = vpack.c.b16 %v138, %v132
  %v151 = vpack.c.b16 %v139, %v133
  %v152 = vpack.c.b16 %v140, %v134
  %v153 = vpack.c.b16 %v141, %v135
  %v154 = vpack.c.b16 %v142, %v136
  %v155 = vpack.c.b16 %v143, %v137
  %v156 = vpack.c.b16 %v144, %v144
  %v157 = vpack.c.b16 %v145, %v145
  %v158 = vpack.c.b16 %v146, %v146
  %v159 = vpack.c.b16 %v147, %v147
  %v160 = vpack.c.b16 %v148, %v148
  %v161 = vpack.c.b16 %v149, %v149
  %v253 = vunpack.c.l.b16 %v24
  %v254 = vunpack.c.l.b16 %v25
  %v255 = vunpack.c.l.b16 %v26
  %v256 = vunpack.c.l.b16 %v27
  %v257 = vunpack.c.l.b16 %v28
  %v258 = vunpack.c.l.b16 %v29
  %v259 = vunpack.c.l.b16 %v30
  %v260 = vunpack.c.l.b16 %v31
  %v261 = vunpack.c.l.b16 %v32
  %v262 = vunpack.c.l.b16 %v33
  %v263 = vunpack.c.l.b16 %v34
  %v264 = vunpack.c.l.b16 %v35
  %v265 = vunpack.c.l.b16 %v36
  %v266 = vunpack.c.l.b16 %v37
  %v267 = vunpack.c.l.b16 %v38
  %v268 = vunpack.c.l.b16 %v39
  %v269 = vunpack.c.l.b16 %v40
  %v270 = vunpack.c.l.b16 %v41
  %v271 = vunpack.c.l.b16 %v42
  %v272 = vunpack.c.l.b16 %v43
  %v273 = vunpack.c.l.b16 %v44
  %v274 = vunpack.c.l.b16 %v45
  %v275 = vunpack.c.l.b16 %v46
  %v276 = vunpack.c.l.b16 %v47
  %v277 = vunpack.c.l.b16 %v48
  %v278 = vunpack.c.l.b16 %v49
  %v279 = vunpack.c.l.b16 %v50
  %v280 = vunpack.c.l.b16 %v51
  %v281 = vunpack.c.l.b16 %v52
  %v282 = vunpack.c.l.b16 %v53
  %v283 = vunpack.c.l.b16 %v54
  %v284 = vunpack.c.l.b16 %v55
  %v285 = vunpack.c.l.b16 %v56
  %v286 = vunpack.c.l.b16 %v57
  %v287 = vunpack.c.l.b16 %v58
  %v288 = vunpack.c.l.b16 %v59
  %v289 = vunpack.c.l.b16 %v60
  %v290 = vunpack.c.l.b16 %v61
  %v291 = vunpack.c.l.b16 %v62
  %v292 = vunpack.c.l.b16 %v63
  %v293 = vunpack.c.l.b16 %v64
  %v294 = vunpack.c.l.b16 %v65
  %v295 = vunpack.c.l.b16 %v66
  %v296 = vunpack.c.l.b16 %v67
  %v297 = vunpack.c.l.b16 %v68
  %v298 = vunpack.c.l.b16 %v69
  %v299 = vunpack.c.l.b16 %v70
  %v300 = vunpack.c.l.b16 %v71
  %v301 = vunpack.c.l.b16 %v72
  %v302 = vunpack.c.l.b16 %v73
  %v303 = vunpack.c.l.b16 %v74
  %v304 = vunpack.c.l.b16 %v75
  %v305 = vunpack.c.l.b16 %v76
  %v306 = vunpack.c.l.b16 %v77
  %v307 = vunpack.c.l.b16 %v78
  %v308 = vunpack.c.l.b16 %v79
  %v309 = vunpack.c.l.b16 %v80
  %v310 = vunpack.c.l.b16 %v81
  %v311 = vunpack.c.l.b16 %v82
  %v312 = vunpack.c.l.b16 %v83
  %v313 = vunpack.c.l.b16 %v84
  %v314 = vunpack.c.l.b16 %v85
  %v315 = vunpack.c.l.b16 %v86
  %v316 = vunpack.c.l.b16 %v87
  %v317 = vunpack.c.l.b16 %v88
  %v318 = vunpack.c.l.b16 %v89
  %v319 = vunpack.c.l.b16 %v90
  %v320 = vunpack.c.l.b16 %v91
  %v321 = vunpack.c.l.b16 %v92
  %v322 = vunpack.c.l.b16 %v93
  %v323 = vunpack.c.l.b16 %v94
  %v324 = vunpack.c.l.b16 %v95
  %v325 = vunpack.c.l.b16 %v96
  %v326 = vunpack.c.l.b16 %v97
  %v327 = vunpack.c.l.b16 %v98
  %v328 = vunpack.c.l.b16 %v99
  %v329 = vunpack.c.l.b16 %v100
  %v330 = vunpack.c.l.b16 %v101
  %v331 = vunpack.c.l.b16 %v102
  %v332 = vunpack.c.l.b16 %v103
  %v333 = vunpack.c.l.b16 %v104
  %v334 = vpack.c.b16 %v254, %v253
  %v335 = vpack.c.b16 %v256, %v255
  %v336 = vpack.c.b16 %v258, %v257
  %v337 = vpack.c.b16 %v260, %v259
  %v338 = vpack.c.b16 %v262, %v261
  %v339 = vpack.c.b16 %v264, %v263
  %v340 = vpack.c.b16 %v266, %v265
  %v341 = vpack.c.b16 %v268, %v267
  %v342 = vpack.c.b16 %v270, %v269
  %v343 = vpack.c.b16 %v272, %v271
  %v344 = vpack.c.b16 %v274, %v273
  %v345 = vpack.c.b16 %v276, %v275
  %v346 = vpack.c.b16 %v278, %v277
  %v347 = vpack.c.b16 %v280, %v279
  %v348 = vpack.c.b16 %v282, %v281
  %v349 = vpack.c.b16 %v284, %v283
  %v350 = vpack.c.b16 %v286, %v285
  %v351 = vpack.c.b16 %v288, %v287
  %v352 = vpack.c.b16 %v290, %v289
  %v353 = vpack.c.b16 %v292, %v291
  %v354 = vpack.c.b16 %v294, %v293
  %v355 = vpack.c.b16 %v296, %v295
  %v356 = vpack.c.b16 %v298, %v297
  %v357 = vpack.c.b16 %v300, %v299
  %v358 = vpack.c.b16 %v302, %v301
  %v359 = vpack.c.b16 %v304, %v303
  %v360 = vpack.c.b16 %v306, %v305
  %v361 = vpack.c.b16 %v308, %v307
  %v362 = vpack.c.b16 %v310, %v309
  %v363 = vpack.c.b16 %v312, %v311
  %v364 = vpack.c.b16 %v314, %v313
  %v365 = vpack.c.b16 %v316, %v315
  %v366 = vpack.c.b16 %v318, %v317
  %v367 = vpack.c.b16 %v320, %v319
  %v368 = vpack.c.b16 %v322, %v321
  %v369 = vpack.c.b16 %v324, %v323
  %v370 = vpack.c.b16 %v326, %v325
  %v371 = vpack.c.b16 %v328, %v327
  %v372 = vpack.c.b16 %v330, %v329
  %v373 = vpack.c.b16 %v332, %v331
  %v374 = vpack.c.b16 %v333, %v333
  %vm415 = vcmask 64512
  %v417 = vsel %vm415, %v155, 0
  %v420 = vsel %vm415, %v161, 0
  %vm422 = vcmask 1043456
  %v424 = vsel %vm422, %v374, 0
  %426 = vmatpush.bf16.msra.mxu0 %v341
  %427 = vmatpush.bf16.msra.mxu0 %v340
  %428 = vmatpush.bf16.msra.mxu0 %v339
  %429 = vmatpush.bf16.msra.mxu0 %v338
  %430 = vmatpush.bf16.msra.mxu0 %v337
  %431 = vmatpush.bf16.msra.mxu0 %v336
  %432 = vmatpush.bf16.msra.mxu0 %v335
  %433 = vmatpush.bf16.msra.mxu0 %v334
  %434 = vmatmul.bf16.gmra.mxu0 %v150
  %v435 = vpop.f32.mrf.mxu0
  %v436 = vadd.f32 %v111, %v435
  %v437 = vpop.f32.mrf.mxu0
  %v438 = vadd.f32 %v116, %v437
  %439 = vmatmul.bf16.gmra.mxu0 %v156
  %v440 = vpop.f32.mrf.mxu0
  %v441 = vadd.f32 %v121, %v440
  %v442 = vpop.f32.mrf.mxu0
  %443 = vdwg.mxu0
  %444 = vmatpush.bf16.msra.mxu0 %v349
  %445 = vmatpush.bf16.msra.mxu0 %v348
  %446 = vmatpush.bf16.msra.mxu0 %v347
  %447 = vmatpush.bf16.msra.mxu0 %v346
  %448 = vmatpush.bf16.msra.mxu0 %v345
  %449 = vmatpush.bf16.msra.mxu0 %v344
  %450 = vmatpush.bf16.msra.mxu0 %v343
  %451 = vmatpush.bf16.msra.mxu0 %v342
  %452 = vmatmul.bf16.gmra.mxu0 %v151
  %v453 = vpop.f32.mrf.mxu0
  %v454 = vadd.f32 %v436, %v453
  %v455 = vpop.f32.mrf.mxu0
  %v456 = vadd.f32 %v438, %v455
  %457 = vmatmul.bf16.gmra.mxu0 %v157
  %v458 = vpop.f32.mrf.mxu0
  %v459 = vadd.f32 %v441, %v458
  %v460 = vpop.f32.mrf.mxu0
  %461 = vdwg.mxu0
  %462 = vmatpush.bf16.msra.mxu0 %v357
  %463 = vmatpush.bf16.msra.mxu0 %v356
  %464 = vmatpush.bf16.msra.mxu0 %v355
  %465 = vmatpush.bf16.msra.mxu0 %v354
  %466 = vmatpush.bf16.msra.mxu0 %v353
  %467 = vmatpush.bf16.msra.mxu0 %v352
  %468 = vmatpush.bf16.msra.mxu0 %v351
  %469 = vmatpush.bf16.msra.mxu0 %v350
  %470 = vmatmul.bf16.gmra.mxu0 %v152
  %v471 = vpop.f32.mrf.mxu0
  %v472 = vadd.f32 %v454, %v471
  %v473 = vpop.f32.mrf.mxu0
  %v474 = vadd.f32 %v456, %v473
  %475 = vmatmul.bf16.gmra.mxu0 %v158
  %v476 = vpop.f32.mrf.mxu0
  %v477 = vadd.f32 %v459, %v476
  %v478 = vpop.f32.mrf.mxu0
  %479 = vdwg.mxu0
  %480 = vmatpush.bf16.msra.mxu0 %v365
  %481 = vmatpush.bf16.msra.mxu0 %v364
  %482 = vmatpush.bf16.msra.mxu0 %v363
  %483 = vmatpush.bf16.msra.mxu0 %v362
  %484 = vmatpush.bf16.msra.mxu0 %v361
  %485 = vmatpush.bf16.msra.mxu0 %v360
  %486 = vmatpush.bf16.msra.mxu0 %v359
  %487 = vmatpush.bf16.msra.mxu0 %v358
  %488 = vmatmul.bf16.gmra.mxu0 %v153
  %v489 = vpop.f32.mrf.mxu0
  %v490 = vadd.f32 %v472, %v489
  %v491 = vpop.f32.mrf.mxu0
  %v492 = vadd.f32 %v474, %v491
  %493 = vmatmul.bf16.gmra.mxu0 %v159
  %v494 = vpop.f32.mrf.mxu0
  %v495 = vadd.f32 %v477, %v494
  %v496 = vpop.f32.mrf.mxu0
  %497 = vdwg.mxu0
  %498 = vmatpush.bf16.msra.mxu0 %v373
  %499 = vmatpush.bf16.msra.mxu0 %v372
  %500 = vmatpush.bf16.msra.mxu0 %v371
  %501 = vmatpush.bf16.msra.mxu0 %v370
  %502 = vmatpush.bf16.msra.mxu0 %v369
  %503 = vmatpush.bf16.msra.mxu0 %v368
  %504 = vmatpush.bf16.msra.mxu0 %v367
  %505 = vmatpush.bf16.msra.mxu0 %v366
  %506 = vmatmul.bf16.gmra.mxu0 %v154
  %v507 = vpop.f32.mrf.mxu0
  %v508 = vadd.f32 %v490, %v507
  %v509 = vpop.f32.mrf.mxu0
  %v510 = vadd.f32 %v492, %v509
  %511 = vmatmul.bf16.gmra.mxu0 %v160
  %v512 = vpop.f32.mrf.mxu0
  %v513 = vadd.f32 %v495, %v512
  %v514 = vpop.f32.mrf.mxu0
  %515 = vdwg.mxu0
  %516 = vmatpush.bf16.msra.mxu0 0
  %517 = vmatpush.bf16.msra.mxu0 0
  %518 = vmatpush.bf16.msra.mxu0 0
  %519 = vmatpush.bf16.msra.mxu0 0
  %520 = vmatpush.bf16.msra.mxu0 0
  %521 = vmatpush.bf16.msra.mxu0 0
  %522 = vmatpush.bf16.msra.mxu0 0
  %523 = vmatpush.bf16.msra.mxu0 %v424
  %524 = vmatmul.bf16.gmra.mxu0 %v417
  %v525 = vpop.f32.mrf.mxu0
  %v526 = vadd.f32 %v508, %v525
  %v527 = vpop.f32.mrf.mxu0
  %v528 = vadd.f32 %v510, %v527
  %529 = vmatmul.bf16.gmra.mxu0 %v420
  %v530 = vpop.f32.mrf.mxu0
  %v531 = vadd.f32 %v513, %v530
  %v532 = vpop.f32.mrf.mxu0
  %533 = vdwg.mxu0
  %vm534 = vcmp.ge.f32.partialorder %v526, 0.0
  %vm535 = vcmp.ge.f32.partialorder %v528, 0.0
  %vm536 = vcmp.ge.f32.partialorder %v531, 0.0
  %v537 = vmul.f32 %v526, 0.01
  %v538 = vmul.f32 %v528, 0.01
  %v539 = vmul.f32 %v531, 0.01
  %v540 = vsel %vm534, %v526, %v537
  %v541 = vsel %vm535, %v528, %v538
  %v542 = vsel %vm536, %v531, %v539
  %vm543 = vcmask 31744
  %544 = vst.msk [vmem:[%s3] sm:$0xff] %vm543, %v540
  %545 = vst.msk [vmem:[%s3 + $0x8] sm:$0xff] %vm543, %v541
  %546 = vst.msk [vmem:[%s3 + $0x10] sm:$0xff] %vm543, %v542
  // Predicated region
  $region14: #{hourglass_forward.62} parent=0 // pred_check
    _
  $region15: #{hourglass_forward.62} parent=0 // pred_check_branch
    %548 = sbr.rel (0) target = $region17
  $region16: #{hourglass_forward.62} parent=0 // pred_region
    _
  $region17: #{hourglass_forward.62} parent=0 // pred_fallthru
    _
  // Predicated region
  $region18: #{hourglass_forward.62} parent=0 // pred_check
    _
  $region19: #{hourglass_forward.62} parent=0 // pred_check_branch
    %550 = sbr.rel (0) target = $region21
  $region20: #{hourglass_forward.62} parent=0 // pred_region
    _
  $region21: #{hourglass_forward.62} parent=0 // pred_fallthru
    _

// kernel: hourglass_forward.69
$region0: #{hourglass_forward.69}
  #allocation0 [shape = 'u32[]', space=smem, size = 0x4, offset = 0x4, fixed_abs, tag = 'smem constant byte address 0x4 - core index']
  #allocation1 [shape = 'u32[72,128]{1,0:T(1,128)}', space=vmem, size = 0x9000, scoped, tag = 'internal scratch']
  %s0 = inlined_call_operand.vmem [shape: bf16[192,4], index: 0, kind: input, shape index: {}]
  %s1 = inlined_call_operand.vmem [shape: bf16[16,192], index: 1, kind: input, shape index: {}]
  %s2 = inlined_call_operand.vmem [shape: f32[16,1], index: 2, kind: input, shape index: {}]
  %s3 = inlined_call_operand.vmem [shape: f32[16,4], index: 3, kind: output, shape index: {}]
  %s4 = sld [smem:[#allocation0]]
  $region22: #{hourglass_forward.69} parent=0
    _
  %s6 = ssub.s32 1, %s4
  %s7 = scalar_select 0, %s6, %s4
  // Predicated region
  $region2: #{hourglass_forward.69} parent=0 // pred_check
    _
  $region3: #{hourglass_forward.69} parent=0 // pred_check_branch
    %9 = sbr.rel (0) target = $region5
  $region4: #{hourglass_forward.69} parent=0 // pred_region
    _
  $region5: #{hourglass_forward.69} parent=0 // pred_fallthru
    _
  // Predicated region
  $region6: #{hourglass_forward.69} parent=0 // pred_check
    _
  $region7: #{hourglass_forward.69} parent=0 // pred_check_branch
    %11 = sbr.rel (0) target = $region9
  $region8: #{hourglass_forward.69} parent=0 // pred_region
    _
  $region9: #{hourglass_forward.69} parent=0 // pred_fallthru
    _
  // Predicated region
  $region10: #{hourglass_forward.69} parent=0 // pred_check
    _
  $region11: #{hourglass_forward.69} parent=0 // pred_check_branch
    %13 = sbr.rel (0) target = $region13
  $region12: #{hourglass_forward.69} parent=0 // pred_region
    _
  $region13: #{hourglass_forward.69} parent=0 // pred_fallthru
    _
  %v15 = vld [vmem:[%s1] sm:$0xff]
  %v16 = vld [vmem:[%s1 + $0x8] sm:$0xff]
  %v17 = vld [vmem:[%s0] sm:$0xf]
  %v18 = vld [vmem:[%s0 + $0x4] sm:$0xf]
  %v19 = vld [vmem:[%s0 + $0x8] sm:$0xf]
  %v20 = vld [vmem:[%s0 + $0xc] sm:$0xf]
  %v21 = vld [vmem:[%s0 + $0x10] sm:$0xf]
  %v22 = vld [vmem:[%s0 + $0x14] sm:$0xf]
  %v23 = vld [vmem:[%s0 + $0x18] sm:$0xf]
  %v24 = vld [vmem:[%s0 + $0x1c] sm:$0xf]
  %v25 = vld [vmem:[%s0 + $0x20] sm:$0xf]
  %v26 = vld [vmem:[%s0 + $0x24] sm:$0xf]
  %v27 = vld [vmem:[%s0 + $0x28] sm:$0xf]
  %v28 = vld [vmem:[%s0 + $0x2c] sm:$0xf]
  %v29 = vld [vmem:[%s0 + $0x30] sm:$0xf]
  %v30 = vld [vmem:[%s0 + $0x34] sm:$0xf]
  %v31 = vld [vmem:[%s0 + $0x38] sm:$0xf]
  %v32 = vld [vmem:[%s0 + $0x3c] sm:$0xf]
  %v33 = vld [vmem:[%s0 + $0x40] sm:$0xf]
  %v34 = vld [vmem:[%s0 + $0x44] sm:$0xf]
  %v35 = vld [vmem:[%s0 + $0x48] sm:$0xf]
  %v36 = vld [vmem:[%s0 + $0x4c] sm:$0xf]
  %v37 = vld [vmem:[%s0 + $0x50] sm:$0xf]
  %v38 = vld [vmem:[%s0 + $0x54] sm:$0xf]
  %v39 = vld [vmem:[%s0 + $0x58] sm:$0xf]
  %v40 = vld [vmem:[%s0 + $0x5c] sm:$0xf]
  %v41 = vld [vmem:[%s2] sm:$0xff]
  %v42 = vld [vmem:[%s2 + $0x8] sm:$0xff]
  %44 = vset.pattern.permute.xlu0 0
  %45 = vperm.xlu0 %44, %v41
  %v46 = vpop.permute.xlu0 %45
  %49 = vset.pattern.permute.xlu0 0
  %50 = vperm.xlu0 %49, %v42
  %v51 = vpop.permute.xlu0 %50
  %v55 = vunpack.c.l.b16 %v15
  %v56 = vunpack.c.h.b16 %v15
  %v57 = vunpack.c.l.b16 %v16
  %v58 = vunpack.c.h.b16 %v16
  %v59 = vpack.c.b16 %v57, %v55
  %v60 = vpack.c.b16 %v58, %v56
  %v86 = vunpack.c.l.b16 %v17
  %v87 = vunpack.c.l.b16 %v18
  %v88 = vunpack.c.l.b16 %v19
  %v89 = vunpack.c.l.b16 %v20
  %v90 = vunpack.c.l.b16 %v21
  %v91 = vunpack.c.l.b16 %v22
  %v92 = vunpack.c.l.b16 %v23
  %v93 = vunpack.c.l.b16 %v24
  %v94 = vunpack.c.l.b16 %v25
  %v95 = vunpack.c.l.b16 %v26
  %v96 = vunpack.c.l.b16 %v27
  %v97 = vunpack.c.l.b16 %v28
  %v98 = vunpack.c.l.b16 %v29
  %v99 = vunpack.c.l.b16 %v30
  %v100 = vunpack.c.l.b16 %v31
  %v101 = vunpack.c.l.b16 %v32
  %v102 = vunpack.c.l.b16 %v33
  %v103 = vunpack.c.l.b16 %v34
  %v104 = vunpack.c.l.b16 %v35
  %v105 = vunpack.c.l.b16 %v36
  %v106 = vunpack.c.l.b16 %v37
  %v107 = vunpack.c.l.b16 %v38
  %v108 = vunpack.c.l.b16 %v39
  %v109 = vunpack.c.l.b16 %v40
  %v110 = vpack.c.b16 %v87, %v86
  %v111 = vpack.c.b16 %v89, %v88
  %v112 = vpack.c.b16 %v91, %v90
  %v113 = vpack.c.b16 %v93, %v92
  %v114 = vpack.c.b16 %v95, %v94
  %v115 = vpack.c.b16 %v97, %v96
  %v116 = vpack.c.b16 %v99, %v98
  %v117 = vpack.c.b16 %v101, %v100
  %v118 = vpack.c.b16 %v103, %v102
  %v119 = vpack.c.b16 %v105, %v104
  %v120 = vpack.c.b16 %v107, %v106
  %v121 = vpack.c.b16 %v109, %v108
  %vm134 = vcmask 523264
  %v136 = vsel %vm134, %v60, 0
  %138 = vmatpush.bf16.msra.mxu0 %v117
  %139 = vmatpush.bf16.msra.mxu0 %v116
  %140 = vmatpush.bf16.msra.mxu0 %v115
  %141 = vmatpush.bf16.msra.mxu0 %v114
  %142 = vmatpush.bf16.msra.mxu0 %v113
  %143 = vmatpush.bf16.msra.mxu0 %v112
  %144 = vmatpush.bf16.msra.mxu0 %v111
  %145 = vmatpush.bf16.msra.mxu0 %v110
  %146 = vmatmul.bf16.gmra.mxu0 %v59
  %v147 = vpop.f32.mrf.mxu0
  %v148 = vadd.f32 %v46, %v147
  %v149 = vpop.f32.mrf.mxu0
  %v150 = vadd.f32 %v51, %v149
  %151 = vdwg.mxu0
  %152 = vmatpush.bf16.msra.mxu0 0
  %153 = vmatpush.bf16.msra.mxu0 0
  %154 = vmatpush.bf16.msra.mxu0 0
  %155 = vmatpush.bf16.msra.mxu0 0
  %156 = vmatpush.bf16.msra.mxu0 %v121
  %157 = vmatpush.bf16.msra.mxu0 %v120
  %158 = vmatpush.bf16.msra.mxu0 %v119
  %159 = vmatpush.bf16.msra.mxu0 %v118
  %160 = vmatmul.bf16.gmra.mxu0 %v136
  %v161 = vpop.f32.mrf.mxu0
  %v162 = vadd.f32 %v148, %v161
  %v163 = vpop.f32.mrf.mxu0
  %v164 = vadd.f32 %v150, %v163
  %165 = vdwg.mxu0
  %vm166 = vcmp.ge.f32.partialorder %v162, 0.0
  %vm167 = vcmp.ge.f32.partialorder %v164, 0.0
  %v168 = vmul.f32 %v162, 0.01
  %v169 = vmul.f32 %v164, 0.01
  %v170 = vsel %vm166, %v162, %v168
  %v171 = vsel %vm167, %v164, %v169
  %vm172 = vcmask 31744
  %173 = vst.msk [vmem:[%s3] sm:$0xff] %vm172, %v170
  %174 = vst.msk [vmem:[%s3 + $0x8] sm:$0xff] %vm172, %v171
  // Predicated region
  $region14: #{hourglass_forward.69} parent=0 // pred_check
    _
  $region15: #{hourglass_forward.69} parent=0 // pred_check_branch
    %176 = sbr.rel (0) target = $region17
  $region16: #{hourglass_forward.69} parent=0 // pred_region
    _
  $region17: #{hourglass_forward.69} parent=0 // pred_fallthru
    _
  // Predicated region
  $region18: #{hourglass_forward.69} parent=0 // pred_check
    _
  $region19: #{hourglass_forward.69} parent=0 // pred_check_branch
    %178 = sbr.rel (0) target = $region21
  $region20: #{hourglass_forward.69} parent=0 // pred_region
    _
  $region21: #{hourglass_forward.69} parent=0 // pred_fallthru
    _

// kernel: hourglass_forward.74
$region0: #{hourglass_forward.74}
  #allocation0 [shape = 'u32[]', space=smem, size = 0x4, offset = 0x4, fixed_abs, tag = 'smem constant byte address 0x4 - core index']
  #allocation1 [shape = 'u32[72,128]{1,0:T(1,128)}', space=vmem, size = 0x9000, scoped, tag = 'internal scratch']
  %s0 = inlined_call_operand.vmem [shape: bf16[16,32], index: 0, kind: input, shape index: {}]
  %s1 = inlined_call_operand.vmem [shape: bf16[16,32], index: 1, kind: input, shape index: {}]
  %s2 = inlined_call_operand.vmem [shape: bf16[16,16], index: 2, kind: input, shape index: {}]
  %s3 = inlined_call_operand.vmem [shape: bf16[16,16], index: 3, kind: input, shape index: {}]
  %s4 = inlined_call_operand.vmem [shape: f32[16,1], index: 4, kind: input, shape index: {}]
  %s5 = inlined_call_operand.vmem [shape: f32[16,32], index: 5, kind: output, shape index: {}]
  %s6 = sld [smem:[#allocation0]]
  $region30: #{hourglass_forward.74} parent=0
    _
  %s8 = ssub.s32 1, %s6
  %s9 = scalar_select 0, %s8, %s6
  // Predicated region
  $region2: #{hourglass_forward.74} parent=0 // pred_check
    _
  $region3: #{hourglass_forward.74} parent=0 // pred_check_branch
    %11 = sbr.rel (0) target = $region5
  $region4: #{hourglass_forward.74} parent=0 // pred_region
    _
  $region5: #{hourglass_forward.74} parent=0 // pred_fallthru
    _
  // Predicated region
  $region6: #{hourglass_forward.74} parent=0 // pred_check
    _
  $region7: #{hourglass_forward.74} parent=0 // pred_check_branch
    %13 = sbr.rel (0) target = $region9
  $region8: #{hourglass_forward.74} parent=0 // pred_region
    _
  $region9: #{hourglass_forward.74} parent=0 // pred_fallthru
    _
  // Predicated region
  $region10: #{hourglass_forward.74} parent=0 // pred_check
    _
  $region11: #{hourglass_forward.74} parent=0 // pred_check_branch
    %15 = sbr.rel (0) target = $region13
  $region12: #{hourglass_forward.74} parent=0 // pred_region
    _
  $region13: #{hourglass_forward.74} parent=0 // pred_fallthru
    _
  // Predicated region
  $region14: #{hourglass_forward.74} parent=0 // pred_check
    _
  $region15: #{hourglass_forward.74} parent=0 // pred_check_branch
    %17 = sbr.rel (0) target = $region17
  $region16: #{hourglass_forward.74} parent=0 // pred_region
    _
  $region17: #{hourglass_forward.74} parent=0 // pred_fallthru
    _
  // Predicated region
  $region18: #{hourglass_forward.74} parent=0 // pred_check
    _
  $region19: #{hourglass_forward.74} parent=0 // pred_check_branch
    %19 = sbr.rel (0) target = $region21
  $region20: #{hourglass_forward.74} parent=0 // pred_region
    _
  $region21: #{hourglass_forward.74} parent=0 // pred_fallthru
    _
  %v21 = vld [vmem:[%s2] sm:$0xf]
  %v22 = vld [vmem:[%s2 + $0x4] sm:$0xf]
  %v23 = vld [vmem:[%s0] sm:$0xf]
  %v24 = vld [vmem:[%s0 + $0x4] sm:$0xf]
  %v25 = vld [vmem:[%s3] sm:$0xf]
  %v26 = vld [vmem:[%s3 + $0x4] sm:$0xf]
  %v27 = vld [vmem:[%s1] sm:$0xf]
  %v28 = vld [vmem:[%s1 + $0x4] sm:$0xf]
  %v31 = vunpack.c.l.b16 %v25
  %v32 = vunpack.c.l.b16 %v26
  %v33 = vpack.c.b16 %v32, %v31
  %v36 = vunpack.c.l.b16 %v27
  %v37 = vunpack.c.l.b16 %v28
  %v38 = vpack.c.b16 %v37, %v36
  %vm40 = vcmask 130048
  %v42 = vsel %vm40, %v33, 0
  %44 = vmatpush.bf16.msra.mxu0 0
  %45 = vmatpush.bf16.msra.mxu0 0
  %46 = vmatpush.bf16.msra.mxu0 0
  %47 = vmatpush.bf16.msra.mxu0 0
  %48 = vmatpush.bf16.msra.mxu0 0
  %49 = vmatpush.bf16.msra.mxu0 0
  %50 = vmatpush.bf16.msra.mxu0 0
  %51 = vmatpush.bf16.msra.mxu0 %v38
  %52 = vmatmul.bf16.gmra.mxu0 %v42
  %v53 = vpop.f32.mrf.mxu0
  %v54 = vadd.f32 0.0, %v53
  %v55 = vpop.f32.mrf.mxu0
  %v56 = vadd.f32 0.0, %v55
  %57 = vdwg.mxu0
  %v60 = vunpack.c.l.b16 %v21
  %v61 = vunpack.c.l.b16 %v22
  %v62 = vpack.c.b16 %v61, %v60
  %v65 = vunpack.c.l.b16 %v23
  %v66 = vunpack.c.l.b16 %v24
  %v67 = vpack.c.b16 %v66, %v65
  %v70 = vsel %vm40, %v62, 0
  %72 = vmatpush.bf16.msra.mxu0 0
  %73 = vmatpush.bf16.msra.mxu0 0
  %74 = vmatpush.bf16.msra.mxu0 0
  %75 = vmatpush.bf16.msra.mxu0 0
  %76 = vmatpush.bf16.msra.mxu0 0
  %77 = vmatpush.bf16.msra.mxu0 0
  %78 = vmatpush.bf16.msra.mxu0 0
  %79 = vmatpush.bf16.msra.mxu0 %v67
  %80 = vmatmul.bf16.gmra.mxu0 %v70
  %v81 = vpop.f32.mrf.mxu0
  %v82 = vadd.f32 %v54, %v81
  %v83 = vpop.f32.mrf.mxu0
  %v84 = vadd.f32 %v56, %v83
  %85 = vdwg.mxu0
  %v86 = vld [vmem:[%s4] sm:$0xff]
  %v87 = vld [vmem:[%s4 + $0x8] sm:$0xff]
  %89 = vset.pattern.permute.xlu0 0
  %90 = vperm.xlu0 %89, %v86
  %v91 = vpop.permute.xlu0 %90
  %94 = vset.pattern.permute.xlu0 0
  %95 = vperm.xlu0 %94, %v87
  %v96 = vpop.permute.xlu0 %95
  %v98 = vadd.f32 %v82, %v91
  %v99 = vadd.f32 %v84, %v96
  %vm100 = vcmp.ge.f32.partialorder %v98, 0.0
  %vm101 = vcmp.ge.f32.partialorder %v99, 0.0
  %v102 = vmul.f32 %v98, 0.01
  %v103 = vmul.f32 %v99, 0.01
  %v104 = vsel %vm100, %v98, %v102
  %v105 = vsel %vm101, %v99, %v103
  %vm106 = vcmask 261120
  %107 = vst.msk [vmem:[%s5] sm:$0xff] %vm106, %v104
  %108 = vst.msk [vmem:[%s5 + $0x8] sm:$0xff] %vm106, %v105
  // Predicated region
  $region22: #{hourglass_forward.74} parent=0 // pred_check
    _
  $region23: #{hourglass_forward.74} parent=0 // pred_check_branch
    %110 = sbr.rel (0) target = $region25
  $region24: #{hourglass_forward.74} parent=0 // pred_region
    _
  $region25: #{hourglass_forward.74} parent=0 // pred_fallthru
    _
  // Predicated region
  $region26: #{hourglass_forward.74} parent=0 // pred_check
    _
  $region27: #{hourglass_forward.74} parent=0 // pred_check_branch
    %112 = sbr.rel (0) target = $region29
  $region28: #{hourglass_forward.74} parent=0 // pred_region
    _
  $region29: #{hourglass_forward.74} parent=0 // pred_fallthru
    _

// kernel: hourglass_forward.87
$region0: #{hourglass_forward.87}
  #allocation0 [shape = 'u32[]', space=smem, size = 0x4, offset = 0x4, fixed_abs, tag = 'smem constant byte address 0x4 - core index']
  #allocation1 [shape = 'u32[72,128]{1,0:T(1,128)}', space=vmem, size = 0x9000, scoped, tag = 'internal scratch']
  %s0 = inlined_call_operand.vmem [shape: bf16[128,32], index: 0, kind: input, shape index: {}]
  %s1 = inlined_call_operand.vmem [shape: bf16[8,128], index: 1, kind: input, shape index: {}]
  %s2 = inlined_call_operand.vmem [shape: f32[8,1], index: 2, kind: input, shape index: {}]
  %s3 = inlined_call_operand.vmem [shape: f32[8,32], index: 3, kind: output, shape index: {}]
  %s4 = sld [smem:[#allocation0]]
  $region22: #{hourglass_forward.87} parent=0
    _
  %s6 = ssub.s32 1, %s4
  %s7 = scalar_select 0, %s6, %s4
  // Predicated region
  $region2: #{hourglass_forward.87} parent=0 // pred_check
    _
  $region3: #{hourglass_forward.87} parent=0 // pred_check_branch
    %9 = sbr.rel (0) target = $region5
  $region4: #{hourglass_forward.87} parent=0 // pred_region
    _
  $region5: #{hourglass_forward.87} parent=0 // pred_fallthru
    _
  // Predicated region
  $region6: #{hourglass_forward.87} parent=0 // pred_check
    _
  $region7: #{hourglass_forward.87} parent=0 // pred_check_branch
    %11 = sbr.rel (0) target = $region9
  $region8: #{hourglass_forward.87} parent=0 // pred_region
    _
  $region9: #{hourglass_forward.87} parent=0 // pred_fallthru
    _
  // Predicated region
  $region10: #{hourglass_forward.87} parent=0 // pred_check
    _
  $region11: #{hourglass_forward.87} parent=0 // pred_check_branch
    %13 = sbr.rel (0) target = $region13
  $region12: #{hourglass_forward.87} parent=0 // pred_region
    _
  $region13: #{hourglass_forward.87} parent=0 // pred_fallthru
    _
  %v14 = vld [vmem:[%s1] sm:$0xf]
  %v15 = vld [vmem:[%s0] sm:$0xf]
  %v16 = vld [vmem:[%s0 + $0x4] sm:$0xf]
  %v17 = vld [vmem:[%s0 + $0x8] sm:$0xf]
  %v18 = vld [vmem:[%s0 + $0xc] sm:$0xf]
  %v19 = vld [vmem:[%s0 + $0x10] sm:$0xf]
  %v20 = vld [vmem:[%s0 + $0x14] sm:$0xf]
  %v21 = vld [vmem:[%s0 + $0x18] sm:$0xf]
  %v22 = vld [vmem:[%s0 + $0x1c] sm:$0xf]
  %v23 = vld [vmem:[%s0 + $0x20] sm:$0xf]
  %v24 = vld [vmem:[%s0 + $0x24] sm:$0xf]
  %v25 = vld [vmem:[%s0 + $0x28] sm:$0xf]
  %v26 = vld [vmem:[%s0 + $0x2c] sm:$0xf]
  %v27 = vld [vmem:[%s0 + $0x30] sm:$0xf]
  %v28 = vld [vmem:[%s0 + $0x34] sm:$0xf]
  %v29 = vld [vmem:[%s0 + $0x38] sm:$0xf]
  %v30 = vld [vmem:[%s0 + $0x3c] sm:$0xf]
  %v31 = vld [vmem:[%s2] sm:$0xff]
  %33 = vset.pattern.permute.xlu0 0
  %34 = vperm.xlu0 %33, %v31
  %v35 = vpop.permute.xlu0 %34
  %v53 = vunpack.c.l.b16 %v15
  %v54 = vunpack.c.l.b16 %v16
  %v55 = vunpack.c.l.b16 %v17
  %v56 = vunpack.c.l.b16 %v18
  %v57 = vunpack.c.l.b16 %v19
  %v58 = vunpack.c.l.b16 %v20
  %v59 = vunpack.c.l.b16 %v21
  %v60 = vunpack.c.l.b16 %v22
  %v61 = vunpack.c.l.b16 %v23
  %v62 = vunpack.c.l.b16 %v24
  %v63 = vunpack.c.l.b16 %v25
  %v64 = vunpack.c.l.b16 %v26
  %v65 = vunpack.c.l.b16 %v27
  %v66 = vunpack.c.l.b16 %v28
  %v67 = vunpack.c.l.b16 %v29
  %v68 = vunpack.c.l.b16 %v30
  %v69 = vpack.c.b16 %v54, %v53
  %v70 = vpack.c.b16 %v56, %v55
  %v71 = vpack.c.b16 %v58, %v57
  %v72 = vpack.c.b16 %v60, %v59
  %v73 = vpack.c.b16 %v62, %v61
  %v74 = vpack.c.b16 %v64, %v63
  %v75 = vpack.c.b16 %v66, %v65
  %v76 = vpack.c.b16 %v68, %v67
  %85 = vmatpush.bf16.msra.mxu0 %v76
  %86 = vmatpush.bf16.msra.mxu0 %v75
  %87 = vmatpush.bf16.msra.mxu0 %v74
  %88 = vmatpush.bf16.msra.mxu0 %v73
  %89 = vmatpush.bf16.msra.mxu0 %v72
  %90 = vmatpush.bf16.msra.mxu0 %v71
  %91 = vmatpush.bf16.msra.mxu0 %v70
  %92 = vmatpush.bf16.msra.mxu0 %v69
  %93 = vmatmul.bf16.gmra.mxu0 %v14
  %v94 = vpop.f32.mrf.mxu0
  %v95 = vadd.f32 %v35, %v94
  %v96 = vpop.f32.mrf.mxu0
  %97 = vdwg.mxu0
  %vm98 = vcmp.ge.f32.partialorder %v95, 0.0
  %v99 = vmul.f32 %v95, 0.01
  %v100 = vsel %vm98, %v95, %v99
  %vm101 = vcmask 261120
  %102 = vst.msk [vmem:[%s3] sm:$0xff] %vm101, %v100
  // Predicated region
  $region14: #{hourglass_forward.87} parent=0 // pred_check
    _
  $region15: #{hourglass_forward.87} parent=0 // pred_check_branch
    %104 = sbr.rel (0) target = $region17
  $region16: #{hourglass_forward.87} parent=0 // pred_region
    _
  $region17: #{hourglass_forward.87} parent=0 // pred_fallthru
    _
  // Predicated region
  $region18: #{hourglass_forward.87} parent=0 // pred_check
    _
  $region19: #{hourglass_forward.87} parent=0 // pred_check_branch
    %106 = sbr.rel (0) target = $region21
  $region20: #{hourglass_forward.87} parent=0 // pred_region
    _
  $region21: #{hourglass_forward.87} parent=0 // pred_fallthru
    _

// kernel: hourglass_forward.88
$region0: #{hourglass_forward.88}
  #allocation0 [shape = 'u32[]', space=smem, size = 0x4, offset = 0x4, fixed_abs, tag = 'smem constant byte address 0x4 - core index']
  #allocation1 [shape = 'u32[72,128]{1,0:T(1,128)}', space=vmem, size = 0x9000, scoped, tag = 'internal scratch']
  %s0 = inlined_call_operand.vmem [shape: bf16[8,256], index: 0, kind: input, shape index: {}]
  %s1 = inlined_call_operand.vmem [shape: bf16[8,256], index: 1, kind: input, shape index: {}]
  %s2 = inlined_call_operand.vmem [shape: bf16[8,8], index: 2, kind: input, shape index: {}]
  %s3 = inlined_call_operand.vmem [shape: bf16[8,8], index: 3, kind: input, shape index: {}]
  %s4 = inlined_call_operand.vmem [shape: f32[8,1], index: 4, kind: input, shape index: {}]
  %s5 = inlined_call_operand.vmem [shape: f32[8,256], index: 5, kind: output, shape index: {}]
  %s6 = sld [smem:[#allocation0]]
  $region30: #{hourglass_forward.88} parent=0
    _
  %s8 = ssub.s32 1, %s6
  %s9 = scalar_select 0, %s8, %s6
  // Predicated region
  $region2: #{hourglass_forward.88} parent=0 // pred_check
    _
  $region3: #{hourglass_forward.88} parent=0 // pred_check_branch
    %11 = sbr.rel (0) target = $region5
  $region4: #{hourglass_forward.88} parent=0 // pred_region
    _
  $region5: #{hourglass_forward.88} parent=0 // pred_fallthru
    _
  // Predicated region
  $region6: #{hourglass_forward.88} parent=0 // pred_check
    _
  $region7: #{hourglass_forward.88} parent=0 // pred_check_branch
    %13 = sbr.rel (0) target = $region9
  $region8: #{hourglass_forward.88} parent=0 // pred_region
    _
  $region9: #{hourglass_forward.88} parent=0 // pred_fallthru
    _
  // Predicated region
  $region10: #{hourglass_forward.88} parent=0 // pred_check
    _
  $region11: #{hourglass_forward.88} parent=0 // pred_check_branch
    %15 = sbr.rel (0) target = $region13
  $region12: #{hourglass_forward.88} parent=0 // pred_region
    _
  $region13: #{hourglass_forward.88} parent=0 // pred_fallthru
    _
  // Predicated region
  $region14: #{hourglass_forward.88} parent=0 // pred_check
    _
  $region15: #{hourglass_forward.88} parent=0 // pred_check_branch
    %17 = sbr.rel (0) target = $region17
  $region16: #{hourglass_forward.88} parent=0 // pred_region
    _
  $region17: #{hourglass_forward.88} parent=0 // pred_fallthru
    _
  // Predicated region
  $region18: #{hourglass_forward.88} parent=0 // pred_check
    _
  $region19: #{hourglass_forward.88} parent=0 // pred_check_branch
    %19 = sbr.rel (0) target = $region21
  $region20: #{hourglass_forward.88} parent=0 // pred_region
    _
  $region21: #{hourglass_forward.88} parent=0 // pred_fallthru
    _
  %v21 = vld [vmem:[%s2] sm:$0xf]
  %v22 = vld [vmem:[%s0] sm:$0xff]
  %v23 = vld [vmem:[%s3] sm:$0xf]
  %v24 = vld [vmem:[%s1] sm:$0xff]
  %v26 = vunpack.c.l.b16 %v24
  %v27 = vunpack.c.h.b16 %v24
  %v28 = vpack.c.b16 %v26, %v26
  %v29 = vpack.c.b16 %v27, %v27
  %vm30 = vcmask 64512
  %v32 = vsel %vm30, %v23, 0
  %vm34 = vcmask 1043456
  %v36 = vsel %vm34, %v28, 0
  %v39 = vsel %vm34, %v29, 0
  %41 = vmatpush.bf16.msra.mxu0 0
  %42 = vmatpush.bf16.msra.mxu0 0
  %43 = vmatpush.bf16.msra.mxu0 0
  %44 = vmatpush.bf16.msra.mxu0 0
  %45 = vmatpush.bf16.msra.mxu0 0
  %46 = vmatpush.bf16.msra.mxu0 0
  %47 = vmatpush.bf16.msra.mxu0 0
  %48 = vmatpush.bf16.msra.mxu0 %v36
  %49 = vmatmul.bf16.gmra.mxu0 %v32
  %v50 = vpop.f32.mrf.mxu0
  %v51 = vadd.f32 0.0, %v50
  %v52 = vpop.f32.mrf.mxu0
  %53 = vdwg.mxu0
  %54 = vmatpush.bf16.msra.mxu0 0
  %55 = vmatpush.bf16.msra.mxu0 0
  %56 = vmatpush.bf16.msra.mxu0 0
  %57 = vmatpush.bf16.msra.mxu0 0
  %58 = vmatpush.bf16.msra.mxu0 0
  %59 = vmatpush.bf16.msra.mxu0 0
  %60 = vmatpush.bf16.msra.mxu0 0
  %61 = vmatpush.bf16.msra.mxu0 %v39
  %62 = vmatmul.bf16.gmra.mxu0 %v32
  %v63 = vpop.f32.mrf.mxu0
  %v64 = vadd.f32 0.0, %v63
  %v65 = vpop.f32.mrf.mxu0
  %66 = vdwg.mxu0
  %v68 = vunpack.c.l.b16 %v22
  %v69 = vunpack.c.h.b16 %v22
  %v70 = vpack.c.b16 %v68, %v68
  %v71 = vpack.c.b16 %v69, %v69
  %v73 = vsel %vm30, %v21, 0
  %v76 = vsel %vm34, %v70, 0
  %v79 = vsel %vm34, %v71, 0
  %81 = vmatpush.bf16.msra.mxu0 0
  %82 = vmatpush.bf16.msra.mxu0 0
  %83 = vmatpush.bf16.msra.mxu0 0
  %84 = vmatpush.bf16.msra.mxu0 0
  %85 = vmatpush.bf16.msra.mxu0 0
  %86 = vmatpush.bf16.msra.mxu0 0
  %87 = vmatpush.bf16.msra.mxu0 0
  %88 = vmatpush.bf16.msra.mxu0 %v76
  %89 = vmatmul.bf16.gmra.mxu0 %v73
  %v90 = vpop.f32.mrf.mxu0
  %v91 = vadd.f32 %v51, %v90
  %v92 = vpop.f32.mrf.mxu0
  %93 = vdwg.mxu0
  %94 = vmatpush.bf16.msra.mxu0 0
  %95 = vmatpush.bf16.msra.mxu0 0
  %96 = vmatpush.bf16.msra.mxu0 0
  %97 = vmatpush.bf16.msra.mxu0 0
  %98 = vmatpush.bf16.msra.mxu0 0
  %99 = vmatpush.bf16.msra.mxu0 0
  %100 = vmatpush.bf16.msra.mxu0 0
  %101 = vmatpush.bf16.msra.mxu0 %v79
  %102 = vmatmul.bf16.gmra.mxu0 %v73
  %v103 = vpop.f32.mrf.mxu0
  %v104 = vadd.f32 %v64, %v103
  %v105 = vpop.f32.mrf.mxu0
  %106 = vdwg.mxu0
  %v107 = vld [vmem:[%s4] sm:$0xff]
  %109 = vset.pattern.permute.xlu0 0
  %110 = vperm.xlu0 %109, %v107
  %v111 = vpop.permute.xlu0 %110
  %v113 = vadd.f32 %v91, %v111
  %v114 = vadd.f32 %v104, %v111
  %vm115 = vcmp.ge.f32.partialorder %v113, 0.0
  %vm116 = vcmp.ge.f32.partialorder %v114, 0.0
  %v117 = vmul.f32 %v113, 0.01
  %v118 = vmul.f32 %v114, 0.01
  %v119 = vsel %vm115, %v113, %v117
  %v120 = vsel %vm116, %v114, %v118
  %121 = vst [vmem:[%s5] sm:$0xff] %v119
  %122 = vst [vmem:[%s5 + $0x8] sm:$0xff] %v120
  // Predicated region
  $region22: #{hourglass_forward.88} parent=0 // pred_check
    _
  $region23: #{hourglass_forward.88} parent=0 // pred_check_branch
    %124 = sbr.rel (0) target = $region25
  $region24: #{hourglass_forward.88} parent=0 // pred_region
    _
  $region25: #{hourglass_forward.88} parent=0 // pred_fallthru
    _
  // Predicated region
  $region26: #{hourglass_forward.88} parent=0 // pred_check
    _
  $region27: #{hourglass_forward.88} parent=0 // pred_check_branch
    %126 = sbr.rel (0) target = $region29
  $region28: #{hourglass_forward.88} parent=0 // pred_region
    _
  $region29: #{hourglass_forward.88} parent=0 // pred_fallthru
    _

// kernel: hourglass_forward.101
$region0: #{hourglass_forward.101}
  #allocation0 [shape = 'u32[]', space=smem, size = 0x4, offset = 0x4, fixed_abs, tag = 'smem constant byte address 0x4 - core index']
  #allocation1 [shape = 'u32[72,128]{1,0:T(1,128)}', space=vmem, size = 0x9000, scoped, tag = 'internal scratch']
  %s0 = inlined_call_operand.vmem [shape: bf16[64,256], index: 0, kind: input, shape index: {}]
  %s1 = inlined_call_operand.vmem [shape: bf16[8,64], index: 1, kind: input, shape index: {}]
  %s2 = inlined_call_operand.vmem [shape: f32[8,1], index: 2, kind: input, shape index: {}]
  %s3 = inlined_call_operand.vmem [shape: f32[8,256], index: 3, kind: output, shape index: {}]
  %s4 = sld [smem:[#allocation0]]
  $region22: #{hourglass_forward.101} parent=0
    _
  %s6 = ssub.s32 1, %s4
  %s7 = scalar_select 0, %s6, %s4
  // Predicated region
  $region2: #{hourglass_forward.101} parent=0 // pred_check
    _
  $region3: #{hourglass_forward.101} parent=0 // pred_check_branch
    %9 = sbr.rel (0) target = $region5
  $region4: #{hourglass_forward.101} parent=0 // pred_region
    _
  $region5: #{hourglass_forward.101} parent=0 // pred_fallthru
    _
  // Predicated region
  $region6: #{hourglass_forward.101} parent=0 // pred_check
    _
  $region7: #{hourglass_forward.101} parent=0 // pred_check_branch
    %11 = sbr.rel (0) target = $region9
  $region8: #{hourglass_forward.101} parent=0 // pred_region
    _
  $region9: #{hourglass_forward.101} parent=0 // pred_fallthru
    _
  // Predicated region
  $region10: #{hourglass_forward.101} parent=0 // pred_check
    _
  $region11: #{hourglass_forward.101} parent=0 // pred_check_branch
    %13 = sbr.rel (0) target = $region13
  $region12: #{hourglass_forward.101} parent=0 // pred_region
    _
  $region13: #{hourglass_forward.101} parent=0 // pred_fallthru
    _
  %v15 = vld [vmem:[%s1] sm:$0xf]
  %v16 = vld [vmem:[%s0] sm:$0xff]
  %v17 = vld [vmem:[%s0 + $0x8] sm:$0xff]
  %v18 = vld [vmem:[%s0 + $0x10] sm:$0xff]
  %v19 = vld [vmem:[%s0 + $0x18] sm:$0xff]
  %v20 = vld [vmem:[%s0 + $0x20] sm:$0xff]
  %v21 = vld [vmem:[%s0 + $0x28] sm:$0xff]
  %v22 = vld [vmem:[%s0 + $0x30] sm:$0xff]
  %v23 = vld [vmem:[%s0 + $0x38] sm:$0xff]
  %v24 = vld [vmem:[%s2] sm:$0xff]
  %26 = vset.pattern.permute.xlu0 0
  %27 = vperm.xlu0 %26, %v24
  %v28 = vpop.permute.xlu0 %27
  %v38 = vunpack.c.l.b16 %v16
  %v39 = vunpack.c.h.b16 %v16
  %v40 = vunpack.c.l.b16 %v17
  %v41 = vunpack.c.h.b16 %v17
  %v42 = vunpack.c.l.b16 %v18
  %v43 = vunpack.c.h.b16 %v18
  %v44 = vunpack.c.l.b16 %v19
  %v45 = vunpack.c.h.b16 %v19
  %v46 = vunpack.c.l.b16 %v20
  %v47 = vunpack.c.h.b16 %v20
  %v48 = vunpack.c.l.b16 %v21
  %v49 = vunpack.c.h.b16 %v21
  %v50 = vunpack.c.l.b16 %v22
  %v51 = vunpack.c.h.b16 %v22
  %v52 = vunpack.c.l.b16 %v23
  %v53 = vunpack.c.h.b16 %v23
  %v54 = vpack.c.b16 %v40, %v38
  %v55 = vpack.c.b16 %v41, %v39
  %v56 = vpack.c.b16 %v44, %v42
  %v57 = vpack.c.b16 %v45, %v43
  %v58 = vpack.c.b16 %v48, %v46
  %v59 = vpack.c.b16 %v49, %v47
  %v60 = vpack.c.b16 %v52, %v50
  %v61 = vpack.c.b16 %v53, %v51
  %vm70 = vcmask 523264
  %v72 = vsel %vm70, %v15, 0
  %74 = vmatpush.bf16.msra.mxu0 0
  %75 = vmatpush.bf16.msra.mxu0 0
  %76 = vmatpush.bf16.msra.mxu0 0
  %77 = vmatpush.bf16.msra.mxu0 0
  %78 = vmatpush.bf16.msra.mxu0 %v60
  %79 = vmatpush.bf16.msra.mxu0 %v58
  %80 = vmatpush.bf16.msra.mxu0 %v56
  %81 = vmatpush.bf16.msra.mxu0 %v54
  %82 = vmatmul.bf16.gmra.mxu0 %v72
  %v83 = vpop.f32.mrf.mxu0
  %v84 = vadd.f32 %v28, %v83
  %v85 = vpop.f32.mrf.mxu0
  %86 = vdwg.mxu0
  %87 = vmatpush.bf16.msra.mxu0 0
  %88 = vmatpush.bf16.msra.mxu0 0
  %89 = vmatpush.bf16.msra.mxu0 0
  %90 = vmatpush.bf16.msra.mxu0 0
  %91 = vmatpush.bf16.msra.mxu0 %v61
  %92 = vmatpush.bf16.msra.mxu0 %v59
  %93 = vmatpush.bf16.msra.mxu0 %v57
  %94 = vmatpush.bf16.msra.mxu0 %v55
  %95 = vmatmul.bf16.gmra.mxu0 %v72
  %v96 = vpop.f32.mrf.mxu0
  %v97 = vadd.f32 %v28, %v96
  %v98 = vpop.f32.mrf.mxu0
  %99 = vdwg.mxu0
  %100 = vst [vmem:[%s3] sm:$0xff] %v84
  %101 = vst [vmem:[%s3 + $0x8] sm:$0xff] %v97
  // Predicated region
  $region14: #{hourglass_forward.101} parent=0 // pred_check
    _
  $region15: #{hourglass_forward.101} parent=0 // pred_check_branch
    %103 = sbr.rel (0) target = $region17
  $region16: #{hourglass_forward.101} parent=0 // pred_region
    _
  $region17: #{hourglass_forward.101} parent=0 // pred_fallthru
    _
  // Predicated region
  $region18: #{hourglass_forward.101} parent=0 // pred_check
    _
  $region19: #{hourglass_forward.101} parent=0 // pred_check_branch
    %105 = sbr.rel (0) target = $region21
  $region20: #{hourglass_forward.101} parent=0 // pred_region
    _
  $region21: #{hourglass_forward.101} parent=0 // pred_fallthru
    _

</llo_original>
